<compile_context>
chip_gen: v7x
topology: tpu7x:2x2x1
jax: 0.10.0
libtpu: 0.0.40
codegen_flags: <defaults>
</compile_context>

<pallas_src>
import jax
import jax.numpy as jnp
from jax.experimental import pallas as pl
from jax.experimental.pallas import tpu as pltpu  # noqa: F401  (TPU backend)

# ----------------------------- configuration --------------------------------
DRUG_DIM_IN = 32
CELL_DIM_IN = 48
DIM_OUT = 16
N_HEAD = 4
HID = DIM_OUT * N_HEAD          # 64
SEM_HIDDEN = 256
B = 4                           # batched samples
N_DRUGS = 2 * B                 # 8
N_CELLS = B                     # 4
LRELU_ATTN = 0.2                # GATConv attention negative slope
LRELU_ACT = 0.01                # thfn.leaky_relu default slope
NEG_INF = -1e30


# ------------------------------ kernel helpers --------------------------------
def _leaky(x, slope):
    return jnp.where(x > 0, x, slope * x)


def _gat(zs, zd, attn_lr, add_mask, bias, *, shared):
    """Dense masked multi-head GAT aggregation (DGL GATConv semantics).

    zs : (Ns, HID) projected source features
    zd : (Nd, HID) projected dest features (attention only)
    attn_lr : (HID, 2H) = [block-diag attn_l | block-diag attn_r]
    add_mask: (Nd, Ns) additive mask (0 on edges, -1e30 off edges)
    bias    : (1, HID)
    """
    ns = zs.shape[0]
    if shared:
        scores = jnp.dot(zs, attn_lr, preferred_element_type=jnp.float32)
        el = scores[:, :N_HEAD]                       # (Ns, H)
        er = scores[:, N_HEAD:]                       # (Nd, H)
    else:
        zcat = jnp.concatenate([zs, zd], axis=0)      # (Ns+Nd, HID)
        scores = jnp.dot(zcat, attn_lr, preferred_element_type=jnp.float32)
        el = scores[:ns, :N_HEAD]                     # (Ns, H)
        er = scores[ns:, N_HEAD:]                     # (Nd, H)
    el_t = el.T                                       # (H, Ns)

    head_outs = []
    for h in range(N_HEAD):
        # e[v, u] = leaky_relu(el[u, h] + er[v, h], 0.2), masked additively
        e = _leaky(er[:, h:h + 1] + el_t[h:h + 1, :], LRELU_ATTN)   # (Nd, Ns)
        e = e + add_mask
        e = e - jnp.max(e, axis=1, keepdims=True)
        p = jnp.exp(e)                                # off-edges -> exactly 0
        inv = pl.reciprocal(jnp.sum(p, axis=1, keepdims=True), approx=True)
        alpha = p * inv                               # softmax over in-edges
        z_h = zs[:, h * DIM_OUT:(h + 1) * DIM_OUT]    # (Ns, F)
        head_outs.append(jnp.dot(alpha, z_h, preferred_element_type=jnp.float32))

    out = jnp.concatenate(head_outs, axis=1) + bias   # one full-width (Nd, HID)
    return _leaky(out, LRELU_ACT)                     # GATConv activation


def _sem_attn(z0, z1, w1, b1, w2):
    """HANSemanticAttnLayer over P=2 metapath embeddings (per-node softmax,
    exactly as in the provided reference forward)."""
    n = z0.shape[0]
    z = jnp.concatenate([z0, z1], axis=0)                              # (2N, HID)
    h = jnp.tanh(jnp.dot(z, w1, preferred_element_type=jnp.float32) + b1)
    s = jnp.dot(h, w2, preferred_element_type=jnp.float32)             # (2N, 1)
    s0 = s[:n]
    s1 = s[n:]
    m = jnp.maximum(s0, s1)
    e0 = jnp.exp(s0 - m)
    e1 = jnp.exp(s1 - m)
    inv = pl.reciprocal(e0 + e1, approx=True)
    return (e0 * z0 + e1 * z1) * inv


# ------------------------------- fused kernel ---------------------------------
def fused_kernel(feat_d_ref, feat_c_ref,
                 wdcat_ref, wccat_ref,
                 a_d2d_ref, a_d2c_ref, a_c2d_ref,
                 b_d2d_ref, b_d2c_ref, b_c2d_ref, b_c2c_ref,
                 m_d2d_ref, m_d2c_ref, m_c2d_ref,
                 w1d_ref, b1d_ref, w2d_ref,
                 w1c_ref, b1c_ref, w2c_ref,
                 out_d_ref, out_c_ref):
    # One MXU push projects each node type through all of its fc layers.
    zproj_d = jnp.dot(feat_d_ref[...], wdcat_ref[...],
                      preferred_element_type=jnp.float32)   # (N_DRUGS, 3*HID)
    zproj_c = jnp.dot(feat_c_ref[...], wccat_ref[...],
                      preferred_element_type=jnp.float32)   # (N_CELLS, 3*HID)

    z_dd   = zproj_d[:, 0:HID]           # d2d shared fc (src == dst)
    zs_d2c = zproj_d[:, HID:2 * HID]     # d2c fc_src (drugs)
    zd_c2d = zproj_d[:, 2 * HID:]        # c2d fc_dst (drugs)
    zd_d2c = zproj_c[:, 0:HID]           # d2c fc_dst (cells)
    zs_c2d = zproj_c[:, HID:2 * HID]     # c2d fc_src (cells)
    z_c2c  = zproj_c[:, 2 * HID:]        # fc_c2c (cells)

    out_d2d = _gat(z_dd, z_dd, a_d2d_ref[...], m_d2d_ref[...],
                   b_d2d_ref[...], shared=True)              # (N_DRUGS, HID)
    out_d2c = _gat(zs_d2c, zd_d2c, a_d2c_ref[...], m_d2c_ref[...],
                   b_d2c_ref[...], shared=False)             # (N_CELLS, HID)
    out_c2d = _gat(zs_c2d, zd_c2d, a_c2d_ref[...], m_c2d_ref[...],
                   b_c2d_ref[...], shared=False)             # (N_DRUGS, HID)
    out_c2c = _leaky(z_c2c + b_c2c_ref[...], LRELU_ACT)      # (N_CELLS, HID)

    # Semantic attention: 'd' over [d2d, c2d], 'c' over [d2c, c2c].
    out_d_ref[...] = _sem_attn(out_d2d, out_c2d,
                               w1d_ref[...], b1d_ref[...], w2d_ref[...])
    out_c_ref[...] = _sem_attn(out_d2c, out_c2c,
                               w1c_ref[...], b1c_ref[...], w2c_ref[...])


# ------------------------------ forward wrapper --------------------------------
def cgms_han_forward(params, feat_d, feat_c, masks):
    pdd, pdc, pcd = params["d2d"], params["d2c"], params["c2d"]
    pcc = params["fc_c2c"]
    sd, sc = params["sem_d"], params["sem_c"]

    # Fold all fc projections of each node type into one matmul operand.
    wdcat = jnp.concatenate([pdd["w_src"], pdc["w_src"], pcd["w_dst"]], axis=1)  # (32, 3*HID)
    wccat = jnp.concatenate([pdc["w_dst"], pcd["w_src"], pcc["w"]], axis=1)      # (48, 3*HID)

    # Single (HID, 2H) attention matrix per metapath (merged attn_l / attn_r).
    a_d2d = jnp.concatenate([pdd["attn_l"], pdd["attn_r"]], axis=1)
    a_d2c = jnp.concatenate([pdc["attn_l"], pdc["attn_r"]], axis=1)
    a_c2d = jnp.concatenate([pcd["attn_l"], pcd["attn_r"]], axis=1)

    # Additive (-inf) masks precomputed outside the kernel.
    m_d2d = (1.0 - masks["d2d"]) * NEG_INF
    m_d2c = (1.0 - masks["d2c"]) * NEG_INF
    m_c2d = (1.0 - masks["c2d"]) * NEG_INF

    inputs = (
        feat_d, feat_c, wdcat, wccat,
        a_d2d, a_d2c, a_c2d,
        pdd["bias"].reshape(1, HID), pdc["bias"].reshape(1, HID),
        pcd["bias"].reshape(1, HID), pcc["b"].reshape(1, HID),
        m_d2d, m_d2c, m_c2d,
        sd["w1"], sd["b1"].reshape(1, SEM_HIDDEN), sd["w2"],
        sc["w1"], sc["b1"].reshape(1, SEM_HIDDEN), sc["w2"],
    )
    out_d, out_c = pl.pallas_call(
        fused_kernel,
        out_shape=(jax.ShapeDtypeStruct((N_DRUGS, HID), jnp.float32),
                   jax.ShapeDtypeStruct((N_CELLS, HID), jnp.float32)),
    )(*inputs)
    return {"d": out_d, "c": out_c}


# ----------------------------- parameter setup --------------------------------
def make_attn_mat(a):
    """(H, F) attention vector -> (H*F, H) block-diagonal matrix so that
    z(N, H*F) @ mat = per-head attention scores (N, H)."""
    h, f = a.shape
    m = jnp.zeros((h * f, h), jnp.float32)
    for i in range(h):
        m = m.at[i * f:(i + 1) * f, i].set(a[i])
    return m


def init_params(key):
    ks = jax.random.split(key, 16)

    def w(k, shape, scale=0.1):
        return (scale * jax.random.normal(k, shape)).astype(jnp.float32)

    return {
        # GATConv fc layers have no bias in DGL; separate output bias (zeros),
        # output activation = leaky_relu(0.01) as passed by the module.
        "d2d": {"w_src": w(ks[0], (DRUG_DIM_IN, HID)),
                "attn_l": make_attn_mat(w(ks[1], (N_HEAD, DIM_OUT))),
                "attn_r": make_attn_mat(w(ks[2], (N_HEAD, DIM_OUT))),
                "bias": jnp.zeros((HID,), jnp.float32)},
        "d2c": {"w_src": w(ks[3], (DRUG_DIM_IN, HID)),
                "w_dst": w(ks[4], (CELL_DIM_IN, HID)),
                "attn_l": make_attn_mat(w(ks[5], (N_HEAD, DIM_OUT))),
                "attn_r": make_attn_mat(w(ks[6], (N_HEAD, DIM_OUT))),
                "bias": jnp.zeros((HID,), jnp.float32)},
        "c2d": {"w_src": w(ks[7], (CELL_DIM_IN, HID)),
                "w_dst": w(ks[8], (DRUG_DIM_IN, HID)),
                "attn_l": make_attn_mat(w(ks[9], (N_HEAD, DIM_OUT))),
                "attn_r": make_attn_mat(w(ks[10], (N_HEAD, DIM_OUT))),
                "bias": jnp.zeros((HID,), jnp.float32)},
        "fc_c2c": {"w": w(ks[11], (CELL_DIM_IN, HID)),
                   "b": jnp.zeros((HID,), jnp.float32)},
        "sem_d": {"w1": w(ks[12], (HID, SEM_HIDDEN)),
                  "b1": jnp.zeros((SEM_HIDDEN,), jnp.float32),
                  "w2": w(ks[13], (SEM_HIDDEN, 1))},
        "sem_c": {"w1": w(ks[14], (HID, SEM_HIDDEN)),
                  "b1": jnp.zeros((SEM_HIDDEN,), jnp.float32),
                  "w2": w(ks[15], (SEM_HIDDEN, 1))},
    }


def make_masks():
    """Metapath adjacencies (dst x src), mirroring get_graph_by_metapath batched
    over B samples: d2d complete-with-self-loops within each sample's 2 drugs,
    d2c drugs->cell per sample, c2d cell->drugs per sample."""
    drug_sample = jnp.arange(N_DRUGS) // 2
    cell_sample = jnp.arange(N_CELLS)
    mask_d2d = (drug_sample[:, None] == drug_sample[None, :]).astype(jnp.float32)
    mask_d2c = (cell_sample[:, None] == drug_sample[None, :]).astype(jnp.float32)
    mask_c2d = (drug_sample[:, None] == cell_sample[None, :]).astype(jnp.float32)
    return {"d2d": mask_d2d, "d2c": mask_d2c, "c2d": mask_c2d}


# ----------------------------------- main -------------------------------------
if __name__ == "__main__":
    key = jax.random.PRNGKey(0)
    k_param, k_d, k_c = jax.random.split(key, 3)

    params = init_params(k_param)
    feat_d = jax.random.normal(k_d, (N_DRUGS, DRUG_DIM_IN), jnp.float32)
    feat_c = jax.random.normal(k_c, (N_CELLS, CELL_DIM_IN), jnp.float32)
    masks = make_masks()

    fwd = jax.jit(cgms_han_forward)
    out = fwd(params, feat_d, feat_c, masks)
    jax.block_until_ready(out)

    assert out["d"].shape == (N_DRUGS, HID)
    assert out["c"].shape == (N_CELLS, HID)
    assert bool(jnp.all(jnp.isfinite(out["d"])))
    assert bool(jnp.all(jnp.isfinite(out["c"])))
    print("KERNEL_OK")
</pallas_src>

<mosaic_0001>
module attributes {stable_mosaic.version = 11 : i64} {
  func.func @fused_kernel(%arg0: memref<8x32xf32, #tpu.memory_space<vmem>>, %arg1: memref<4x48xf32, #tpu.memory_space<vmem>>, %arg2: memref<32x192xf32, #tpu.memory_space<vmem>>, %arg3: memref<48x192xf32, #tpu.memory_space<vmem>>, %arg4: memref<64x8xf32, #tpu.memory_space<vmem>>, %arg5: memref<64x8xf32, #tpu.memory_space<vmem>>, %arg6: memref<64x8xf32, #tpu.memory_space<vmem>>, %arg7: memref<1x64xf32, #tpu.memory_space<vmem>>, %arg8: memref<1x64xf32, #tpu.memory_space<vmem>>, %arg9: memref<1x64xf32, #tpu.memory_space<vmem>>, %arg10: memref<1x64xf32, #tpu.memory_space<vmem>>, %arg11: memref<8x8xf32, #tpu.memory_space<vmem>>, %arg12: memref<4x8xf32, #tpu.memory_space<vmem>>, %arg13: memref<8x4xf32, #tpu.memory_space<vmem>>, %arg14: memref<64x256xf32, #tpu.memory_space<vmem>>, %arg15: memref<1x256xf32, #tpu.memory_space<vmem>>, %arg16: memref<256x1xf32, #tpu.memory_space<vmem>>, %arg17: memref<64x256xf32, #tpu.memory_space<vmem>>, %arg18: memref<1x256xf32, #tpu.memory_space<vmem>>, %arg19: memref<256x1xf32, #tpu.memory_space<vmem>>, %arg20: memref<8x64xf32, #tpu.memory_space<vmem>>, %arg21: memref<4x64xf32, #tpu.memory_space<vmem>>) attributes {dimension_semantics = [], scalar_prefetch = 0 : i64, scratch_operands = 0 : i64, tpu.core_type = #tpu.core_type<tc>} {
    %c0 = arith.constant 0 : index
    %c0_0 = arith.constant 0 : index
    %0 = vector.load %arg0[%c0, %c0_0] : memref<8x32xf32, #tpu.memory_space<vmem>>, vector<8x32xf32>
    %c0_1 = arith.constant 0 : index
    %c0_2 = arith.constant 0 : index
    %1 = vector.load %arg2[%c0_1, %c0_2] : memref<32x192xf32, #tpu.memory_space<vmem>>, vector<32x192xf32>
    %cst = arith.constant dense<0.000000e+00> : vector<8x192xf32>
    %2 = tpu.matmul %0, %1, %cst {dimension_numbers = #tpu.dot_dimension_numbers<[1], [0], [0], [1], [0, 0, 1, 1], [], []>} : vector<8x32xf32>, vector<32x192xf32>, vector<8x192xf32> -> vector<8x192xf32>
    %c0_3 = arith.constant 0 : index
    %c0_4 = arith.constant 0 : index
    %3 = vector.load %arg1[%c0_3, %c0_4] : memref<4x48xf32, #tpu.memory_space<vmem>>, vector<4x48xf32>
    %c0_5 = arith.constant 0 : index
    %c0_6 = arith.constant 0 : index
    %4 = vector.load %arg3[%c0_5, %c0_6] : memref<48x192xf32, #tpu.memory_space<vmem>>, vector<48x192xf32>
    %cst_7 = arith.constant dense<0.000000e+00> : vector<4x192xf32>
    %5 = tpu.matmul %3, %4, %cst_7 {dimension_numbers = #tpu.dot_dimension_numbers<[1], [0], [0], [1], [0, 0, 1, 1], [], []>} : vector<4x48xf32>, vector<48x192xf32>, vector<4x192xf32> -> vector<4x192xf32>
    %6 = vector.extract_strided_slice %2 {offsets = [0, 0], sizes = [8, 64], strides = [1, 1]} : vector<8x192xf32> to vector<8x64xf32>
    %7 = vector.extract_strided_slice %2 {offsets = [0, 64], sizes = [8, 64], strides = [1, 1]} : vector<8x192xf32> to vector<8x64xf32>
    %8 = vector.extract_strided_slice %2 {offsets = [0, 128], sizes = [8, 64], strides = [1, 1]} : vector<8x192xf32> to vector<8x64xf32>
    %9 = vector.extract_strided_slice %5 {offsets = [0, 0], sizes = [4, 64], strides = [1, 1]} : vector<4x192xf32> to vector<4x64xf32>
    %10 = vector.extract_strided_slice %5 {offsets = [0, 64], sizes = [4, 64], strides = [1, 1]} : vector<4x192xf32> to vector<4x64xf32>
    %11 = vector.extract_strided_slice %5 {offsets = [0, 128], sizes = [4, 64], strides = [1, 1]} : vector<4x192xf32> to vector<4x64xf32>
    %c0_8 = arith.constant 0 : index
    %c0_9 = arith.constant 0 : index
    %12 = vector.load %arg4[%c0_8, %c0_9] : memref<64x8xf32, #tpu.memory_space<vmem>>, vector<64x8xf32>
    %c0_10 = arith.constant 0 : index
    %c0_11 = arith.constant 0 : index
    %13 = vector.load %arg11[%c0_10, %c0_11] : memref<8x8xf32, #tpu.memory_space<vmem>>, vector<8x8xf32>
    %c0_12 = arith.constant 0 : index
    %c0_13 = arith.constant 0 : index
    %14 = vector.load %arg7[%c0_12, %c0_13] : memref<1x64xf32, #tpu.memory_space<vmem>>, vector<1x64xf32>
    %cst_14 = arith.constant dense<0.000000e+00> : vector<8x8xf32>
    %15 = tpu.matmul %6, %12, %cst_14 {dimension_numbers = #tpu.dot_dimension_numbers<[1], [0], [0], [1], [0, 0, 1, 1], [], []>} : vector<8x64xf32>, vector<64x8xf32>, vector<8x8xf32> -> vector<8x8xf32>
    %16 = vector.extract_strided_slice %15 {offsets = [0, 0], sizes = [8, 4], strides = [1, 1]} : vector<8x8xf32> to vector<8x4xf32>
    %17 = vector.extract_strided_slice %15 {offsets = [0, 4], sizes = [8, 4], strides = [1, 1]} : vector<8x8xf32> to vector<8x4xf32>
    %18 = tpu.transpose %16, [1, 0] : vector<8x4xf32> -> vector<4x8xf32>
    %19 = vector.extract_strided_slice %17 {offsets = [0, 0], sizes = [8, 1], strides = [1, 1]} : vector<8x4xf32> to vector<8x1xf32>
    %20 = vector.extract_strided_slice %18 {offsets = [0, 0], sizes = [1, 8], strides = [1, 1]} : vector<4x8xf32> to vector<1x8xf32>
    %21 = vector.broadcast %19 : vector<8x1xf32> to vector<8x8xf32>
    %22 = vector.broadcast %20 : vector<1x8xf32> to vector<8x8xf32>
    %23 = arith.addf %21, %22 : vector<8x8xf32>
    %cst_15 = arith.constant 0.000000e+00 : f32
    %24 = vector.broadcast %cst_15 : f32 to vector<8x8xf32>
    %25 = arith.cmpf ogt, %23, %24 : vector<8x8xf32>
    %cst_16 = arith.constant 2.000000e-01 : f32
    %26 = vector.broadcast %cst_16 : f32 to vector<8x8xf32>
    %27 = arith.mulf %26, %23 : vector<8x8xf32>
    %28 = arith.select %25, %23, %27 : vector<8x8xi1>, vector<8x8xf32>
    %29 = arith.addf %28, %13 : vector<8x8xf32>
    %cst_17 = arith.constant dense<0xFF800000> : vector<8xf32>
    %30 = vector.multi_reduction <maximumf>, %29, %cst_17 [1] : vector<8x8xf32> to vector<8xf32>
    %31 = vector.shape_cast %30 : vector<8xf32> to vector<8x1xf32>
    %32 = vector.broadcast %31 : vector<8x1xf32> to vector<8x8xf32>
    %33 = arith.subf %29, %32 : vector<8x8xf32>
    %34 = math.exp %33 : vector<8x8xf32>
    %cst_18 = arith.constant dense<0.000000e+00> : vector<8xf32>
    %35 = vector.multi_reduction <add>, %34, %cst_18 [1] : vector<8x8xf32> to vector<8xf32>
    %36 = vector.shape_cast %35 : vector<8xf32> to vector<8x1xf32>
    %37 = tpu.reciprocal %36 {approx = true} : vector<8x1xf32> -> vector<8x1xf32>
    %38 = vector.broadcast %37 : vector<8x1xf32> to vector<8x8xf32>
    %39 = arith.mulf %34, %38 : vector<8x8xf32>
    %40 = vector.extract_strided_slice %6 {offsets = [0, 0], sizes = [8, 16], strides = [1, 1]} : vector<8x64xf32> to vector<8x16xf32>
    %cst_19 = arith.constant dense<0.000000e+00> : vector<8x16xf32>
    %41 = tpu.matmul %39, %40, %cst_19 {dimension_numbers = #tpu.dot_dimension_numbers<[1], [0], [0], [1], [0, 0, 1, 1], [], []>} : vector<8x8xf32>, vector<8x16xf32>, vector<8x16xf32> -> vector<8x16xf32>
    %42 = vector.extract_strided_slice %17 {offsets = [0, 1], sizes = [8, 1], strides = [1, 1]} : vector<8x4xf32> to vector<8x1xf32>
    %43 = vector.extract_strided_slice %18 {offsets = [1, 0], sizes = [1, 8], strides = [1, 1]} : vector<4x8xf32> to vector<1x8xf32>
    %44 = vector.broadcast %42 : vector<8x1xf32> to vector<8x8xf32>
    %45 = vector.broadcast %43 : vector<1x8xf32> to vector<8x8xf32>
    %46 = arith.addf %44, %45 : vector<8x8xf32>
    %cst_20 = arith.constant 0.000000e+00 : f32
    %47 = vector.broadcast %cst_20 : f32 to vector<8x8xf32>
    %48 = arith.cmpf ogt, %46, %47 : vector<8x8xf32>
    %cst_21 = arith.constant 2.000000e-01 : f32
    %49 = vector.broadcast %cst_21 : f32 to vector<8x8xf32>
    %50 = arith.mulf %49, %46 : vector<8x8xf32>
    %51 = arith.select %48, %46, %50 : vector<8x8xi1>, vector<8x8xf32>
    %52 = arith.addf %51, %13 : vector<8x8xf32>
    %cst_22 = arith.constant dense<0xFF800000> : vector<8xf32>
    %53 = vector.multi_reduction <maximumf>, %52, %cst_22 [1] : vector<8x8xf32> to vector<8xf32>
    %54 = vector.shape_cast %53 : vector<8xf32> to vector<8x1xf32>
    %55 = vector.broadcast %54 : vector<8x1xf32> to vector<8x8xf32>
    %56 = arith.subf %52, %55 : vector<8x8xf32>
    %57 = math.exp %56 : vector<8x8xf32>
    %cst_23 = arith.constant dense<0.000000e+00> : vector<8xf32>
    %58 = vector.multi_reduction <add>, %57, %cst_23 [1] : vector<8x8xf32> to vector<8xf32>
    %59 = vector.shape_cast %58 : vector<8xf32> to vector<8x1xf32>
    %60 = tpu.reciprocal %59 {approx = true} : vector<8x1xf32> -> vector<8x1xf32>
    %61 = vector.broadcast %60 : vector<8x1xf32> to vector<8x8xf32>
    %62 = arith.mulf %57, %61 : vector<8x8xf32>
    %63 = vector.extract_strided_slice %6 {offsets = [0, 16], sizes = [8, 16], strides = [1, 1]} : vector<8x64xf32> to vector<8x16xf32>
    %cst_24 = arith.constant dense<0.000000e+00> : vector<8x16xf32>
    %64 = tpu.matmul %62, %63, %cst_24 {dimension_numbers = #tpu.dot_dimension_numbers<[1], [0], [0], [1], [0, 0, 1, 1], [], []>} : vector<8x8xf32>, vector<8x16xf32>, vector<8x16xf32> -> vector<8x16xf32>
    %65 = vector.extract_strided_slice %17 {offsets = [0, 2], sizes = [8, 1], strides = [1, 1]} : vector<8x4xf32> to vector<8x1xf32>
    %66 = vector.extract_strided_slice %18 {offsets = [2, 0], sizes = [1, 8], strides = [1, 1]} : vector<4x8xf32> to vector<1x8xf32>
    %67 = vector.broadcast %65 : vector<8x1xf32> to vector<8x8xf32>
    %68 = vector.broadcast %66 : vector<1x8xf32> to vector<8x8xf32>
    %69 = arith.addf %67, %68 : vector<8x8xf32>
    %cst_25 = arith.constant 0.000000e+00 : f32
    %70 = vector.broadcast %cst_25 : f32 to vector<8x8xf32>
    %71 = arith.cmpf ogt, %69, %70 : vector<8x8xf32>
    %cst_26 = arith.constant 2.000000e-01 : f32
    %72 = vector.broadcast %cst_26 : f32 to vector<8x8xf32>
    %73 = arith.mulf %72, %69 : vector<8x8xf32>
    %74 = arith.select %71, %69, %73 : vector<8x8xi1>, vector<8x8xf32>
    %75 = arith.addf %74, %13 : vector<8x8xf32>
    %cst_27 = arith.constant dense<0xFF800000> : vector<8xf32>
    %76 = vector.multi_reduction <maximumf>, %75, %cst_27 [1] : vector<8x8xf32> to vector<8xf32>
    %77 = vector.shape_cast %76 : vector<8xf32> to vector<8x1xf32>
    %78 = vector.broadcast %77 : vector<8x1xf32> to vector<8x8xf32>
    %79 = arith.subf %75, %78 : vector<8x8xf32>
    %80 = math.exp %79 : vector<8x8xf32>
    %cst_28 = arith.constant dense<0.000000e+00> : vector<8xf32>
    %81 = vector.multi_reduction <add>, %80, %cst_28 [1] : vector<8x8xf32> to vector<8xf32>
    %82 = vector.shape_cast %81 : vector<8xf32> to vector<8x1xf32>
    %83 = tpu.reciprocal %82 {approx = true} : vector<8x1xf32> -> vector<8x1xf32>
    %84 = vector.broadcast %83 : vector<8x1xf32> to vector<8x8xf32>
    %85 = arith.mulf %80, %84 : vector<8x8xf32>
    %86 = vector.extract_strided_slice %6 {offsets = [0, 32], sizes = [8, 16], strides = [1, 1]} : vector<8x64xf32> to vector<8x16xf32>
    %cst_29 = arith.constant dense<0.000000e+00> : vector<8x16xf32>
    %87 = tpu.matmul %85, %86, %cst_29 {dimension_numbers = #tpu.dot_dimension_numbers<[1], [0], [0], [1], [0, 0, 1, 1], [], []>} : vector<8x8xf32>, vector<8x16xf32>, vector<8x16xf32> -> vector<8x16xf32>
    %88 = vector.extract_strided_slice %17 {offsets = [0, 3], sizes = [8, 1], strides = [1, 1]} : vector<8x4xf32> to vector<8x1xf32>
    %89 = vector.extract_strided_slice %18 {offsets = [3, 0], sizes = [1, 8], strides = [1, 1]} : vector<4x8xf32> to vector<1x8xf32>
    %90 = vector.broadcast %88 : vector<8x1xf32> to vector<8x8xf32>
    %91 = vector.broadcast %89 : vector<1x8xf32> to vector<8x8xf32>
    %92 = arith.addf %90, %91 : vector<8x8xf32>
    %cst_30 = arith.constant 0.000000e+00 : f32
    %93 = vector.broadcast %cst_30 : f32 to vector<8x8xf32>
    %94 = arith.cmpf ogt, %92, %93 : vector<8x8xf32>
    %cst_31 = arith.constant 2.000000e-01 : f32
    %95 = vector.broadcast %cst_31 : f32 to vector<8x8xf32>
    %96 = arith.mulf %95, %92 : vector<8x8xf32>
    %97 = arith.select %94, %92, %96 : vector<8x8xi1>, vector<8x8xf32>
    %98 = arith.addf %97, %13 : vector<8x8xf32>
    %cst_32 = arith.constant dense<0xFF800000> : vector<8xf32>
    %99 = vector.multi_reduction <maximumf>, %98, %cst_32 [1] : vector<8x8xf32> to vector<8xf32>
    %100 = vector.shape_cast %99 : vector<8xf32> to vector<8x1xf32>
    %101 = vector.broadcast %100 : vector<8x1xf32> to vector<8x8xf32>
    %102 = arith.subf %98, %101 : vector<8x8xf32>
    %103 = math.exp %102 : vector<8x8xf32>
    %cst_33 = arith.constant dense<0.000000e+00> : vector<8xf32>
    %104 = vector.multi_reduction <add>, %103, %cst_33 [1] : vector<8x8xf32> to vector<8xf32>
    %105 = vector.shape_cast %104 : vector<8xf32> to vector<8x1xf32>
    %106 = tpu.reciprocal %105 {approx = true} : vector<8x1xf32> -> vector<8x1xf32>
    %107 = vector.broadcast %106 : vector<8x1xf32> to vector<8x8xf32>
    %108 = arith.mulf %103, %107 : vector<8x8xf32>
    %109 = vector.extract_strided_slice %6 {offsets = [0, 48], sizes = [8, 16], strides = [1, 1]} : vector<8x64xf32> to vector<8x16xf32>
    %cst_34 = arith.constant dense<0.000000e+00> : vector<8x16xf32>
    %110 = tpu.matmul %108, %109, %cst_34 {dimension_numbers = #tpu.dot_dimension_numbers<[1], [0], [0], [1], [0, 0, 1, 1], [], []>} : vector<8x8xf32>, vector<8x16xf32>, vector<8x16xf32> -> vector<8x16xf32>
    %111 = tpu.concatenate %41, %64, %87, %110 in 1 : vector<8x16xf32>, vector<8x16xf32>, vector<8x16xf32>, vector<8x16xf32> -> vector<8x64xf32>
    %112 = vector.broadcast %14 : vector<1x64xf32> to vector<8x64xf32>
    %113 = arith.addf %111, %112 : vector<8x64xf32>
    %cst_35 = arith.constant 0.000000e+00 : f32
    %114 = vector.broadcast %cst_35 : f32 to vector<8x64xf32>
    %115 = arith.cmpf ogt, %113, %114 : vector<8x64xf32>
    %cst_36 = arith.constant 0.00999999977 : f32
    %116 = vector.broadcast %cst_36 : f32 to vector<8x64xf32>
    %117 = arith.mulf %116, %113 : vector<8x64xf32>
    %118 = arith.select %115, %113, %117 : vector<8x64xi1>, vector<8x64xf32>
    %c0_37 = arith.constant 0 : index
    %c0_38 = arith.constant 0 : index
    %119 = vector.load %arg5[%c0_37, %c0_38] : memref<64x8xf32, #tpu.memory_space<vmem>>, vector<64x8xf32>
    %c0_39 = arith.constant 0 : index
    %c0_40 = arith.constant 0 : index
    %120 = vector.load %arg12[%c0_39, %c0_40] : memref<4x8xf32, #tpu.memory_space<vmem>>, vector<4x8xf32>
    %c0_41 = arith.constant 0 : index
    %c0_42 = arith.constant 0 : index
    %121 = vector.load %arg8[%c0_41, %c0_42] : memref<1x64xf32, #tpu.memory_space<vmem>>, vector<1x64xf32>
    %122 = tpu.concatenate %7, %9 in 0 : vector<8x64xf32>, vector<4x64xf32> -> vector<12x64xf32>
    %cst_43 = arith.constant dense<0.000000e+00> : vector<12x8xf32>
    %123 = tpu.matmul %122, %119, %cst_43 {dimension_numbers = #tpu.dot_dimension_numbers<[1], [0], [0], [1], [0, 0, 1, 1], [], []>} : vector<12x64xf32>, vector<64x8xf32>, vector<12x8xf32> -> vector<12x8xf32>
    %124 = vector.extract_strided_slice %123 {offsets = [0, 0], sizes = [8, 4], strides = [1, 1]} : vector<12x8xf32> to vector<8x4xf32>
    %125 = vector.extract_strided_slice %123 {offsets = [8, 4], sizes = [4, 4], strides = [1, 1]} : vector<12x8xf32> to vector<4x4xf32>
    %126 = tpu.transpose %124, [1, 0] : vector<8x4xf32> -> vector<4x8xf32>
    %127 = vector.extract_strided_slice %125 {offsets = [0, 0], sizes = [4, 1], strides = [1, 1]} : vector<4x4xf32> to vector<4x1xf32>
    %128 = vector.extract_strided_slice %126 {offsets = [0, 0], sizes = [1, 8], strides = [1, 1]} : vector<4x8xf32> to vector<1x8xf32>
    %129 = vector.broadcast %127 : vector<4x1xf32> to vector<4x8xf32>
    %130 = vector.broadcast %128 : vector<1x8xf32> to vector<4x8xf32>
    %131 = arith.addf %129, %130 : vector<4x8xf32>
    %cst_44 = arith.constant 0.000000e+00 : f32
    %132 = vector.broadcast %cst_44 : f32 to vector<4x8xf32>
    %133 = arith.cmpf ogt, %131, %132 : vector<4x8xf32>
    %cst_45 = arith.constant 2.000000e-01 : f32
    %134 = vector.broadcast %cst_45 : f32 to vector<4x8xf32>
    %135 = arith.mulf %134, %131 : vector<4x8xf32>
    %136 = arith.select %133, %131, %135 : vector<4x8xi1>, vector<4x8xf32>
    %137 = arith.addf %136, %120 : vector<4x8xf32>
    %cst_46 = arith.constant dense<0xFF800000> : vector<4xf32>
    %138 = vector.multi_reduction <maximumf>, %137, %cst_46 [1] : vector<4x8xf32> to vector<4xf32>
    %139 = vector.shape_cast %138 : vector<4xf32> to vector<4x1xf32>
    %140 = vector.broadcast %139 : vector<4x1xf32> to vector<4x8xf32>
    %141 = arith.subf %137, %140 : vector<4x8xf32>
    %142 = math.exp %141 : vector<4x8xf32>
    %cst_47 = arith.constant dense<0.000000e+00> : vector<4xf32>
    %143 = vector.multi_reduction <add>, %142, %cst_47 [1] : vector<4x8xf32> to vector<4xf32>
    %144 = vector.shape_cast %143 : vector<4xf32> to vector<4x1xf32>
    %145 = tpu.reciprocal %144 {approx = true} : vector<4x1xf32> -> vector<4x1xf32>
    %146 = vector.broadcast %145 : vector<4x1xf32> to vector<4x8xf32>
    %147 = arith.mulf %142, %146 : vector<4x8xf32>
    %148 = vector.extract_strided_slice %7 {offsets = [0, 0], sizes = [8, 16], strides = [1, 1]} : vector<8x64xf32> to vector<8x16xf32>
    %cst_48 = arith.constant dense<0.000000e+00> : vector<4x16xf32>
    %149 = tpu.matmul %147, %148, %cst_48 {dimension_numbers = #tpu.dot_dimension_numbers<[1], [0], [0], [1], [0, 0, 1, 1], [], []>} : vector<4x8xf32>, vector<8x16xf32>, vector<4x16xf32> -> vector<4x16xf32>
    %150 = vector.extract_strided_slice %125 {offsets = [0, 1], sizes = [4, 1], strides = [1, 1]} : vector<4x4xf32> to vector<4x1xf32>
    %151 = vector.extract_strided_slice %126 {offsets = [1, 0], sizes = [1, 8], strides = [1, 1]} : vector<4x8xf32> to vector<1x8xf32>
    %152 = vector.broadcast %150 : vector<4x1xf32> to vector<4x8xf32>
    %153 = vector.broadcast %151 : vector<1x8xf32> to vector<4x8xf32>
    %154 = arith.addf %152, %153 : vector<4x8xf32>
    %cst_49 = arith.constant 0.000000e+00 : f32
    %155 = vector.broadcast %cst_49 : f32 to vector<4x8xf32>
    %156 = arith.cmpf ogt, %154, %155 : vector<4x8xf32>
    %cst_50 = arith.constant 2.000000e-01 : f32
    %157 = vector.broadcast %cst_50 : f32 to vector<4x8xf32>
    %158 = arith.mulf %157, %154 : vector<4x8xf32>
    %159 = arith.select %156, %154, %158 : vector<4x8xi1>, vector<4x8xf32>
    %160 = arith.addf %159, %120 : vector<4x8xf32>
    %cst_51 = arith.constant dense<0xFF800000> : vector<4xf32>
    %161 = vector.multi_reduction <maximumf>, %160, %cst_51 [1] : vector<4x8xf32> to vector<4xf32>
    %162 = vector.shape_cast %161 : vector<4xf32> to vector<4x1xf32>
    %163 = vector.broadcast %162 : vector<4x1xf32> to vector<4x8xf32>
    %164 = arith.subf %160, %163 : vector<4x8xf32>
    %165 = math.exp %164 : vector<4x8xf32>
    %cst_52 = arith.constant dense<0.000000e+00> : vector<4xf32>
    %166 = vector.multi_reduction <add>, %165, %cst_52 [1] : vector<4x8xf32> to vector<4xf32>
    %167 = vector.shape_cast %166 : vector<4xf32> to vector<4x1xf32>
    %168 = tpu.reciprocal %167 {approx = true} : vector<4x1xf32> -> vector<4x1xf32>
    %169 = vector.broadcast %168 : vector<4x1xf32> to vector<4x8xf32>
    %170 = arith.mulf %165, %169 : vector<4x8xf32>
    %171 = vector.extract_strided_slice %7 {offsets = [0, 16], sizes = [8, 16], strides = [1, 1]} : vector<8x64xf32> to vector<8x16xf32>
    %cst_53 = arith.constant dense<0.000000e+00> : vector<4x16xf32>
    %172 = tpu.matmul %170, %171, %cst_53 {dimension_numbers = #tpu.dot_dimension_numbers<[1], [0], [0], [1], [0, 0, 1, 1], [], []>} : vector<4x8xf32>, vector<8x16xf32>, vector<4x16xf32> -> vector<4x16xf32>
    %173 = vector.extract_strided_slice %125 {offsets = [0, 2], sizes = [4, 1], strides = [1, 1]} : vector<4x4xf32> to vector<4x1xf32>
    %174 = vector.extract_strided_slice %126 {offsets = [2, 0], sizes = [1, 8], strides = [1, 1]} : vector<4x8xf32> to vector<1x8xf32>
    %175 = vector.broadcast %173 : vector<4x1xf32> to vector<4x8xf32>
    %176 = vector.broadcast %174 : vector<1x8xf32> to vector<4x8xf32>
    %177 = arith.addf %175, %176 : vector<4x8xf32>
    %cst_54 = arith.constant 0.000000e+00 : f32
    %178 = vector.broadcast %cst_54 : f32 to vector<4x8xf32>
    %179 = arith.cmpf ogt, %177, %178 : vector<4x8xf32>
    %cst_55 = arith.constant 2.000000e-01 : f32
    %180 = vector.broadcast %cst_55 : f32 to vector<4x8xf32>
    %181 = arith.mulf %180, %177 : vector<4x8xf32>
    %182 = arith.select %179, %177, %181 : vector<4x8xi1>, vector<4x8xf32>
    %183 = arith.addf %182, %120 : vector<4x8xf32>
    %cst_56 = arith.constant dense<0xFF800000> : vector<4xf32>
    %184 = vector.multi_reduction <maximumf>, %183, %cst_56 [1] : vector<4x8xf32> to vector<4xf32>
    %185 = vector.shape_cast %184 : vector<4xf32> to vector<4x1xf32>
    %186 = vector.broadcast %185 : vector<4x1xf32> to vector<4x8xf32>
    %187 = arith.subf %183, %186 : vector<4x8xf32>
    %188 = math.exp %187 : vector<4x8xf32>
    %cst_57 = arith.constant dense<0.000000e+00> : vector<4xf32>
    %189 = vector.multi_reduction <add>, %188, %cst_57 [1] : vector<4x8xf32> to vector<4xf32>
    %190 = vector.shape_cast %189 : vector<4xf32> to vector<4x1xf32>
    %191 = tpu.reciprocal %190 {approx = true} : vector<4x1xf32> -> vector<4x1xf32>
    %192 = vector.broadcast %191 : vector<4x1xf32> to vector<4x8xf32>
    %193 = arith.mulf %188, %192 : vector<4x8xf32>
    %194 = vector.extract_strided_slice %7 {offsets = [0, 32], sizes = [8, 16], strides = [1, 1]} : vector<8x64xf32> to vector<8x16xf32>
    %cst_58 = arith.constant dense<0.000000e+00> : vector<4x16xf32>
    %195 = tpu.matmul %193, %194, %cst_58 {dimension_numbers = #tpu.dot_dimension_numbers<[1], [0], [0], [1], [0, 0, 1, 1], [], []>} : vector<4x8xf32>, vector<8x16xf32>, vector<4x16xf32> -> vector<4x16xf32>
    %196 = vector.extract_strided_slice %125 {offsets = [0, 3], sizes = [4, 1], strides = [1, 1]} : vector<4x4xf32> to vector<4x1xf32>
    %197 = vector.extract_strided_slice %126 {offsets = [3, 0], sizes = [1, 8], strides = [1, 1]} : vector<4x8xf32> to vector<1x8xf32>
    %198 = vector.broadcast %196 : vector<4x1xf32> to vector<4x8xf32>
    %199 = vector.broadcast %197 : vector<1x8xf32> to vector<4x8xf32>
    %200 = arith.addf %198, %199 : vector<4x8xf32>
    %cst_59 = arith.constant 0.000000e+00 : f32
    %201 = vector.broadcast %cst_59 : f32 to vector<4x8xf32>
    %202 = arith.cmpf ogt, %200, %201 : vector<4x8xf32>
    %cst_60 = arith.constant 2.000000e-01 : f32
    %203 = vector.broadcast %cst_60 : f32 to vector<4x8xf32>
    %204 = arith.mulf %203, %200 : vector<4x8xf32>
    %205 = arith.select %202, %200, %204 : vector<4x8xi1>, vector<4x8xf32>
    %206 = arith.addf %205, %120 : vector<4x8xf32>
    %cst_61 = arith.constant dense<0xFF800000> : vector<4xf32>
    %207 = vector.multi_reduction <maximumf>, %206, %cst_61 [1] : vector<4x8xf32> to vector<4xf32>
    %208 = vector.shape_cast %207 : vector<4xf32> to vector<4x1xf32>
    %209 = vector.broadcast %208 : vector<4x1xf32> to vector<4x8xf32>
    %210 = arith.subf %206, %209 : vector<4x8xf32>
    %211 = math.exp %210 : vector<4x8xf32>
    %cst_62 = arith.constant dense<0.000000e+00> : vector<4xf32>
    %212 = vector.multi_reduction <add>, %211, %cst_62 [1] : vector<4x8xf32> to vector<4xf32>
    %213 = vector.shape_cast %212 : vector<4xf32> to vector<4x1xf32>
    %214 = tpu.reciprocal %213 {approx = true} : vector<4x1xf32> -> vector<4x1xf32>
    %215 = vector.broadcast %214 : vector<4x1xf32> to vector<4x8xf32>
    %216 = arith.mulf %211, %215 : vector<4x8xf32>
    %217 = vector.extract_strided_slice %7 {offsets = [0, 48], sizes = [8, 16], strides = [1, 1]} : vector<8x64xf32> to vector<8x16xf32>
    %cst_63 = arith.constant dense<0.000000e+00> : vector<4x16xf32>
    %218 = tpu.matmul %216, %217, %cst_63 {dimension_numbers = #tpu.dot_dimension_numbers<[1], [0], [0], [1], [0, 0, 1, 1], [], []>} : vector<4x8xf32>, vector<8x16xf32>, vector<4x16xf32> -> vector<4x16xf32>
    %219 = tpu.concatenate %149, %172, %195, %218 in 1 : vector<4x16xf32>, vector<4x16xf32>, vector<4x16xf32>, vector<4x16xf32> -> vector<4x64xf32>
    %220 = vector.broadcast %121 : vector<1x64xf32> to vector<4x64xf32>
    %221 = arith.addf %219, %220 : vector<4x64xf32>
    %cst_64 = arith.constant 0.000000e+00 : f32
    %222 = vector.broadcast %cst_64 : f32 to vector<4x64xf32>
    %223 = arith.cmpf ogt, %221, %222 : vector<4x64xf32>
    %cst_65 = arith.constant 0.00999999977 : f32
    %224 = vector.broadcast %cst_65 : f32 to vector<4x64xf32>
    %225 = arith.mulf %224, %221 : vector<4x64xf32>
    %226 = arith.select %223, %221, %225 : vector<4x64xi1>, vector<4x64xf32>
    %c0_66 = arith.constant 0 : index
    %c0_67 = arith.constant 0 : index
    %227 = vector.load %arg6[%c0_66, %c0_67] : memref<64x8xf32, #tpu.memory_space<vmem>>, vector<64x8xf32>
    %c0_68 = arith.constant 0 : index
    %c0_69 = arith.constant 0 : index
    %228 = vector.load %arg13[%c0_68, %c0_69] : memref<8x4xf32, #tpu.memory_space<vmem>>, vector<8x4xf32>
    %c0_70 = arith.constant 0 : index
    %c0_71 = arith.constant 0 : index
    %229 = vector.load %arg9[%c0_70, %c0_71] : memref<1x64xf32, #tpu.memory_space<vmem>>, vector<1x64xf32>
    %230 = tpu.concatenate %10, %8 in 0 : vector<4x64xf32>, vector<8x64xf32> -> vector<12x64xf32>
    %cst_72 = arith.constant dense<0.000000e+00> : vector<12x8xf32>
    %231 = tpu.matmul %230, %227, %cst_72 {dimension_numbers = #tpu.dot_dimension_numbers<[1], [0], [0], [1], [0, 0, 1, 1], [], []>} : vector<12x64xf32>, vector<64x8xf32>, vector<12x8xf32> -> vector<12x8xf32>
    %232 = vector.extract_strided_slice %231 {offsets = [0, 0], sizes = [4, 4], strides = [1, 1]} : vector<12x8xf32> to vector<4x4xf32>
    %233 = vector.extract_strided_slice %231 {offsets = [4, 4], sizes = [8, 4], strides = [1, 1]} : vector<12x8xf32> to vector<8x4xf32>
    %234 = tpu.transpose %232, [1, 0] : vector<4x4xf32> -> vector<4x4xf32>
    %235 = vector.extract_strided_slice %233 {offsets = [0, 0], sizes = [8, 1], strides = [1, 1]} : vector<8x4xf32> to vector<8x1xf32>
    %236 = vector.extract_strided_slice %234 {offsets = [0, 0], sizes = [1, 4], strides = [1, 1]} : vector<4x4xf32> to vector<1x4xf32>
    %237 = vector.broadcast %235 : vector<8x1xf32> to vector<8x4xf32>
    %238 = vector.broadcast %236 : vector<1x4xf32> to vector<8x4xf32>
    %239 = arith.addf %237, %238 : vector<8x4xf32>
    %cst_73 = arith.constant 0.000000e+00 : f32
    %240 = vector.broadcast %cst_73 : f32 to vector<8x4xf32>
    %241 = arith.cmpf ogt, %239, %240 : vector<8x4xf32>
    %cst_74 = arith.constant 2.000000e-01 : f32
    %242 = vector.broadcast %cst_74 : f32 to vector<8x4xf32>
    %243 = arith.mulf %242, %239 : vector<8x4xf32>
    %244 = arith.select %241, %239, %243 : vector<8x4xi1>, vector<8x4xf32>
    %245 = arith.addf %244, %228 : vector<8x4xf32>
    %cst_75 = arith.constant dense<0xFF800000> : vector<8xf32>
    %246 = vector.multi_reduction <maximumf>, %245, %cst_75 [1] : vector<8x4xf32> to vector<8xf32>
    %247 = vector.shape_cast %246 : vector<8xf32> to vector<8x1xf32>
    %248 = vector.broadcast %247 : vector<8x1xf32> to vector<8x4xf32>
    %249 = arith.subf %245, %248 : vector<8x4xf32>
    %250 = math.exp %249 : vector<8x4xf32>
    %cst_76 = arith.constant dense<0.000000e+00> : vector<8xf32>
    %251 = vector.multi_reduction <add>, %250, %cst_76 [1] : vector<8x4xf32> to vector<8xf32>
    %252 = vector.shape_cast %251 : vector<8xf32> to vector<8x1xf32>
    %253 = tpu.reciprocal %252 {approx = true} : vector<8x1xf32> -> vector<8x1xf32>
    %254 = vector.broadcast %253 : vector<8x1xf32> to vector<8x4xf32>
    %255 = arith.mulf %250, %254 : vector<8x4xf32>
    %256 = vector.extract_strided_slice %10 {offsets = [0, 0], sizes = [4, 16], strides = [1, 1]} : vector<4x64xf32> to vector<4x16xf32>
    %cst_77 = arith.constant dense<0.000000e+00> : vector<8x16xf32>
    %257 = tpu.matmul %255, %256, %cst_77 {dimension_numbers = #tpu.dot_dimension_numbers<[1], [0], [0], [1], [0, 0, 1, 1], [], []>} : vector<8x4xf32>, vector<4x16xf32>, vector<8x16xf32> -> vector<8x16xf32>
    %258 = vector.extract_strided_slice %233 {offsets = [0, 1], sizes = [8, 1], strides = [1, 1]} : vector<8x4xf32> to vector<8x1xf32>
    %259 = vector.extract_strided_slice %234 {offsets = [1, 0], sizes = [1, 4], strides = [1, 1]} : vector<4x4xf32> to vector<1x4xf32>
    %260 = vector.broadcast %258 : vector<8x1xf32> to vector<8x4xf32>
    %261 = vector.broadcast %259 : vector<1x4xf32> to vector<8x4xf32>
    %262 = arith.addf %260, %261 : vector<8x4xf32>
    %cst_78 = arith.constant 0.000000e+00 : f32
    %263 = vector.broadcast %cst_78 : f32 to vector<8x4xf32>
    %264 = arith.cmpf ogt, %262, %263 : vector<8x4xf32>
    %cst_79 = arith.constant 2.000000e-01 : f32
    %265 = vector.broadcast %cst_79 : f32 to vector<8x4xf32>
    %266 = arith.mulf %265, %262 : vector<8x4xf32>
    %267 = arith.select %264, %262, %266 : vector<8x4xi1>, vector<8x4xf32>
    %268 = arith.addf %267, %228 : vector<8x4xf32>
    %cst_80 = arith.constant dense<0xFF800000> : vector<8xf32>
    %269 = vector.multi_reduction <maximumf>, %268, %cst_80 [1] : vector<8x4xf32> to vector<8xf32>
    %270 = vector.shape_cast %269 : vector<8xf32> to vector<8x1xf32>
    %271 = vector.broadcast %270 : vector<8x1xf32> to vector<8x4xf32>
    %272 = arith.subf %268, %271 : vector<8x4xf32>
    %273 = math.exp %272 : vector<8x4xf32>
    %cst_81 = arith.constant dense<0.000000e+00> : vector<8xf32>
    %274 = vector.multi_reduction <add>, %273, %cst_81 [1] : vector<8x4xf32> to vector<8xf32>
    %275 = vector.shape_cast %274 : vector<8xf32> to vector<8x1xf32>
    %276 = tpu.reciprocal %275 {approx = true} : vector<8x1xf32> -> vector<8x1xf32>
    %277 = vector.broadcast %276 : vector<8x1xf32> to vector<8x4xf32>
    %278 = arith.mulf %273, %277 : vector<8x4xf32>
    %279 = vector.extract_strided_slice %10 {offsets = [0, 16], sizes = [4, 16], strides = [1, 1]} : vector<4x64xf32> to vector<4x16xf32>
    %cst_82 = arith.constant dense<0.000000e+00> : vector<8x16xf32>
    %280 = tpu.matmul %278, %279, %cst_82 {dimension_numbers = #tpu.dot_dimension_numbers<[1], [0], [0], [1], [0, 0, 1, 1], [], []>} : vector<8x4xf32>, vector<4x16xf32>, vector<8x16xf32> -> vector<8x16xf32>
    %281 = vector.extract_strided_slice %233 {offsets = [0, 2], sizes = [8, 1], strides = [1, 1]} : vector<8x4xf32> to vector<8x1xf32>
    %282 = vector.extract_strided_slice %234 {offsets = [2, 0], sizes = [1, 4], strides = [1, 1]} : vector<4x4xf32> to vector<1x4xf32>
    %283 = vector.broadcast %281 : vector<8x1xf32> to vector<8x4xf32>
    %284 = vector.broadcast %282 : vector<1x4xf32> to vector<8x4xf32>
    %285 = arith.addf %283, %284 : vector<8x4xf32>
    %cst_83 = arith.constant 0.000000e+00 : f32
    %286 = vector.broadcast %cst_83 : f32 to vector<8x4xf32>
    %287 = arith.cmpf ogt, %285, %286 : vector<8x4xf32>
    %cst_84 = arith.constant 2.000000e-01 : f32
    %288 = vector.broadcast %cst_84 : f32 to vector<8x4xf32>
    %289 = arith.mulf %288, %285 : vector<8x4xf32>
    %290 = arith.select %287, %285, %289 : vector<8x4xi1>, vector<8x4xf32>
    %291 = arith.addf %290, %228 : vector<8x4xf32>
    %cst_85 = arith.constant dense<0xFF800000> : vector<8xf32>
    %292 = vector.multi_reduction <maximumf>, %291, %cst_85 [1] : vector<8x4xf32> to vector<8xf32>
    %293 = vector.shape_cast %292 : vector<8xf32> to vector<8x1xf32>
    %294 = vector.broadcast %293 : vector<8x1xf32> to vector<8x4xf32>
    %295 = arith.subf %291, %294 : vector<8x4xf32>
    %296 = math.exp %295 : vector<8x4xf32>
    %cst_86 = arith.constant dense<0.000000e+00> : vector<8xf32>
    %297 = vector.multi_reduction <add>, %296, %cst_86 [1] : vector<8x4xf32> to vector<8xf32>
    %298 = vector.shape_cast %297 : vector<8xf32> to vector<8x1xf32>
    %299 = tpu.reciprocal %298 {approx = true} : vector<8x1xf32> -> vector<8x1xf32>
    %300 = vector.broadcast %299 : vector<8x1xf32> to vector<8x4xf32>
    %301 = arith.mulf %296, %300 : vector<8x4xf32>
    %302 = vector.extract_strided_slice %10 {offsets = [0, 32], sizes = [4, 16], strides = [1, 1]} : vector<4x64xf32> to vector<4x16xf32>
    %cst_87 = arith.constant dense<0.000000e+00> : vector<8x16xf32>
    %303 = tpu.matmul %301, %302, %cst_87 {dimension_numbers = #tpu.dot_dimension_numbers<[1], [0], [0], [1], [0, 0, 1, 1], [], []>} : vector<8x4xf32>, vector<4x16xf32>, vector<8x16xf32> -> vector<8x16xf32>
    %304 = vector.extract_strided_slice %233 {offsets = [0, 3], sizes = [8, 1], strides = [1, 1]} : vector<8x4xf32> to vector<8x1xf32>
    %305 = vector.extract_strided_slice %234 {offsets = [3, 0], sizes = [1, 4], strides = [1, 1]} : vector<4x4xf32> to vector<1x4xf32>
    %306 = vector.broadcast %304 : vector<8x1xf32> to vector<8x4xf32>
    %307 = vector.broadcast %305 : vector<1x4xf32> to vector<8x4xf32>
    %308 = arith.addf %306, %307 : vector<8x4xf32>
    %cst_88 = arith.constant 0.000000e+00 : f32
    %309 = vector.broadcast %cst_88 : f32 to vector<8x4xf32>
    %310 = arith.cmpf ogt, %308, %309 : vector<8x4xf32>
    %cst_89 = arith.constant 2.000000e-01 : f32
    %311 = vector.broadcast %cst_89 : f32 to vector<8x4xf32>
    %312 = arith.mulf %311, %308 : vector<8x4xf32>
    %313 = arith.select %310, %308, %312 : vector<8x4xi1>, vector<8x4xf32>
    %314 = arith.addf %313, %228 : vector<8x4xf32>
    %cst_90 = arith.constant dense<0xFF800000> : vector<8xf32>
    %315 = vector.multi_reduction <maximumf>, %314, %cst_90 [1] : vector<8x4xf32> to vector<8xf32>
    %316 = vector.shape_cast %315 : vector<8xf32> to vector<8x1xf32>
    %317 = vector.broadcast %316 : vector<8x1xf32> to vector<8x4xf32>
    %318 = arith.subf %314, %317 : vector<8x4xf32>
    %319 = math.exp %318 : vector<8x4xf32>
    %cst_91 = arith.constant dense<0.000000e+00> : vector<8xf32>
    %320 = vector.multi_reduction <add>, %319, %cst_91 [1] : vector<8x4xf32> to vector<8xf32>
    %321 = vector.shape_cast %320 : vector<8xf32> to vector<8x1xf32>
    %322 = tpu.reciprocal %321 {approx = true} : vector<8x1xf32> -> vector<8x1xf32>
    %323 = vector.broadcast %322 : vector<8x1xf32> to vector<8x4xf32>
    %324 = arith.mulf %319, %323 : vector<8x4xf32>
    %325 = vector.extract_strided_slice %10 {offsets = [0, 48], sizes = [4, 16], strides = [1, 1]} : vector<4x64xf32> to vector<4x16xf32>
    %cst_92 = arith.constant dense<0.000000e+00> : vector<8x16xf32>
    %326 = tpu.matmul %324, %325, %cst_92 {dimension_numbers = #tpu.dot_dimension_numbers<[1], [0], [0], [1], [0, 0, 1, 1], [], []>} : vector<8x4xf32>, vector<4x16xf32>, vector<8x16xf32> -> vector<8x16xf32>
    %327 = tpu.concatenate %257, %280, %303, %326 in 1 : vector<8x16xf32>, vector<8x16xf32>, vector<8x16xf32>, vector<8x16xf32> -> vector<8x64xf32>
    %328 = vector.broadcast %229 : vector<1x64xf32> to vector<8x64xf32>
    %329 = arith.addf %327, %328 : vector<8x64xf32>
    %cst_93 = arith.constant 0.000000e+00 : f32
    %330 = vector.broadcast %cst_93 : f32 to vector<8x64xf32>
    %331 = arith.cmpf ogt, %329, %330 : vector<8x64xf32>
    %cst_94 = arith.constant 0.00999999977 : f32
    %332 = vector.broadcast %cst_94 : f32 to vector<8x64xf32>
    %333 = arith.mulf %332, %329 : vector<8x64xf32>
    %334 = arith.select %331, %329, %333 : vector<8x64xi1>, vector<8x64xf32>
    %c0_95 = arith.constant 0 : index
    %c0_96 = arith.constant 0 : index
    %335 = vector.load %arg10[%c0_95, %c0_96] : memref<1x64xf32, #tpu.memory_space<vmem>>, vector<1x64xf32>
    %336 = vector.broadcast %335 : vector<1x64xf32> to vector<4x64xf32>
    %337 = arith.addf %11, %336 : vector<4x64xf32>
    %cst_97 = arith.constant 0.000000e+00 : f32
    %338 = vector.broadcast %cst_97 : f32 to vector<4x64xf32>
    %339 = arith.cmpf ogt, %337, %338 : vector<4x64xf32>
    %cst_98 = arith.constant 0.00999999977 : f32
    %340 = vector.broadcast %cst_98 : f32 to vector<4x64xf32>
    %341 = arith.mulf %340, %337 : vector<4x64xf32>
    %342 = arith.select %339, %337, %341 : vector<4x64xi1>, vector<4x64xf32>
    %c0_99 = arith.constant 0 : index
    %c0_100 = arith.constant 0 : index
    %343 = vector.load %arg14[%c0_99, %c0_100] : memref<64x256xf32, #tpu.memory_space<vmem>>, vector<64x256xf32>
    %c0_101 = arith.constant 0 : index
    %c0_102 = arith.constant 0 : index
    %344 = vector.load %arg15[%c0_101, %c0_102] : memref<1x256xf32, #tpu.memory_space<vmem>>, vector<1x256xf32>
    %c0_103 = arith.constant 0 : index
    %c0_104 = arith.constant 0 : index
    %345 = vector.load %arg16[%c0_103, %c0_104] : memref<256x1xf32, #tpu.memory_space<vmem>>, vector<256x1xf32>
    %346 = tpu.concatenate %118, %334 in 0 : vector<8x64xf32>, vector<8x64xf32> -> vector<16x64xf32>
    %cst_105 = arith.constant dense<0.000000e+00> : vector<16x256xf32>
    %347 = tpu.matmul %346, %343, %cst_105 {dimension_numbers = #tpu.dot_dimension_numbers<[1], [0], [0], [1], [0, 0, 1, 1], [], []>} : vector<16x64xf32>, vector<64x256xf32>, vector<16x256xf32> -> vector<16x256xf32>
    %348 = vector.broadcast %344 : vector<1x256xf32> to vector<16x256xf32>
    %349 = arith.addf %347, %348 : vector<16x256xf32>
    %350 = math.tanh %349 : vector<16x256xf32>
    %cst_106 = arith.constant dense<0.000000e+00> : vector<16x1xf32>
    %351 = tpu.matmul %350, %345, %cst_106 {dimension_numbers = #tpu.dot_dimension_numbers<[1], [0], [0], [1], [0, 0, 1, 1], [], []>} : vector<16x256xf32>, vector<256x1xf32>, vector<16x1xf32> -> vector<16x1xf32>
    %352 = vector.extract_strided_slice %351 {offsets = [0, 0], sizes = [8, 1], strides = [1, 1]} : vector<16x1xf32> to vector<8x1xf32>
    %353 = vector.extract_strided_slice %351 {offsets = [8, 0], sizes = [8, 1], strides = [1, 1]} : vector<16x1xf32> to vector<8x1xf32>
    %354 = arith.maximumf %352, %353 : vector<8x1xf32>
    %355 = arith.subf %352, %354 : vector<8x1xf32>
    %356 = math.exp %355 : vector<8x1xf32>
    %357 = arith.subf %353, %354 : vector<8x1xf32>
    %358 = math.exp %357 : vector<8x1xf32>
    %359 = arith.addf %356, %358 : vector<8x1xf32>
    %360 = tpu.reciprocal %359 {approx = true} : vector<8x1xf32> -> vector<8x1xf32>
    %361 = vector.broadcast %356 : vector<8x1xf32> to vector<8x64xf32>
    %362 = arith.mulf %361, %118 : vector<8x64xf32>
    %363 = vector.broadcast %358 : vector<8x1xf32> to vector<8x64xf32>
    %364 = arith.mulf %363, %334 : vector<8x64xf32>
    %365 = arith.addf %362, %364 : vector<8x64xf32>
    %366 = vector.broadcast %360 : vector<8x1xf32> to vector<8x64xf32>
    %367 = arith.mulf %365, %366 : vector<8x64xf32>
    %c0_107 = arith.constant 0 : index
    %c0_108 = arith.constant 0 : index
    %368 = vector.load %arg20[%c0_107, %c0_108] : memref<8x64xf32, #tpu.memory_space<vmem>>, vector<8x64xf32>
    tpu.vector_store %arg20[%c0_107, %c0_108], %367 {strides = array<i32>} : memref<8x64xf32, #tpu.memory_space<vmem>>, vector<8x64xf32>,
    %c0_109 = arith.constant 0 : index
    %c0_110 = arith.constant 0 : index
    %369 = vector.load %arg17[%c0_109, %c0_110] : memref<64x256xf32, #tpu.memory_space<vmem>>, vector<64x256xf32>
    %c0_111 = arith.constant 0 : index
    %c0_112 = arith.constant 0 : index
    %370 = vector.load %arg18[%c0_111, %c0_112] : memref<1x256xf32, #tpu.memory_space<vmem>>, vector<1x256xf32>
    %c0_113 = arith.constant 0 : index
    %c0_114 = arith.constant 0 : index
    %371 = vector.load %arg19[%c0_113, %c0_114] : memref<256x1xf32, #tpu.memory_space<vmem>>, vector<256x1xf32>
    %372 = tpu.concatenate %226, %342 in 0 : vector<4x64xf32>, vector<4x64xf32> -> vector<8x64xf32>
    %cst_115 = arith.constant dense<0.000000e+00> : vector<8x256xf32>
    %373 = tpu.matmul %372, %369, %cst_115 {dimension_numbers = #tpu.dot_dimension_numbers<[1], [0], [0], [1], [0, 0, 1, 1], [], []>} : vector<8x64xf32>, vector<64x256xf32>, vector<8x256xf32> -> vector<8x256xf32>
    %374 = vector.broadcast %370 : vector<1x256xf32> to vector<8x256xf32>
    %375 = arith.addf %373, %374 : vector<8x256xf32>
    %376 = math.tanh %375 : vector<8x256xf32>
    %cst_116 = arith.constant dense<0.000000e+00> : vector<8x1xf32>
    %377 = tpu.matmul %376, %371, %cst_116 {dimension_numbers = #tpu.dot_dimension_numbers<[1], [0], [0], [1], [0, 0, 1, 1], [], []>} : vector<8x256xf32>, vector<256x1xf32>, vector<8x1xf32> -> vector<8x1xf32>
    %378 = vector.extract_strided_slice %377 {offsets = [0, 0], sizes = [4, 1], strides = [1, 1]} : vector<8x1xf32> to vector<4x1xf32>
    %379 = vector.extract_strided_slice %377 {offsets = [4, 0], sizes = [4, 1], strides = [1, 1]} : vector<8x1xf32> to vector<4x1xf32>
    %380 = arith.maximumf %378, %379 : vector<4x1xf32>
    %381 = arith.subf %378, %380 : vector<4x1xf32>
    %382 = math.exp %381 : vector<4x1xf32>
    %383 = arith.subf %379, %380 : vector<4x1xf32>
    %384 = math.exp %383 : vector<4x1xf32>
    %385 = arith.addf %382, %384 : vector<4x1xf32>
    %386 = tpu.reciprocal %385 {approx = true} : vector<4x1xf32> -> vector<4x1xf32>
    %387 = vector.broadcast %382 : vector<4x1xf32> to vector<4x64xf32>
    %388 = arith.mulf %387, %226 : vector<4x64xf32>
    %389 = vector.broadcast %384 : vector<4x1xf32> to vector<4x64xf32>
    %390 = arith.mulf %389, %342 : vector<4x64xf32>
    %391 = arith.addf %388, %390 : vector<4x64xf32>
    %392 = vector.broadcast %386 : vector<4x1xf32> to vector<4x64xf32>
    %393 = arith.mulf %391, %392 : vector<4x64xf32>
    %c0_117 = arith.constant 0 : index
    %c0_118 = arith.constant 0 : index
    %394 = vector.load %arg21[%c0_117, %c0_118] : memref<4x64xf32, #tpu.memory_space<vmem>>, vector<4x64xf32>
    tpu.vector_store %arg21[%c0_117, %c0_118], %393 {strides = array<i32>} : memref<4x64xf32, #tpu.memory_space<vmem>>, vector<4x64xf32>,
    return
  }
}

</mosaic_0001>

<llo_original>
// kernel: cgms_han_forward.1
$region0: #{cgms_han_forward.1}
  #allocation0 [shape = 'u32[]', space=smem, size = 0x4, offset = 0x4, fixed_abs, tag = 'smem constant byte address 0x4 - core index']
  #allocation1 [shape = 'u32[144,128]{1,0:T(1,128)}', space=vmem, size = 0x12000, scoped, tag = 'internal scratch']
  %s0 = inlined_call_operand.vmem [shape: f32[8,32], index: 0, kind: input, shape index: {}]
  %s1 = inlined_call_operand.vmem [shape: f32[4,48], index: 1, kind: input, shape index: {}]
  %s2 = inlined_call_operand.vmem [shape: f32[32,192], index: 2, kind: input, shape index: {}]
  %s3 = inlined_call_operand.vmem [shape: f32[48,192], index: 3, kind: input, shape index: {}]
  %s4 = inlined_call_operand.vmem [shape: f32[64,8], index: 4, kind: input, shape index: {}]
  %s5 = inlined_call_operand.vmem [shape: f32[64,8], index: 5, kind: input, shape index: {}]
  %s6 = inlined_call_operand.vmem [shape: f32[64,8], index: 6, kind: input, shape index: {}]
  %s7 = inlined_call_operand.vmem [shape: f32[1,64], index: 7, kind: input, shape index: {}]
  %s8 = inlined_call_operand.vmem [shape: f32[1,64], index: 8, kind: input, shape index: {}]
  %s9 = inlined_call_operand.vmem [shape: f32[1,64], index: 9, kind: input, shape index: {}]
  %s10 = inlined_call_operand.vmem [shape: f32[1,64], index: 10, kind: input, shape index: {}]
  %s11 = inlined_call_operand.vmem [shape: f32[8,8], index: 11, kind: input, shape index: {}]
  %s12 = inlined_call_operand.vmem [shape: f32[4,8], index: 12, kind: input, shape index: {}]
  %s13 = inlined_call_operand.vmem [shape: f32[8,4], index: 13, kind: input, shape index: {}]
  %s14 = inlined_call_operand.vmem [shape: f32[64,256], index: 14, kind: input, shape index: {}]
  %s15 = inlined_call_operand.vmem [shape: f32[1,256], index: 15, kind: input, shape index: {}]
  %s16 = inlined_call_operand.vmem [shape: f32[256,1], index: 16, kind: input, shape index: {}]
  %s17 = inlined_call_operand.vmem [shape: f32[64,256], index: 17, kind: input, shape index: {}]
  %s18 = inlined_call_operand.vmem [shape: f32[1,256], index: 18, kind: input, shape index: {}]
  %s19 = inlined_call_operand.vmem [shape: f32[256,1], index: 19, kind: input, shape index: {}]
  %s20 = inlined_call_operand.hbm [shape: f32[8,64], index: 20, kind: output, shape index: {0}]
  %s21 = inlined_call_operand.hbm [shape: f32[4,64], index: 21, kind: output, shape index: {1}]
  %22 = xla_tuple %s20, %s21
  %s23 = sld [smem:[#allocation0]]
  $region98: #{cgms_han_forward.1} parent=0
    _
  %s25 = ssub.s32 1, %s23
  %s26 = scalar_select 0, %s25, %s23
  $region1: #{cgms_han_forward.1} parent=0
    #allocation2 [shape = 'u8[4096]{0}', space=vmem, size = 0x1000, scoped, tag = 'output window, operand 0, single buffered']
    #allocation3 [shape = 's32[1]{0}', space=sflag, size = 0x4, scoped, tag = 'scoped memory for cgms_han_forward.1']
    #allocation4 [shape = 'u8[2048]{0}', space=vmem, size = 0x800, scoped, tag = 'output window, operand 1, single buffered']
    #allocation5 [shape = 's32[1]{0}', space=sflag, size = 0x4, scoped, tag = 'scoped memory for cgms_han_forward.1']
    %27 = vsyncpa [#allocation3], 0
    %28 = vsyncpa [#allocation5], 0
    // Predicated region
    $region2: #{cgms_han_forward.1} parent=1 // pred_check
      _
    $region3: #{cgms_han_forward.1} parent=1 // pred_check_branch
      %30 = sbr.rel (0) target = $region5
    $region4: #{cgms_han_forward.1} parent=1 // pred_region
      _
    $region5: #{cgms_han_forward.1} parent=1 // pred_fallthru
      _
    // Predicated region
    $region6: #{cgms_han_forward.1} parent=1 // pred_check
      _
    $region7: #{cgms_han_forward.1} parent=1 // pred_check_branch
      %32 = sbr.rel (0) target = $region9
    $region8: #{cgms_han_forward.1} parent=1 // pred_region
      _
    $region9: #{cgms_han_forward.1} parent=1 // pred_fallthru
      _
    // Predicated region
    $region10: #{cgms_han_forward.1} parent=1 // pred_check
      _
    $region11: #{cgms_han_forward.1} parent=1 // pred_check_branch
      %34 = sbr.rel (0) target = $region13
    $region12: #{cgms_han_forward.1} parent=1 // pred_region
      _
    $region13: #{cgms_han_forward.1} parent=1 // pred_fallthru
      _
    // Predicated region
    $region14: #{cgms_han_forward.1} parent=1 // pred_check
      _
    $region15: #{cgms_han_forward.1} parent=1 // pred_check_branch
      %36 = sbr.rel (0) target = $region17
    $region16: #{cgms_han_forward.1} parent=1 // pred_region
      _
    $region17: #{cgms_han_forward.1} parent=1 // pred_fallthru
      _
    // Predicated region
    $region18: #{cgms_han_forward.1} parent=1 // pred_check
      _
    $region19: #{cgms_han_forward.1} parent=1 // pred_check_branch
      %38 = sbr.rel (0) target = $region21
    $region20: #{cgms_han_forward.1} parent=1 // pred_region
      _
    $region21: #{cgms_han_forward.1} parent=1 // pred_fallthru
      _
    // Predicated region
    $region22: #{cgms_han_forward.1} parent=1 // pred_check
      _
    $region23: #{cgms_han_forward.1} parent=1 // pred_check_branch
      %40 = sbr.rel (0) target = $region25
    $region24: #{cgms_han_forward.1} parent=1 // pred_region
      _
    $region25: #{cgms_han_forward.1} parent=1 // pred_fallthru
      _
    // Predicated region
    $region26: #{cgms_han_forward.1} parent=1 // pred_check
      _
    $region27: #{cgms_han_forward.1} parent=1 // pred_check_branch
      %42 = sbr.rel (0) target = $region29
    $region28: #{cgms_han_forward.1} parent=1 // pred_region
      _
    $region29: #{cgms_han_forward.1} parent=1 // pred_fallthru
      _
    // Predicated region
    $region30: #{cgms_han_forward.1} parent=1 // pred_check
      _
    $region31: #{cgms_han_forward.1} parent=1 // pred_check_branch
      %44 = sbr.rel (0) target = $region33
    $region32: #{cgms_han_forward.1} parent=1 // pred_region
      _
    $region33: #{cgms_han_forward.1} parent=1 // pred_fallthru
      _
    // Predicated region
    $region34: #{cgms_han_forward.1} parent=1 // pred_check
      _
    $region35: #{cgms_han_forward.1} parent=1 // pred_check_branch
      %46 = sbr.rel (0) target = $region37
    $region36: #{cgms_han_forward.1} parent=1 // pred_region
      _
    $region37: #{cgms_han_forward.1} parent=1 // pred_fallthru
      _
    // Predicated region
    $region38: #{cgms_han_forward.1} parent=1 // pred_check
      _
    $region39: #{cgms_han_forward.1} parent=1 // pred_check_branch
      %48 = sbr.rel (0) target = $region41
    $region40: #{cgms_han_forward.1} parent=1 // pred_region
      _
    $region41: #{cgms_han_forward.1} parent=1 // pred_fallthru
      _
    // Predicated region
    $region42: #{cgms_han_forward.1} parent=1 // pred_check
      _
    $region43: #{cgms_han_forward.1} parent=1 // pred_check_branch
      %50 = sbr.rel (0) target = $region45
    $region44: #{cgms_han_forward.1} parent=1 // pred_region
      _
    $region45: #{cgms_han_forward.1} parent=1 // pred_fallthru
      _
    // Predicated region
    $region46: #{cgms_han_forward.1} parent=1 // pred_check
      _
    $region47: #{cgms_han_forward.1} parent=1 // pred_check_branch
      %52 = sbr.rel (0) target = $region49
    $region48: #{cgms_han_forward.1} parent=1 // pred_region
      _
    $region49: #{cgms_han_forward.1} parent=1 // pred_fallthru
      _
    // Predicated region
    $region50: #{cgms_han_forward.1} parent=1 // pred_check
      _
    $region51: #{cgms_han_forward.1} parent=1 // pred_check_branch
      %54 = sbr.rel (0) target = $region53
    $region52: #{cgms_han_forward.1} parent=1 // pred_region
      _
    $region53: #{cgms_han_forward.1} parent=1 // pred_fallthru
      _
    // Predicated region
    $region54: #{cgms_han_forward.1} parent=1 // pred_check
      _
    $region55: #{cgms_han_forward.1} parent=1 // pred_check_branch
      %56 = sbr.rel (0) target = $region57
    $region56: #{cgms_han_forward.1} parent=1 // pred_region
      _
    $region57: #{cgms_han_forward.1} parent=1 // pred_fallthru
      _
    // Predicated region
    $region58: #{cgms_han_forward.1} parent=1 // pred_check
      _
    $region59: #{cgms_han_forward.1} parent=1 // pred_check_branch
      %58 = sbr.rel (0) target = $region61
    $region60: #{cgms_han_forward.1} parent=1 // pred_region
      _
    $region61: #{cgms_han_forward.1} parent=1 // pred_fallthru
      _
    // Predicated region
    $region62: #{cgms_han_forward.1} parent=1 // pred_check
      _
    $region63: #{cgms_han_forward.1} parent=1 // pred_check_branch
      %60 = sbr.rel (0) target = $region65
    $region64: #{cgms_han_forward.1} parent=1 // pred_region
      _
    $region65: #{cgms_han_forward.1} parent=1 // pred_fallthru
      _
    // Predicated region
    $region66: #{cgms_han_forward.1} parent=1 // pred_check
      _
    $region67: #{cgms_han_forward.1} parent=1 // pred_check_branch
      %62 = sbr.rel (0) target = $region69
    $region68: #{cgms_han_forward.1} parent=1 // pred_region
      _
    $region69: #{cgms_han_forward.1} parent=1 // pred_fallthru
      _
    // Predicated region
    $region70: #{cgms_han_forward.1} parent=1 // pred_check
      _
    $region71: #{cgms_han_forward.1} parent=1 // pred_check_branch
      %64 = sbr.rel (0) target = $region73
    $region72: #{cgms_han_forward.1} parent=1 // pred_region
      _
    $region73: #{cgms_han_forward.1} parent=1 // pred_fallthru
      _
    // Predicated region
    $region74: #{cgms_han_forward.1} parent=1 // pred_check
      _
    $region75: #{cgms_han_forward.1} parent=1 // pred_check_branch
      %66 = sbr.rel (0) target = $region77
    $region76: #{cgms_han_forward.1} parent=1 // pred_region
      _
    $region77: #{cgms_han_forward.1} parent=1 // pred_fallthru
      _
    // Predicated region
    $region78: #{cgms_han_forward.1} parent=1 // pred_check
      _
    $region79: #{cgms_han_forward.1} parent=1 // pred_check_branch
      %68 = sbr.rel (0) target = $region81
    $region80: #{cgms_han_forward.1} parent=1 // pred_region
      _
    $region81: #{cgms_han_forward.1} parent=1 // pred_fallthru
      _
    %v69 = vld [vmem:[%s0] sm:$0xff]
    %v70 = vld [vmem:[%s2] sm:$0xff]
    %v71 = vld [vmem:[%s2 + $0x8] sm:$0xff]
    %v72 = vld [vmem:[%s2 + $0x10] sm:$0xff]
    %v73 = vld [vmem:[%s2 + $0x18] sm:$0xff]
    %v74 = vld [vmem:[%s2 + $0x20] sm:$0xff]
    %v75 = vld [vmem:[%s2 + $0x28] sm:$0xff]
    %v76 = vld [vmem:[%s2 + $0x30] sm:$0xff]
    %v77 = vld [vmem:[%s2 + $0x38] sm:$0xff]
    %vm78 = vcmask 261120
    %v80 = vsel %vm78, %v69, 0
    %82 = vmatprep.subr.mxu0 %v71
    %83 = vmatpush1.msra.mxu0 %v70
    %84 = vmatprep.subr.mxu0 %v73
    %85 = vmatpush1.msra.mxu0 %v72
    %86 = vmatprep.subr.mxu0 %v75
    %87 = vmatpush1.msra.mxu0 %v74
    %88 = vmatprep.subr.mxu0 %v77
    %89 = vmatpush1.msra.mxu0 %v76
    %90 = vmatprep.subr.mxu0 0.0
    %91 = vmatpush1.msra.mxu0 0.0
    %92 = vmatprep.subr.mxu0 0.0
    %93 = vmatpush1.msra.mxu0 0.0
    %94 = vmatprep.subr.mxu0 0.0
    %95 = vmatpush1.msra.mxu0 0.0
    %96 = vmatprep.subr.mxu0 0.0
    %97 = vmatpush1.msra.mxu0 0.0
    %98 = vmatprep.subr.mxu0 0.0
    %99 = vmatpush1.msra.mxu0 0.0
    %100 = vmatprep.subr.mxu0 0.0
    %101 = vmatpush1.msra.mxu0 0.0
    %102 = vmatprep.subr.mxu0 0.0
    %103 = vmatpush1.msra.mxu0 0.0
    %104 = vmatprep.subr.mxu0 0.0
    %105 = vmatpush1.msra.mxu0 0.0
    %106 = vmatprep.subr.mxu0 0.0
    %107 = vmatpush1.msra.mxu0 0.0
    %108 = vmatprep.subr.mxu0 0.0
    %109 = vmatpush1.msra.mxu0 0.0
    %110 = vmatprep.subr.mxu0 0.0
    %111 = vmatpush1.msra.mxu0 0.0
    %112 = vmatprep.subr.mxu0 0.0
    %113 = vmatpush1.msra.mxu0 0.0
    %114 = vmatprep.subr.mxu0 0.0
    %115 = vmatpush1.msra.mxu0 0.0
    %116 = vmatprep.subr.mxu0 0.0
    %117 = vmatpush1.msra.mxu0 0.0
    %118 = vmatprep.subr.mxu0 0.0
    %119 = vmatpush1.msra.mxu0 0.0
    %120 = vmatprep.subr.mxu0 0.0
    %121 = vmatpush1.msra.mxu0 0.0
    %122 = vmatprep.subr.mxu0 0.0
    %123 = vmatpush1.msra.mxu0 0.0
    %124 = vmatprep.subr.mxu0 0.0
    %125 = vmatpush1.msra.mxu0 0.0
    %126 = vmatprep.subr.mxu0 0.0
    %127 = vmatpush1.msra.mxu0 0.0
    %128 = vmatprep.subr.mxu0 0.0
    %129 = vmatpush1.msra.mxu0 0.0
    %130 = vmatprep.subr.mxu0 0.0
    %131 = vmatpush1.msra.mxu0 0.0
    %132 = vmatprep.subr.mxu0 0.0
    %133 = vmatpush1.msra.mxu0 0.0
    %134 = vmatprep.subr.mxu0 0.0
    %135 = vmatpush1.msra.mxu0 0.0
    %136 = vmatprep.subr.mxu0 0.0
    %137 = vmatpush1.msra.mxu0 0.0
    %138 = vmatprep.subr.mxu0 0.0
    %139 = vmatpush1.msra.mxu0 0.0
    %140 = vmatprep.subr.mxu0 0.0
    %141 = vmatpush1.msra.mxu0 0.0
    %142 = vmatprep.subr.mxu0 0.0
    %143 = vmatpush1.msra.mxu0 0.0
    %144 = vmatprep.subr.mxu0 0.0
    %145 = vmatpush1.msra.mxu0 0.0
    %146 = vmatprep.mubr.f32.mxu0 0.0
    %147 = vmatmul.mubr.f32.gmra.mrb[0].mxu0 %v80
    %v148 = vpop.f32.mrb[0].mxu0
    %v149 = vadd.f32 0.0, %v148
    %v150 = vpop.f32.mrb[0].mxu0
    %v151 = vadd.f32 0.0, %v150
    %152 = vdwg.mxu0
    %v153 = vld [vmem:[%s1] sm:$0xf]
    %v154 = vld [vmem:[%s3] sm:$0xff]
    %v155 = vld [vmem:[%s3 + $0x8] sm:$0xff]
    %v156 = vld [vmem:[%s3 + $0x10] sm:$0xff]
    %v157 = vld [vmem:[%s3 + $0x18] sm:$0xff]
    %v158 = vld [vmem:[%s3 + $0x20] sm:$0xff]
    %v159 = vld [vmem:[%s3 + $0x28] sm:$0xff]
    %v160 = vld [vmem:[%s3 + $0x30] sm:$0xff]
    %v161 = vld [vmem:[%s3 + $0x38] sm:$0xff]
    %v162 = vld [vmem:[%s3 + $0x40] sm:$0xff]
    %v163 = vld [vmem:[%s3 + $0x48] sm:$0xff]
    %v164 = vld [vmem:[%s3 + $0x50] sm:$0xff]
    %v165 = vld [vmem:[%s3 + $0x58] sm:$0xff]
    %vm166 = vcmask 392192
    %v168 = vsel %vm166, %v153, 0
    %170 = vmatprep.subr.mxu0 %v155
    %171 = vmatpush1.msra.mxu0 %v154
    %172 = vmatprep.subr.mxu0 %v157
    %173 = vmatpush1.msra.mxu0 %v156
    %174 = vmatprep.subr.mxu0 %v159
    %175 = vmatpush1.msra.mxu0 %v158
    %176 = vmatprep.subr.mxu0 %v161
    %177 = vmatpush1.msra.mxu0 %v160
    %178 = vmatprep.subr.mxu0 %v163
    %179 = vmatpush1.msra.mxu0 %v162
    %180 = vmatprep.subr.mxu0 %v165
    %181 = vmatpush1.msra.mxu0 %v164
    %182 = vmatprep.subr.mxu0 0.0
    %183 = vmatpush1.msra.mxu0 0.0
    %184 = vmatprep.subr.mxu0 0.0
    %185 = vmatpush1.msra.mxu0 0.0
    %186 = vmatprep.subr.mxu0 0.0
    %187 = vmatpush1.msra.mxu0 0.0
    %188 = vmatprep.subr.mxu0 0.0
    %189 = vmatpush1.msra.mxu0 0.0
    %190 = vmatprep.subr.mxu0 0.0
    %191 = vmatpush1.msra.mxu0 0.0
    %192 = vmatprep.subr.mxu0 0.0
    %193 = vmatpush1.msra.mxu0 0.0
    %194 = vmatprep.subr.mxu0 0.0
    %195 = vmatpush1.msra.mxu0 0.0
    %196 = vmatprep.subr.mxu0 0.0
    %197 = vmatpush1.msra.mxu0 0.0
    %198 = vmatprep.subr.mxu0 0.0
    %199 = vmatpush1.msra.mxu0 0.0
    %200 = vmatprep.subr.mxu0 0.0
    %201 = vmatpush1.msra.mxu0 0.0
    %202 = vmatprep.subr.mxu0 0.0
    %203 = vmatpush1.msra.mxu0 0.0
    %204 = vmatprep.subr.mxu0 0.0
    %205 = vmatpush1.msra.mxu0 0.0
    %206 = vmatprep.subr.mxu0 0.0
    %207 = vmatpush1.msra.mxu0 0.0
    %208 = vmatprep.subr.mxu0 0.0
    %209 = vmatpush1.msra.mxu0 0.0
    %210 = vmatprep.subr.mxu0 0.0
    %211 = vmatpush1.msra.mxu0 0.0
    %212 = vmatprep.subr.mxu0 0.0
    %213 = vmatpush1.msra.mxu0 0.0
    %214 = vmatprep.subr.mxu0 0.0
    %215 = vmatpush1.msra.mxu0 0.0
    %216 = vmatprep.subr.mxu0 0.0
    %217 = vmatpush1.msra.mxu0 0.0
    %218 = vmatprep.subr.mxu0 0.0
    %219 = vmatpush1.msra.mxu0 0.0
    %220 = vmatprep.subr.mxu0 0.0
    %221 = vmatpush1.msra.mxu0 0.0
    %222 = vmatprep.subr.mxu0 0.0
    %223 = vmatpush1.msra.mxu0 0.0
    %224 = vmatprep.subr.mxu0 0.0
    %225 = vmatpush1.msra.mxu0 0.0
    %226 = vmatprep.subr.mxu0 0.0
    %227 = vmatpush1.msra.mxu0 0.0
    %228 = vmatprep.subr.mxu0 0.0
    %229 = vmatpush1.msra.mxu0 0.0
    %230 = vmatprep.subr.mxu0 0.0
    %231 = vmatpush1.msra.mxu0 0.0
    %232 = vmatprep.subr.mxu0 0.0
    %233 = vmatpush1.msra.mxu0 0.0
    %234 = vmatprep.mubr.f32.mxu0 0.0
    %235 = vmatmul.mubr.f32.gmra.mrb[0].mxu0 %v168
    %v236 = vpop.f32.mrb[0].mxu0
    %v237 = vadd.f32 0.0, %v236
    %v238 = vpop.f32.mrb[0].mxu0
    %v239 = vadd.f32 0.0, %v238
    %240 = vdwg.mxu0
    %v241 = vld [vmem:[%s4] sm:$0xff]
    %v242 = vld [vmem:[%s4 + $0x8] sm:$0xff]
    %v243 = vld [vmem:[%s4 + $0x10] sm:$0xff]
    %v244 = vld [vmem:[%s4 + $0x18] sm:$0xff]
    %v245 = vld [vmem:[%s4 + $0x20] sm:$0xff]
    %v246 = vld [vmem:[%s4 + $0x28] sm:$0xff]
    %v247 = vld [vmem:[%s4 + $0x30] sm:$0xff]
    %v248 = vld [vmem:[%s4 + $0x38] sm:$0xff]
    %v249 = vld [vmem:[%s11] sm:$0xff]
    %v250 = vld [vmem:[%s7] sm:$0x1]
    %vm251 = vcmask 523264
    %v253 = vsel %vm251, %v149, 0
    %255 = vmatprep.subr.mxu0 0.0
    %256 = vmatpush1.msra.mxu0 %v241
    %257 = vmatprep.subr.mxu0 0.0
    %258 = vmatpush1.msra.mxu0 %v242
    %259 = vmatprep.subr.mxu0 0.0
    %260 = vmatpush1.msra.mxu0 %v243
    %261 = vmatprep.subr.mxu0 0.0
    %262 = vmatpush1.msra.mxu0 %v244
    %263 = vmatprep.subr.mxu0 0.0
    %264 = vmatpush1.msra.mxu0 %v245
    %265 = vmatprep.subr.mxu0 0.0
    %266 = vmatpush1.msra.mxu0 %v246
    %267 = vmatprep.subr.mxu0 0.0
    %268 = vmatpush1.msra.mxu0 %v247
    %269 = vmatprep.subr.mxu0 0.0
    %270 = vmatpush1.msra.mxu0 %v248
    %271 = vmatprep.subr.mxu0 0.0
    %272 = vmatpush1.msra.mxu0 0.0
    %273 = vmatprep.subr.mxu0 0.0
    %274 = vmatpush1.msra.mxu0 0.0
    %275 = vmatprep.subr.mxu0 0.0
    %276 = vmatpush1.msra.mxu0 0.0
    %277 = vmatprep.subr.mxu0 0.0
    %278 = vmatpush1.msra.mxu0 0.0
    %279 = vmatprep.subr.mxu0 0.0
    %280 = vmatpush1.msra.mxu0 0.0
    %281 = vmatprep.subr.mxu0 0.0
    %282 = vmatpush1.msra.mxu0 0.0
    %283 = vmatprep.subr.mxu0 0.0
    %284 = vmatpush1.msra.mxu0 0.0
    %285 = vmatprep.subr.mxu0 0.0
    %286 = vmatpush1.msra.mxu0 0.0
    %287 = vmatprep.subr.mxu0 0.0
    %288 = vmatpush1.msra.mxu0 0.0
    %289 = vmatprep.subr.mxu0 0.0
    %290 = vmatpush1.msra.mxu0 0.0
    %291 = vmatprep.subr.mxu0 0.0
    %292 = vmatpush1.msra.mxu0 0.0
    %293 = vmatprep.subr.mxu0 0.0
    %294 = vmatpush1.msra.mxu0 0.0
    %295 = vmatprep.subr.mxu0 0.0
    %296 = vmatpush1.msra.mxu0 0.0
    %297 = vmatprep.subr.mxu0 0.0
    %298 = vmatpush1.msra.mxu0 0.0
    %299 = vmatprep.subr.mxu0 0.0
    %300 = vmatpush1.msra.mxu0 0.0
    %301 = vmatprep.subr.mxu0 0.0
    %302 = vmatpush1.msra.mxu0 0.0
    %303 = vmatprep.subr.mxu0 0.0
    %304 = vmatpush1.msra.mxu0 0.0
    %305 = vmatprep.subr.mxu0 0.0
    %306 = vmatpush1.msra.mxu0 0.0
    %307 = vmatprep.subr.mxu0 0.0
    %308 = vmatpush1.msra.mxu0 0.0
    %309 = vmatprep.subr.mxu0 0.0
    %310 = vmatpush1.msra.mxu0 0.0
    %311 = vmatprep.subr.mxu0 0.0
    %312 = vmatpush1.msra.mxu0 0.0
    %313 = vmatprep.subr.mxu0 0.0
    %314 = vmatpush1.msra.mxu0 0.0
    %315 = vmatprep.subr.mxu0 0.0
    %316 = vmatpush1.msra.mxu0 0.0
    %317 = vmatprep.subr.mxu0 0.0
    %318 = vmatpush1.msra.mxu0 0.0
    %319 = vmatprep.mubr.f32.mxu0 0.0
    %320 = vmatmul.mubr.f32.gmra.mrb[0].mxu0 %v253
    %v321 = vpop.f32.mrb[0].mxu0
    %v322 = vadd.f32 0.0, %v321
    %v323 = vpop.f32.mrb[0].mxu0
    %324 = vdwg.mxu0
    %325 = vxpose.xlu0.b32.start [1/16] %v322, 128
    %326 = vxpose.xlu0.b32.cont [2/16] 0.0, 128
    %327 = vxpose.xlu0.b32.cont [3/16] 0.0, 128
    %328 = vxpose.xlu0.b32.cont [4/16] 0.0, 128
    %329 = vxpose.xlu0.b32.cont [5/16] 0.0, 128
    %330 = vxpose.xlu0.b32.cont [6/16] 0.0, 128
    %331 = vxpose.xlu0.b32.cont [7/16] 0.0, 128
    %332 = vxpose.xlu0.b32.cont [8/16] 0.0, 128
    %333 = vxpose.xlu0.b32.cont [9/16] 0.0, 128
    %334 = vxpose.xlu0.b32.cont [10/16] 0.0, 128
    %335 = vxpose.xlu0.b32.cont [11/16] 0.0, 128
    %336 = vxpose.xlu0.b32.cont [12/16] 0.0, 128
    %337 = vxpose.xlu0.b32.cont [13/16] 0.0, 128
    %338 = vxpose.xlu0.b32.cont [14/16] 0.0, 128
    %339 = vxpose.xlu0.b32.cont [15/16] 0.0, 128
    %340 = vxpose.xlu0.b32.end [16/16] 0.0, 128
    %v341 = vpop.trf.xlu0
    %v342 = vpop.trf.xlu0
    %v343 = vpop.trf.xlu0
    %v344 = vpop.trf.xlu0
    %v345 = vpop.trf.xlu0
    %v346 = vpop.trf.xlu0
    %v347 = vpop.trf.xlu0
    %v348 = vpop.trf.xlu0
    %v349 = vpop.trf.xlu0
    %v350 = vpop.trf.xlu0
    %v351 = vpop.trf.xlu0
    %v352 = vpop.trf.xlu0
    %v353 = vpop.trf.xlu0
    %v354 = vpop.trf.xlu0
    %v355 = vpop.trf.xlu0
    %v356 = vpop.trf.xlu0
    %358 = vset.pattern.permute.xlu0 4
    %359 = vperm.xlu0 %358, %v322
    %v360 = vpop.permute.xlu0 %359
    %v362 = vlaneseq
    %v363 = vshrl.u32 %v362, 7
    %v364 = vsub.s32 0, %v363
    %v365 = vrot.slane %v341, %v364
    %v366 = vadd.f32 %v360, %v365
    %vm367 = vcmp.gt.f32.partialorder %v366, 0.0
    %v368 = vmul.f32 %v366, 0.2
    %v369 = vsel %vm367, %v366, %v368
    %v370 = vadd.f32 %v369, %v249
    %vm371 = vcmask 64512
    %v372 = vsel %vm371, %v370, -inf
    %373 = vmax.xlane.f32.xlu0 %v372
    %v374 = vpop.xlane.xlu0 %373
    %v375 = vsub.f32 %v370, %v374
    %v376 = vmul.f32 %v375, 1.442695
    %v377 = vpow.pop %v376
    %v378 = vsel %vm371, %v377, 0.0
    %379 = vadd.xlane.f32.xlu0 %v378
    %v380 = vpop.xlane.xlu0 %379
    %v381 = vrcp.pop %v380
    %v382 = vmul.f32 %v377, %v381
    %v384 = vsel %vm371, %v382, 0
    %386 = vmatprep.subr.mxu0 0.0
    %387 = vmatpush1.msra.mxu0 %v149
    %388 = vmatprep.subr.mxu0 0.0
    %389 = vmatpush1.msra.mxu0 0.0
    %390 = vmatprep.subr.mxu0 0.0
    %391 = vmatpush1.msra.mxu0 0.0
    %392 = vmatprep.subr.mxu0 0.0
    %393 = vmatpush1.msra.mxu0 0.0
    %394 = vmatprep.subr.mxu0 0.0
    %395 = vmatpush1.msra.mxu0 0.0
    %396 = vmatprep.subr.mxu0 0.0
    %397 = vmatpush1.msra.mxu0 0.0
    %398 = vmatprep.subr.mxu0 0.0
    %399 = vmatpush1.msra.mxu0 0.0
    %400 = vmatprep.subr.mxu0 0.0
    %401 = vmatpush1.msra.mxu0 0.0
    %402 = vmatprep.subr.mxu0 0.0
    %403 = vmatpush1.msra.mxu0 0.0
    %404 = vmatprep.subr.mxu0 0.0
    %405 = vmatpush1.msra.mxu0 0.0
    %406 = vmatprep.subr.mxu0 0.0
    %407 = vmatpush1.msra.mxu0 0.0
    %408 = vmatprep.subr.mxu0 0.0
    %409 = vmatpush1.msra.mxu0 0.0
    %410 = vmatprep.subr.mxu0 0.0
    %411 = vmatpush1.msra.mxu0 0.0
    %412 = vmatprep.subr.mxu0 0.0
    %413 = vmatpush1.msra.mxu0 0.0
    %414 = vmatprep.subr.mxu0 0.0
    %415 = vmatpush1.msra.mxu0 0.0
    %416 = vmatprep.subr.mxu0 0.0
    %417 = vmatpush1.msra.mxu0 0.0
    %418 = vmatprep.subr.mxu0 0.0
    %419 = vmatpush1.msra.mxu0 0.0
    %420 = vmatprep.subr.mxu0 0.0
    %421 = vmatpush1.msra.mxu0 0.0
    %422 = vmatprep.subr.mxu0 0.0
    %423 = vmatpush1.msra.mxu0 0.0
    %424 = vmatprep.subr.mxu0 0.0
    %425 = vmatpush1.msra.mxu0 0.0
    %426 = vmatprep.subr.mxu0 0.0
    %427 = vmatpush1.msra.mxu0 0.0
    %428 = vmatprep.subr.mxu0 0.0
    %429 = vmatpush1.msra.mxu0 0.0
    %430 = vmatprep.subr.mxu0 0.0
    %431 = vmatpush1.msra.mxu0 0.0
    %432 = vmatprep.subr.mxu0 0.0
    %433 = vmatpush1.msra.mxu0 0.0
    %434 = vmatprep.subr.mxu0 0.0
    %435 = vmatpush1.msra.mxu0 0.0
    %436 = vmatprep.subr.mxu0 0.0
    %437 = vmatpush1.msra.mxu0 0.0
    %438 = vmatprep.subr.mxu0 0.0
    %439 = vmatpush1.msra.mxu0 0.0
    %440 = vmatprep.subr.mxu0 0.0
    %441 = vmatpush1.msra.mxu0 0.0
    %442 = vmatprep.subr.mxu0 0.0
    %443 = vmatpush1.msra.mxu0 0.0
    %444 = vmatprep.subr.mxu0 0.0
    %445 = vmatpush1.msra.mxu0 0.0
    %446 = vmatprep.subr.mxu0 0.0
    %447 = vmatpush1.msra.mxu0 0.0
    %448 = vmatprep.subr.mxu0 0.0
    %449 = vmatpush1.msra.mxu0 0.0
    %450 = vmatprep.mubr.f32.mxu0 0.0
    %451 = vmatmul.mubr.f32.gmra.mrb[0].mxu0 %v384
    %v452 = vpop.f32.mrb[0].mxu0
    %v453 = vadd.f32 0.0, %v452
    %v454 = vpop.f32.mrb[0].mxu0
    %455 = vdwg.mxu0
    %456 = vset.pattern.permute.xlu0 5
    %457 = vperm.xlu0 %456, %v322
    %v458 = vpop.permute.xlu0 %457
    %v460 = vlaneseq
    %v461 = vshrl.u32 %v460, 7
    %v462 = vsub.s32 1, %v461
    %v463 = vrot.slane %v341, %v462
    %v464 = vadd.f32 %v458, %v463
    %vm465 = vcmp.gt.f32.partialorder %v464, 0.0
    %v466 = vmul.f32 %v464, 0.2
    %v467 = vsel %vm465, %v464, %v466
    %v468 = vadd.f32 %v467, %v249
    %v469 = vsel %vm371, %v468, -inf
    %470 = vmax.xlane.f32.xlu0 %v469
    %v471 = vpop.xlane.xlu0 %470
    %v472 = vsub.f32 %v468, %v471
    %v473 = vmul.f32 %v472, 1.442695
    %v474 = vpow.pop %v473
    %v475 = vsel %vm371, %v474, 0.0
    %476 = vadd.xlane.f32.xlu0 %v475
    %v477 = vpop.xlane.xlu0 %476
    %v478 = vrcp.pop %v477
    %v479 = vmul.f32 %v474, %v478
    %480 = vrot.lane.b32.xlu0 %v149, 112
    %v481 = vpop.permute.xlu0 %480
    %v484 = vsel %vm371, %v479, 0
    %486 = vmatprep.subr.mxu0 0.0
    %487 = vmatpush1.msra.mxu0 %v481
    %488 = vmatprep.subr.mxu0 0.0
    %489 = vmatpush1.msra.mxu0 0.0
    %490 = vmatprep.subr.mxu0 0.0
    %491 = vmatpush1.msra.mxu0 0.0
    %492 = vmatprep.subr.mxu0 0.0
    %493 = vmatpush1.msra.mxu0 0.0
    %494 = vmatprep.subr.mxu0 0.0
    %495 = vmatpush1.msra.mxu0 0.0
    %496 = vmatprep.subr.mxu0 0.0
    %497 = vmatpush1.msra.mxu0 0.0
    %498 = vmatprep.subr.mxu0 0.0
    %499 = vmatpush1.msra.mxu0 0.0
    %500 = vmatprep.subr.mxu0 0.0
    %501 = vmatpush1.msra.mxu0 0.0
    %502 = vmatprep.subr.mxu0 0.0
    %503 = vmatpush1.msra.mxu0 0.0
    %504 = vmatprep.subr.mxu0 0.0
    %505 = vmatpush1.msra.mxu0 0.0
    %506 = vmatprep.subr.mxu0 0.0
    %507 = vmatpush1.msra.mxu0 0.0
    %508 = vmatprep.subr.mxu0 0.0
    %509 = vmatpush1.msra.mxu0 0.0
    %510 = vmatprep.subr.mxu0 0.0
    %511 = vmatpush1.msra.mxu0 0.0
    %512 = vmatprep.subr.mxu0 0.0
    %513 = vmatpush1.msra.mxu0 0.0
    %514 = vmatprep.subr.mxu0 0.0
    %515 = vmatpush1.msra.mxu0 0.0
    %516 = vmatprep.subr.mxu0 0.0
    %517 = vmatpush1.msra.mxu0 0.0
    %518 = vmatprep.subr.mxu0 0.0
    %519 = vmatpush1.msra.mxu0 0.0
    %520 = vmatprep.subr.mxu0 0.0
    %521 = vmatpush1.msra.mxu0 0.0
    %522 = vmatprep.subr.mxu0 0.0
    %523 = vmatpush1.msra.mxu0 0.0
    %524 = vmatprep.subr.mxu0 0.0
    %525 = vmatpush1.msra.mxu0 0.0
    %526 = vmatprep.subr.mxu0 0.0
    %527 = vmatpush1.msra.mxu0 0.0
    %528 = vmatprep.subr.mxu0 0.0
    %529 = vmatpush1.msra.mxu0 0.0
    %530 = vmatprep.subr.mxu0 0.0
    %531 = vmatpush1.msra.mxu0 0.0
    %532 = vmatprep.subr.mxu0 0.0
    %533 = vmatpush1.msra.mxu0 0.0
    %534 = vmatprep.subr.mxu0 0.0
    %535 = vmatpush1.msra.mxu0 0.0
    %536 = vmatprep.subr.mxu0 0.0
    %537 = vmatpush1.msra.mxu0 0.0
    %538 = vmatprep.subr.mxu0 0.0
    %539 = vmatpush1.msra.mxu0 0.0
    %540 = vmatprep.subr.mxu0 0.0
    %541 = vmatpush1.msra.mxu0 0.0
    %542 = vmatprep.subr.mxu0 0.0
    %543 = vmatpush1.msra.mxu0 0.0
    %544 = vmatprep.subr.mxu0 0.0
    %545 = vmatpush1.msra.mxu0 0.0
    %546 = vmatprep.subr.mxu0 0.0
    %547 = vmatpush1.msra.mxu0 0.0
    %548 = vmatprep.subr.mxu0 0.0
    %549 = vmatpush1.msra.mxu0 0.0
    %550 = vmatprep.mubr.f32.mxu0 0.0
    %551 = vmatmul.mubr.f32.gmra.mrb[0].mxu0 %v484
    %v552 = vpop.f32.mrb[0].mxu0
    %v553 = vadd.f32 0.0, %v552
    %v554 = vpop.f32.mrb[0].mxu0
    %555 = vdwg.mxu0
    %556 = vset.pattern.permute.xlu0 6
    %557 = vperm.xlu0 %556, %v322
    %v558 = vpop.permute.xlu0 %557
    %v560 = vlaneseq
    %v561 = vshrl.u32 %v560, 7
    %v562 = vsub.s32 2, %v561
    %v563 = vrot.slane %v341, %v562
    %v564 = vadd.f32 %v558, %v563
    %vm565 = vcmp.gt.f32.partialorder %v564, 0.0
    %v566 = vmul.f32 %v564, 0.2
    %v567 = vsel %vm565, %v564, %v566
    %v568 = vadd.f32 %v567, %v249
    %v569 = vsel %vm371, %v568, -inf
    %570 = vmax.xlane.f32.xlu0 %v569
    %v571 = vpop.xlane.xlu0 %570
    %v572 = vsub.f32 %v568, %v571
    %v573 = vmul.f32 %v572, 1.442695
    %v574 = vpow.pop %v573
    %v575 = vsel %vm371, %v574, 0.0
    %576 = vadd.xlane.f32.xlu0 %v575
    %v577 = vpop.xlane.xlu0 %576
    %v578 = vrcp.pop %v577
    %v579 = vmul.f32 %v574, %v578
    %580 = vrot.lane.b32.xlu0 %v149, 96
    %v581 = vpop.permute.xlu0 %580
    %v584 = vsel %vm371, %v579, 0
    %586 = vmatprep.subr.mxu0 0.0
    %587 = vmatpush1.msra.mxu0 %v581
    %588 = vmatprep.subr.mxu0 0.0
    %589 = vmatpush1.msra.mxu0 0.0
    %590 = vmatprep.subr.mxu0 0.0
    %591 = vmatpush1.msra.mxu0 0.0
    %592 = vmatprep.subr.mxu0 0.0
    %593 = vmatpush1.msra.mxu0 0.0
    %594 = vmatprep.subr.mxu0 0.0
    %595 = vmatpush1.msra.mxu0 0.0
    %596 = vmatprep.subr.mxu0 0.0
    %597 = vmatpush1.msra.mxu0 0.0
    %598 = vmatprep.subr.mxu0 0.0
    %599 = vmatpush1.msra.mxu0 0.0
    %600 = vmatprep.subr.mxu0 0.0
    %601 = vmatpush1.msra.mxu0 0.0
    %602 = vmatprep.subr.mxu0 0.0
    %603 = vmatpush1.msra.mxu0 0.0
    %604 = vmatprep.subr.mxu0 0.0
    %605 = vmatpush1.msra.mxu0 0.0
    %606 = vmatprep.subr.mxu0 0.0
    %607 = vmatpush1.msra.mxu0 0.0
    %608 = vmatprep.subr.mxu0 0.0
    %609 = vmatpush1.msra.mxu0 0.0
    %610 = vmatprep.subr.mxu0 0.0
    %611 = vmatpush1.msra.mxu0 0.0
    %612 = vmatprep.subr.mxu0 0.0
    %613 = vmatpush1.msra.mxu0 0.0
    %614 = vmatprep.subr.mxu0 0.0
    %615 = vmatpush1.msra.mxu0 0.0
    %616 = vmatprep.subr.mxu0 0.0
    %617 = vmatpush1.msra.mxu0 0.0
    %618 = vmatprep.subr.mxu0 0.0
    %619 = vmatpush1.msra.mxu0 0.0
    %620 = vmatprep.subr.mxu0 0.0
    %621 = vmatpush1.msra.mxu0 0.0
    %622 = vmatprep.subr.mxu0 0.0
    %623 = vmatpush1.msra.mxu0 0.0
    %624 = vmatprep.subr.mxu0 0.0
    %625 = vmatpush1.msra.mxu0 0.0
    %626 = vmatprep.subr.mxu0 0.0
    %627 = vmatpush1.msra.mxu0 0.0
    %628 = vmatprep.subr.mxu0 0.0
    %629 = vmatpush1.msra.mxu0 0.0
    %630 = vmatprep.subr.mxu0 0.0
    %631 = vmatpush1.msra.mxu0 0.0
    %632 = vmatprep.subr.mxu0 0.0
    %633 = vmatpush1.msra.mxu0 0.0
    %634 = vmatprep.subr.mxu0 0.0
    %635 = vmatpush1.msra.mxu0 0.0
    %636 = vmatprep.subr.mxu0 0.0
    %637 = vmatpush1.msra.mxu0 0.0
    %638 = vmatprep.subr.mxu0 0.0
    %639 = vmatpush1.msra.mxu0 0.0
    %640 = vmatprep.subr.mxu0 0.0
    %641 = vmatpush1.msra.mxu0 0.0
    %642 = vmatprep.subr.mxu0 0.0
    %643 = vmatpush1.msra.mxu0 0.0
    %644 = vmatprep.subr.mxu0 0.0
    %645 = vmatpush1.msra.mxu0 0.0
    %646 = vmatprep.subr.mxu0 0.0
    %647 = vmatpush1.msra.mxu0 0.0
    %648 = vmatprep.subr.mxu0 0.0
    %649 = vmatpush1.msra.mxu0 0.0
    %650 = vmatprep.mubr.f32.mxu0 0.0
    %651 = vmatmul.mubr.f32.gmra.mrb[0].mxu0 %v584
    %v652 = vpop.f32.mrb[0].mxu0
    %v653 = vadd.f32 0.0, %v652
    %v654 = vpop.f32.mrb[0].mxu0
    %655 = vdwg.mxu0
    %656 = vset.pattern.permute.xlu0 7
    %657 = vperm.xlu0 %656, %v322
    %v658 = vpop.permute.xlu0 %657
    %v660 = vlaneseq
    %v661 = vshrl.u32 %v660, 7
    %v662 = vsub.s32 3, %v661
    %v663 = vrot.slane %v341, %v662
    %v664 = vadd.f32 %v658, %v663
    %vm665 = vcmp.gt.f32.partialorder %v664, 0.0
    %v666 = vmul.f32 %v664, 0.2
    %v667 = vsel %vm665, %v664, %v666
    %v668 = vadd.f32 %v667, %v249
    %v669 = vsel %vm371, %v668, -inf
    %670 = vmax.xlane.f32.xlu0 %v669
    %v671 = vpop.xlane.xlu0 %670
    %v672 = vsub.f32 %v668, %v671
    %v673 = vmul.f32 %v672, 1.442695
    %v674 = vpow.pop %v673
    %v675 = vsel %vm371, %v674, 0.0
    %676 = vadd.xlane.f32.xlu0 %v675
    %v677 = vpop.xlane.xlu0 %676
    %v678 = vrcp.pop %v677
    %v679 = vmul.f32 %v674, %v678
    %680 = vrot.lane.b32.xlu0 %v149, 80
    %v681 = vpop.permute.xlu0 %680
    %v684 = vsel %vm371, %v679, 0
    %686 = vmatprep.subr.mxu0 0.0
    %687 = vmatpush1.msra.mxu0 %v681
    %688 = vmatprep.subr.mxu0 0.0
    %689 = vmatpush1.msra.mxu0 0.0
    %690 = vmatprep.subr.mxu0 0.0
    %691 = vmatpush1.msra.mxu0 0.0
    %692 = vmatprep.subr.mxu0 0.0
    %693 = vmatpush1.msra.mxu0 0.0
    %694 = vmatprep.subr.mxu0 0.0
    %695 = vmatpush1.msra.mxu0 0.0
    %696 = vmatprep.subr.mxu0 0.0
    %697 = vmatpush1.msra.mxu0 0.0
    %698 = vmatprep.subr.mxu0 0.0
    %699 = vmatpush1.msra.mxu0 0.0
    %700 = vmatprep.subr.mxu0 0.0
    %701 = vmatpush1.msra.mxu0 0.0
    %702 = vmatprep.subr.mxu0 0.0
    %703 = vmatpush1.msra.mxu0 0.0
    %704 = vmatprep.subr.mxu0 0.0
    %705 = vmatpush1.msra.mxu0 0.0
    %706 = vmatprep.subr.mxu0 0.0
    %707 = vmatpush1.msra.mxu0 0.0
    %708 = vmatprep.subr.mxu0 0.0
    %709 = vmatpush1.msra.mxu0 0.0
    %710 = vmatprep.subr.mxu0 0.0
    %711 = vmatpush1.msra.mxu0 0.0
    %712 = vmatprep.subr.mxu0 0.0
    %713 = vmatpush1.msra.mxu0 0.0
    %714 = vmatprep.subr.mxu0 0.0
    %715 = vmatpush1.msra.mxu0 0.0
    %716 = vmatprep.subr.mxu0 0.0
    %717 = vmatpush1.msra.mxu0 0.0
    %718 = vmatprep.subr.mxu0 0.0
    %719 = vmatpush1.msra.mxu0 0.0
    %720 = vmatprep.subr.mxu0 0.0
    %721 = vmatpush1.msra.mxu0 0.0
    %722 = vmatprep.subr.mxu0 0.0
    %723 = vmatpush1.msra.mxu0 0.0
    %724 = vmatprep.subr.mxu0 0.0
    %725 = vmatpush1.msra.mxu0 0.0
    %726 = vmatprep.subr.mxu0 0.0
    %727 = vmatpush1.msra.mxu0 0.0
    %728 = vmatprep.subr.mxu0 0.0
    %729 = vmatpush1.msra.mxu0 0.0
    %730 = vmatprep.subr.mxu0 0.0
    %731 = vmatpush1.msra.mxu0 0.0
    %732 = vmatprep.subr.mxu0 0.0
    %733 = vmatpush1.msra.mxu0 0.0
    %734 = vmatprep.subr.mxu0 0.0
    %735 = vmatpush1.msra.mxu0 0.0
    %736 = vmatprep.subr.mxu0 0.0
    %737 = vmatpush1.msra.mxu0 0.0
    %738 = vmatprep.subr.mxu0 0.0
    %739 = vmatpush1.msra.mxu0 0.0
    %740 = vmatprep.subr.mxu0 0.0
    %741 = vmatpush1.msra.mxu0 0.0
    %742 = vmatprep.subr.mxu0 0.0
    %743 = vmatpush1.msra.mxu0 0.0
    %744 = vmatprep.subr.mxu0 0.0
    %745 = vmatpush1.msra.mxu0 0.0
    %746 = vmatprep.subr.mxu0 0.0
    %747 = vmatpush1.msra.mxu0 0.0
    %748 = vmatprep.subr.mxu0 0.0
    %749 = vmatpush1.msra.mxu0 0.0
    %750 = vmatprep.mubr.f32.mxu0 0.0
    %751 = vmatmul.mubr.f32.gmra.mrb[0].mxu0 %v684
    %v752 = vpop.f32.mrb[0].mxu0
    %v753 = vadd.f32 0.0, %v752
    %v754 = vpop.f32.mrb[0].mxu0
    %755 = vdwg.mxu0
    %757 = vrot.lane.b32.xlu0 %v553, 16
    %v758 = vpop.permute.xlu0 %757
    %761 = vrot.lane.b32.xlu0 %v653, 32
    %v762 = vpop.permute.xlu0 %761
    %765 = vrot.lane.b32.xlu0 %v753, 48
    %v766 = vpop.permute.xlu0 %765
    %vm768 = vcmask 130048
    %v769 = vsel %vm768, %v453, %v758
    %v770 = vsel %vm78, %v769, %v762
    %v771 = vsel %vm166, %v770, %v766
    %v773 = vlaneseq
    %v774 = vshrl.u32 %v773, 7
    %v775 = vsub.s32 0, %v774
    %v776 = vrot.slane %v250, %v775
    %v778 = vadd.f32 %v771, %v776
    %vm779 = vcmp.gt.f32.partialorder %v778, 0.0
    %v780 = vmul.f32 %v778, 0.01
    %v781 = vsel %vm779, %v778, %v780
    %v782 = vld [vmem:[%s5] sm:$0xff]
    %v783 = vld [vmem:[%s5 + $0x8] sm:$0xff]
    %v784 = vld [vmem:[%s5 + $0x10] sm:$0xff]
    %v785 = vld [vmem:[%s5 + $0x18] sm:$0xff]
    %v786 = vld [vmem:[%s5 + $0x20] sm:$0xff]
    %v787 = vld [vmem:[%s5 + $0x28] sm:$0xff]
    %v788 = vld [vmem:[%s5 + $0x30] sm:$0xff]
    %v789 = vld [vmem:[%s5 + $0x38] sm:$0xff]
    %v790 = vld [vmem:[%s12] sm:$0xf]
    %v791 = vld [vmem:[%s8] sm:$0x1]
    %793 = vrot.lane.b32.xlu0 %v237, 64
    %v794 = vpop.permute.xlu0 %793
    %795 = vrot.lane.b32.xlu0 %v149, 64
    %v796 = vpop.permute.xlu0 %795
    %797 = vrot.lane.b32.xlu0 %v794, 64
    %v798 = vpop.permute.xlu0 %797
    %v799 = vsel %vm251, %v796, 0
    %v801 = vsel %vm251, %v798, 0
    %803 = vmatprep.subr.mxu0 0.0
    %804 = vmatpush1.msra.mxu0 %v782
    %805 = vmatprep.subr.mxu0 0.0
    %806 = vmatpush1.msra.mxu0 %v783
    %807 = vmatprep.subr.mxu0 0.0
    %808 = vmatpush1.msra.mxu0 %v784
    %809 = vmatprep.subr.mxu0 0.0
    %810 = vmatpush1.msra.mxu0 %v785
    %811 = vmatprep.subr.mxu0 0.0
    %812 = vmatpush1.msra.mxu0 %v786
    %813 = vmatprep.subr.mxu0 0.0
    %814 = vmatpush1.msra.mxu0 %v787
    %815 = vmatprep.subr.mxu0 0.0
    %816 = vmatpush1.msra.mxu0 %v788
    %817 = vmatprep.subr.mxu0 0.0
    %818 = vmatpush1.msra.mxu0 %v789
    %819 = vmatprep.subr.mxu0 0.0
    %820 = vmatpush1.msra.mxu0 0.0
    %821 = vmatprep.subr.mxu0 0.0
    %822 = vmatpush1.msra.mxu0 0.0
    %823 = vmatprep.subr.mxu0 0.0
    %824 = vmatpush1.msra.mxu0 0.0
    %825 = vmatprep.subr.mxu0 0.0
    %826 = vmatpush1.msra.mxu0 0.0
    %827 = vmatprep.subr.mxu0 0.0
    %828 = vmatpush1.msra.mxu0 0.0
    %829 = vmatprep.subr.mxu0 0.0
    %830 = vmatpush1.msra.mxu0 0.0
    %831 = vmatprep.subr.mxu0 0.0
    %832 = vmatpush1.msra.mxu0 0.0
    %833 = vmatprep.subr.mxu0 0.0
    %834 = vmatpush1.msra.mxu0 0.0
    %835 = vmatprep.subr.mxu0 0.0
    %836 = vmatpush1.msra.mxu0 0.0
    %837 = vmatprep.subr.mxu0 0.0
    %838 = vmatpush1.msra.mxu0 0.0
    %839 = vmatprep.subr.mxu0 0.0
    %840 = vmatpush1.msra.mxu0 0.0
    %841 = vmatprep.subr.mxu0 0.0
    %842 = vmatpush1.msra.mxu0 0.0
    %843 = vmatprep.subr.mxu0 0.0
    %844 = vmatpush1.msra.mxu0 0.0
    %845 = vmatprep.subr.mxu0 0.0
    %846 = vmatpush1.msra.mxu0 0.0
    %847 = vmatprep.subr.mxu0 0.0
    %848 = vmatpush1.msra.mxu0 0.0
    %849 = vmatprep.subr.mxu0 0.0
    %850 = vmatpush1.msra.mxu0 0.0
    %851 = vmatprep.subr.mxu0 0.0
    %852 = vmatpush1.msra.mxu0 0.0
    %853 = vmatprep.subr.mxu0 0.0
    %854 = vmatpush1.msra.mxu0 0.0
    %855 = vmatprep.subr.mxu0 0.0
    %856 = vmatpush1.msra.mxu0 0.0
    %857 = vmatprep.subr.mxu0 0.0
    %858 = vmatpush1.msra.mxu0 0.0
    %859 = vmatprep.subr.mxu0 0.0
    %860 = vmatpush1.msra.mxu0 0.0
    %861 = vmatprep.subr.mxu0 0.0
    %862 = vmatpush1.msra.mxu0 0.0
    %863 = vmatprep.subr.mxu0 0.0
    %864 = vmatpush1.msra.mxu0 0.0
    %865 = vmatprep.subr.mxu0 0.0
    %866 = vmatpush1.msra.mxu0 0.0
    %867 = vmatprep.mubr.f32.mxu0 0.0
    %868 = vmatmul.mubr.f32.gmra.mrb[0].mxu0 %v799
    %v869 = vpop.f32.mrb[0].mxu0
    %v870 = vadd.f32 0.0, %v869
    %v871 = vpop.f32.mrb[0].mxu0
    %872 = vmatprep.mubr.f32.mxu0 0.0
    %873 = vmatmul.mubr.f32.gmra.mrb[0].mxu0 %v801
    %v874 = vpop.f32.mrb[0].mxu0
    %v875 = vadd.f32 0.0, %v874
    %v876 = vpop.f32.mrb[0].mxu0
    %877 = vdwg.mxu0
    %878 = vxpose.xlu0.b32.start [1/16] %v870, 128
    %879 = vxpose.xlu0.b32.cont [2/16] 0.0, 128
    %880 = vxpose.xlu0.b32.cont [3/16] 0.0, 128
    %881 = vxpose.xlu0.b32.cont [4/16] 0.0, 128
    %882 = vxpose.xlu0.b32.cont [5/16] 0.0, 128
    %883 = vxpose.xlu0.b32.cont [6/16] 0.0, 128
    %884 = vxpose.xlu0.b32.cont [7/16] 0.0, 128
    %885 = vxpose.xlu0.b32.cont [8/16] 0.0, 128
    %886 = vxpose.xlu0.b32.cont [9/16] 0.0, 128
    %887 = vxpose.xlu0.b32.cont [10/16] 0.0, 128
    %888 = vxpose.xlu0.b32.cont [11/16] 0.0, 128
    %889 = vxpose.xlu0.b32.cont [12/16] 0.0, 128
    %890 = vxpose.xlu0.b32.cont [13/16] 0.0, 128
    %891 = vxpose.xlu0.b32.cont [14/16] 0.0, 128
    %892 = vxpose.xlu0.b32.cont [15/16] 0.0, 128
    %893 = vxpose.xlu0.b32.end [16/16] 0.0, 128
    %v894 = vpop.trf.xlu0
    %v895 = vpop.trf.xlu0
    %v896 = vpop.trf.xlu0
    %v897 = vpop.trf.xlu0
    %v898 = vpop.trf.xlu0
    %v899 = vpop.trf.xlu0
    %v900 = vpop.trf.xlu0
    %v901 = vpop.trf.xlu0
    %v902 = vpop.trf.xlu0
    %v903 = vpop.trf.xlu0
    %v904 = vpop.trf.xlu0
    %v905 = vpop.trf.xlu0
    %v906 = vpop.trf.xlu0
    %v907 = vpop.trf.xlu0
    %v908 = vpop.trf.xlu0
    %v909 = vpop.trf.xlu0
    %911 = vset.pattern.permute.xlu0 4
    %912 = vperm.xlu0 %911, %v875
    %v913 = vpop.permute.xlu0 %912
    %v915 = vlaneseq
    %v916 = vshrl.u32 %v915, 7
    %v917 = vsub.s32 0, %v916
    %v918 = vrot.slane %v894, %v917
    %v919 = vadd.f32 %v913, %v918
    %vm920 = vcmp.gt.f32.partialorder %v919, 0.0
    %v921 = vmul.f32 %v919, 0.2
    %v922 = vsel %vm920, %v919, %v921
    %v923 = vadd.f32 %v922, %v790
    %vm924 = vcmask 60416
    %v925 = vsel %vm924, %v923, -inf
    %926 = vmax.xlane.f32.xlu0 %v925
    %v927 = vpop.xlane.xlu0 %926
    %v928 = vsub.f32 %v923, %v927
    %v929 = vmul.f32 %v928, 1.442695
    %v930 = vpow.pop %v929
    %v931 = vsel %vm924, %v930, 0.0
    %932 = vadd.xlane.f32.xlu0 %v931
    %v933 = vpop.xlane.xlu0 %932
    %v934 = vrcp.pop %v933
    %v935 = vmul.f32 %v930, %v934
    %v938 = vsel %vm371, %v935, 0
    %940 = vmatprep.subr.mxu0 0.0
    %941 = vmatpush1.msra.mxu0 %v796
    %942 = vmatprep.subr.mxu0 0.0
    %943 = vmatpush1.msra.mxu0 0.0
    %944 = vmatprep.subr.mxu0 0.0
    %945 = vmatpush1.msra.mxu0 0.0
    %946 = vmatprep.subr.mxu0 0.0
    %947 = vmatpush1.msra.mxu0 0.0
    %948 = vmatprep.subr.mxu0 0.0
    %949 = vmatpush1.msra.mxu0 0.0
    %950 = vmatprep.subr.mxu0 0.0
    %951 = vmatpush1.msra.mxu0 0.0
    %952 = vmatprep.subr.mxu0 0.0
    %953 = vmatpush1.msra.mxu0 0.0
    %954 = vmatprep.subr.mxu0 0.0
    %955 = vmatpush1.msra.mxu0 0.0
    %956 = vmatprep.subr.mxu0 0.0
    %957 = vmatpush1.msra.mxu0 0.0
    %958 = vmatprep.subr.mxu0 0.0
    %959 = vmatpush1.msra.mxu0 0.0
    %960 = vmatprep.subr.mxu0 0.0
    %961 = vmatpush1.msra.mxu0 0.0
    %962 = vmatprep.subr.mxu0 0.0
    %963 = vmatpush1.msra.mxu0 0.0
    %964 = vmatprep.subr.mxu0 0.0
    %965 = vmatpush1.msra.mxu0 0.0
    %966 = vmatprep.subr.mxu0 0.0
    %967 = vmatpush1.msra.mxu0 0.0
    %968 = vmatprep.subr.mxu0 0.0
    %969 = vmatpush1.msra.mxu0 0.0
    %970 = vmatprep.subr.mxu0 0.0
    %971 = vmatpush1.msra.mxu0 0.0
    %972 = vmatprep.subr.mxu0 0.0
    %973 = vmatpush1.msra.mxu0 0.0
    %974 = vmatprep.subr.mxu0 0.0
    %975 = vmatpush1.msra.mxu0 0.0
    %976 = vmatprep.subr.mxu0 0.0
    %977 = vmatpush1.msra.mxu0 0.0
    %978 = vmatprep.subr.mxu0 0.0
    %979 = vmatpush1.msra.mxu0 0.0
    %980 = vmatprep.subr.mxu0 0.0
    %981 = vmatpush1.msra.mxu0 0.0
    %982 = vmatprep.subr.mxu0 0.0
    %983 = vmatpush1.msra.mxu0 0.0
    %984 = vmatprep.subr.mxu0 0.0
    %985 = vmatpush1.msra.mxu0 0.0
    %986 = vmatprep.subr.mxu0 0.0
    %987 = vmatpush1.msra.mxu0 0.0
    %988 = vmatprep.subr.mxu0 0.0
    %989 = vmatpush1.msra.mxu0 0.0
    %990 = vmatprep.subr.mxu0 0.0
    %991 = vmatpush1.msra.mxu0 0.0
    %992 = vmatprep.subr.mxu0 0.0
    %993 = vmatpush1.msra.mxu0 0.0
    %994 = vmatprep.subr.mxu0 0.0
    %995 = vmatpush1.msra.mxu0 0.0
    %996 = vmatprep.subr.mxu0 0.0
    %997 = vmatpush1.msra.mxu0 0.0
    %998 = vmatprep.subr.mxu0 0.0
    %999 = vmatpush1.msra.mxu0 0.0
    %1000 = vmatprep.subr.mxu0 0.0
    %1001 = vmatpush1.msra.mxu0 0.0
    %1002 = vmatprep.subr.mxu0 0.0
    %1003 = vmatpush1.msra.mxu0 0.0
    %1004 = vmatprep.mubr.f32.mxu0 0.0
    %1005 = vmatmul.mubr.f32.gmra.mrb[0].mxu0 %v938
    %v1006 = vpop.f32.mrb[0].mxu0
    %v1007 = vadd.f32 0.0, %v1006
    %v1008 = vpop.f32.mrb[0].mxu0
    %1009 = vdwg.mxu0
    %1010 = vset.pattern.permute.xlu0 5
    %1011 = vperm.xlu0 %1010, %v875
    %v1012 = vpop.permute.xlu0 %1011
    %v1014 = vlaneseq
    %v1015 = vshrl.u32 %v1014, 7
    %v1016 = vsub.s32 1, %v1015
    %v1017 = vrot.slane %v894, %v1016
    %v1018 = vadd.f32 %v1012, %v1017
    %vm1019 = vcmp.gt.f32.partialorder %v1018, 0.0
    %v1020 = vmul.f32 %v1018, 0.2
    %v1021 = vsel %vm1019, %v1018, %v1020
    %v1022 = vadd.f32 %v1021, %v790
    %v1023 = vsel %vm924, %v1022, -inf
    %1024 = vmax.xlane.f32.xlu0 %v1023
    %v1025 = vpop.xlane.xlu0 %1024
    %v1026 = vsub.f32 %v1022, %v1025
    %v1027 = vmul.f32 %v1026, 1.442695
    %v1028 = vpow.pop %v1027
    %v1029 = vsel %vm924, %v1028, 0.0
    %1030 = vadd.xlane.f32.xlu0 %v1029
    %v1031 = vpop.xlane.xlu0 %1030
    %v1032 = vrcp.pop %v1031
    %v1033 = vmul.f32 %v1028, %v1032
    %1034 = vrot.lane.b32.xlu0 %v149, 48
    %v1035 = vpop.permute.xlu0 %1034
    %v1038 = vsel %vm371, %v1033, 0
    %1040 = vmatprep.subr.mxu0 0.0
    %1041 = vmatpush1.msra.mxu0 %v1035
    %1042 = vmatprep.subr.mxu0 0.0
    %1043 = vmatpush1.msra.mxu0 0.0
    %1044 = vmatprep.subr.mxu0 0.0
    %1045 = vmatpush1.msra.mxu0 0.0
    %1046 = vmatprep.subr.mxu0 0.0
    %1047 = vmatpush1.msra.mxu0 0.0
    %1048 = vmatprep.subr.mxu0 0.0
    %1049 = vmatpush1.msra.mxu0 0.0
    %1050 = vmatprep.subr.mxu0 0.0
    %1051 = vmatpush1.msra.mxu0 0.0
    %1052 = vmatprep.subr.mxu0 0.0
    %1053 = vmatpush1.msra.mxu0 0.0
    %1054 = vmatprep.subr.mxu0 0.0
    %1055 = vmatpush1.msra.mxu0 0.0
    %1056 = vmatprep.subr.mxu0 0.0
    %1057 = vmatpush1.msra.mxu0 0.0
    %1058 = vmatprep.subr.mxu0 0.0
    %1059 = vmatpush1.msra.mxu0 0.0
    %1060 = vmatprep.subr.mxu0 0.0
    %1061 = vmatpush1.msra.mxu0 0.0
    %1062 = vmatprep.subr.mxu0 0.0
    %1063 = vmatpush1.msra.mxu0 0.0
    %1064 = vmatprep.subr.mxu0 0.0
    %1065 = vmatpush1.msra.mxu0 0.0
    %1066 = vmatprep.subr.mxu0 0.0
    %1067 = vmatpush1.msra.mxu0 0.0
    %1068 = vmatprep.subr.mxu0 0.0
    %1069 = vmatpush1.msra.mxu0 0.0
    %1070 = vmatprep.subr.mxu0 0.0
    %1071 = vmatpush1.msra.mxu0 0.0
    %1072 = vmatprep.subr.mxu0 0.0
    %1073 = vmatpush1.msra.mxu0 0.0
    %1074 = vmatprep.subr.mxu0 0.0
    %1075 = vmatpush1.msra.mxu0 0.0
    %1076 = vmatprep.subr.mxu0 0.0
    %1077 = vmatpush1.msra.mxu0 0.0
    %1078 = vmatprep.subr.mxu0 0.0
    %1079 = vmatpush1.msra.mxu0 0.0
    %1080 = vmatprep.subr.mxu0 0.0
    %1081 = vmatpush1.msra.mxu0 0.0
    %1082 = vmatprep.subr.mxu0 0.0
    %1083 = vmatpush1.msra.mxu0 0.0
    %1084 = vmatprep.subr.mxu0 0.0
    %1085 = vmatpush1.msra.mxu0 0.0
    %1086 = vmatprep.subr.mxu0 0.0
    %1087 = vmatpush1.msra.mxu0 0.0
    %1088 = vmatprep.subr.mxu0 0.0
    %1089 = vmatpush1.msra.mxu0 0.0
    %1090 = vmatprep.subr.mxu0 0.0
    %1091 = vmatpush1.msra.mxu0 0.0
    %1092 = vmatprep.subr.mxu0 0.0
    %1093 = vmatpush1.msra.mxu0 0.0
    %1094 = vmatprep.subr.mxu0 0.0
    %1095 = vmatpush1.msra.mxu0 0.0
    %1096 = vmatprep.subr.mxu0 0.0
    %1097 = vmatpush1.msra.mxu0 0.0
    %1098 = vmatprep.subr.mxu0 0.0
    %1099 = vmatpush1.msra.mxu0 0.0
    %1100 = vmatprep.subr.mxu0 0.0
    %1101 = vmatpush1.msra.mxu0 0.0
    %1102 = vmatprep.subr.mxu0 0.0
    %1103 = vmatpush1.msra.mxu0 0.0
    %1104 = vmatprep.mubr.f32.mxu0 0.0
    %1105 = vmatmul.mubr.f32.gmra.mrb[0].mxu0 %v1038
    %v1106 = vpop.f32.mrb[0].mxu0
    %v1107 = vadd.f32 0.0, %v1106
    %v1108 = vpop.f32.mrb[0].mxu0
    %1109 = vdwg.mxu0
    %1110 = vset.pattern.permute.xlu0 6
    %1111 = vperm.xlu0 %1110, %v875
    %v1112 = vpop.permute.xlu0 %1111
    %v1114 = vlaneseq
    %v1115 = vshrl.u32 %v1114, 7
    %v1116 = vsub.s32 2, %v1115
    %v1117 = vrot.slane %v894, %v1116
    %v1118 = vadd.f32 %v1112, %v1117
    %vm1119 = vcmp.gt.f32.partialorder %v1118, 0.0
    %v1120 = vmul.f32 %v1118, 0.2
    %v1121 = vsel %vm1119, %v1118, %v1120
    %v1122 = vadd.f32 %v1121, %v790
    %v1123 = vsel %vm924, %v1122, -inf
    %1124 = vmax.xlane.f32.xlu0 %v1123
    %v1125 = vpop.xlane.xlu0 %1124
    %v1126 = vsub.f32 %v1122, %v1125
    %v1127 = vmul.f32 %v1126, 1.442695
    %v1128 = vpow.pop %v1127
    %v1129 = vsel %vm924, %v1128, 0.0
    %1130 = vadd.xlane.f32.xlu0 %v1129
    %v1131 = vpop.xlane.xlu0 %1130
    %v1132 = vrcp.pop %v1131
    %v1133 = vmul.f32 %v1128, %v1132
    %1134 = vrot.lane.b32.xlu0 %v149, 32
    %v1135 = vpop.permute.xlu0 %1134
    %v1138 = vsel %vm371, %v1133, 0
    %1140 = vmatprep.subr.mxu0 0.0
    %1141 = vmatpush1.msra.mxu0 %v1135
    %1142 = vmatprep.subr.mxu0 0.0
    %1143 = vmatpush1.msra.mxu0 0.0
    %1144 = vmatprep.subr.mxu0 0.0
    %1145 = vmatpush1.msra.mxu0 0.0
    %1146 = vmatprep.subr.mxu0 0.0
    %1147 = vmatpush1.msra.mxu0 0.0
    %1148 = vmatprep.subr.mxu0 0.0
    %1149 = vmatpush1.msra.mxu0 0.0
    %1150 = vmatprep.subr.mxu0 0.0
    %1151 = vmatpush1.msra.mxu0 0.0
    %1152 = vmatprep.subr.mxu0 0.0
    %1153 = vmatpush1.msra.mxu0 0.0
    %1154 = vmatprep.subr.mxu0 0.0
    %1155 = vmatpush1.msra.mxu0 0.0
    %1156 = vmatprep.subr.mxu0 0.0
    %1157 = vmatpush1.msra.mxu0 0.0
    %1158 = vmatprep.subr.mxu0 0.0
    %1159 = vmatpush1.msra.mxu0 0.0
    %1160 = vmatprep.subr.mxu0 0.0
    %1161 = vmatpush1.msra.mxu0 0.0
    %1162 = vmatprep.subr.mxu0 0.0
    %1163 = vmatpush1.msra.mxu0 0.0
    %1164 = vmatprep.subr.mxu0 0.0
    %1165 = vmatpush1.msra.mxu0 0.0
    %1166 = vmatprep.subr.mxu0 0.0
    %1167 = vmatpush1.msra.mxu0 0.0
    %1168 = vmatprep.subr.mxu0 0.0
    %1169 = vmatpush1.msra.mxu0 0.0
    %1170 = vmatprep.subr.mxu0 0.0
    %1171 = vmatpush1.msra.mxu0 0.0
    %1172 = vmatprep.subr.mxu0 0.0
    %1173 = vmatpush1.msra.mxu0 0.0
    %1174 = vmatprep.subr.mxu0 0.0
    %1175 = vmatpush1.msra.mxu0 0.0
    %1176 = vmatprep.subr.mxu0 0.0
    %1177 = vmatpush1.msra.mxu0 0.0
    %1178 = vmatprep.subr.mxu0 0.0
    %1179 = vmatpush1.msra.mxu0 0.0
    %1180 = vmatprep.subr.mxu0 0.0
    %1181 = vmatpush1.msra.mxu0 0.0
    %1182 = vmatprep.subr.mxu0 0.0
    %1183 = vmatpush1.msra.mxu0 0.0
    %1184 = vmatprep.subr.mxu0 0.0
    %1185 = vmatpush1.msra.mxu0 0.0
    %1186 = vmatprep.subr.mxu0 0.0
    %1187 = vmatpush1.msra.mxu0 0.0
    %1188 = vmatprep.subr.mxu0 0.0
    %1189 = vmatpush1.msra.mxu0 0.0
    %1190 = vmatprep.subr.mxu0 0.0
    %1191 = vmatpush1.msra.mxu0 0.0
    %1192 = vmatprep.subr.mxu0 0.0
    %1193 = vmatpush1.msra.mxu0 0.0
    %1194 = vmatprep.subr.mxu0 0.0
    %1195 = vmatpush1.msra.mxu0 0.0
    %1196 = vmatprep.subr.mxu0 0.0
    %1197 = vmatpush1.msra.mxu0 0.0
    %1198 = vmatprep.subr.mxu0 0.0
    %1199 = vmatpush1.msra.mxu0 0.0
    %1200 = vmatprep.subr.mxu0 0.0
    %1201 = vmatpush1.msra.mxu0 0.0
    %1202 = vmatprep.subr.mxu0 0.0
    %1203 = vmatpush1.msra.mxu0 0.0
    %1204 = vmatprep.mubr.f32.mxu0 0.0
    %1205 = vmatmul.mubr.f32.gmra.mrb[0].mxu0 %v1138
    %v1206 = vpop.f32.mrb[0].mxu0
    %v1207 = vadd.f32 0.0, %v1206
    %v1208 = vpop.f32.mrb[0].mxu0
    %1209 = vdwg.mxu0
    %1210 = vset.pattern.permute.xlu0 7
    %1211 = vperm.xlu0 %1210, %v875
    %v1212 = vpop.permute.xlu0 %1211
    %v1214 = vlaneseq
    %v1215 = vshrl.u32 %v1214, 7
    %v1216 = vsub.s32 3, %v1215
    %v1217 = vrot.slane %v894, %v1216
    %v1218 = vadd.f32 %v1212, %v1217
    %vm1219 = vcmp.gt.f32.partialorder %v1218, 0.0
    %v1220 = vmul.f32 %v1218, 0.2
    %v1221 = vsel %vm1219, %v1218, %v1220
    %v1222 = vadd.f32 %v1221, %v790
    %v1223 = vsel %vm924, %v1222, -inf
    %1224 = vmax.xlane.f32.xlu0 %v1223
    %v1225 = vpop.xlane.xlu0 %1224
    %v1226 = vsub.f32 %v1222, %v1225
    %v1227 = vmul.f32 %v1226, 1.442695
    %v1228 = vpow.pop %v1227
    %v1229 = vsel %vm924, %v1228, 0.0
    %1230 = vadd.xlane.f32.xlu0 %v1229
    %v1231 = vpop.xlane.xlu0 %1230
    %v1232 = vrcp.pop %v1231
    %v1233 = vmul.f32 %v1228, %v1232
    %1234 = vrot.lane.b32.xlu0 %v149, 16
    %v1235 = vpop.permute.xlu0 %1234
    %v1238 = vsel %vm371, %v1233, 0
    %1240 = vmatprep.subr.mxu0 0.0
    %1241 = vmatpush1.msra.mxu0 %v1235
    %1242 = vmatprep.subr.mxu0 0.0
    %1243 = vmatpush1.msra.mxu0 0.0
    %1244 = vmatprep.subr.mxu0 0.0
    %1245 = vmatpush1.msra.mxu0 0.0
    %1246 = vmatprep.subr.mxu0 0.0
    %1247 = vmatpush1.msra.mxu0 0.0
    %1248 = vmatprep.subr.mxu0 0.0
    %1249 = vmatpush1.msra.mxu0 0.0
    %1250 = vmatprep.subr.mxu0 0.0
    %1251 = vmatpush1.msra.mxu0 0.0
    %1252 = vmatprep.subr.mxu0 0.0
    %1253 = vmatpush1.msra.mxu0 0.0
    %1254 = vmatprep.subr.mxu0 0.0
    %1255 = vmatpush1.msra.mxu0 0.0
    %1256 = vmatprep.subr.mxu0 0.0
    %1257 = vmatpush1.msra.mxu0 0.0
    %1258 = vmatprep.subr.mxu0 0.0
    %1259 = vmatpush1.msra.mxu0 0.0
    %1260 = vmatprep.subr.mxu0 0.0
    %1261 = vmatpush1.msra.mxu0 0.0
    %1262 = vmatprep.subr.mxu0 0.0
    %1263 = vmatpush1.msra.mxu0 0.0
    %1264 = vmatprep.subr.mxu0 0.0
    %1265 = vmatpush1.msra.mxu0 0.0
    %1266 = vmatprep.subr.mxu0 0.0
    %1267 = vmatpush1.msra.mxu0 0.0
    %1268 = vmatprep.subr.mxu0 0.0
    %1269 = vmatpush1.msra.mxu0 0.0
    %1270 = vmatprep.subr.mxu0 0.0
    %1271 = vmatpush1.msra.mxu0 0.0
    %1272 = vmatprep.subr.mxu0 0.0
    %1273 = vmatpush1.msra.mxu0 0.0
    %1274 = vmatprep.subr.mxu0 0.0
    %1275 = vmatpush1.msra.mxu0 0.0
    %1276 = vmatprep.subr.mxu0 0.0
    %1277 = vmatpush1.msra.mxu0 0.0
    %1278 = vmatprep.subr.mxu0 0.0
    %1279 = vmatpush1.msra.mxu0 0.0
    %1280 = vmatprep.subr.mxu0 0.0
    %1281 = vmatpush1.msra.mxu0 0.0
    %1282 = vmatprep.subr.mxu0 0.0
    %1283 = vmatpush1.msra.mxu0 0.0
    %1284 = vmatprep.subr.mxu0 0.0
    %1285 = vmatpush1.msra.mxu0 0.0
    %1286 = vmatprep.subr.mxu0 0.0
    %1287 = vmatpush1.msra.mxu0 0.0
    %1288 = vmatprep.subr.mxu0 0.0
    %1289 = vmatpush1.msra.mxu0 0.0
    %1290 = vmatprep.subr.mxu0 0.0
    %1291 = vmatpush1.msra.mxu0 0.0
    %1292 = vmatprep.subr.mxu0 0.0
    %1293 = vmatpush1.msra.mxu0 0.0
    %1294 = vmatprep.subr.mxu0 0.0
    %1295 = vmatpush1.msra.mxu0 0.0
    %1296 = vmatprep.subr.mxu0 0.0
    %1297 = vmatpush1.msra.mxu0 0.0
    %1298 = vmatprep.subr.mxu0 0.0
    %1299 = vmatpush1.msra.mxu0 0.0
    %1300 = vmatprep.subr.mxu0 0.0
    %1301 = vmatpush1.msra.mxu0 0.0
    %1302 = vmatprep.subr.mxu0 0.0
    %1303 = vmatpush1.msra.mxu0 0.0
    %1304 = vmatprep.mubr.f32.mxu0 0.0
    %1305 = vmatmul.mubr.f32.gmra.mrb[0].mxu0 %v1238
    %v1306 = vpop.f32.mrb[0].mxu0
    %v1307 = vadd.f32 0.0, %v1306
    %v1308 = vpop.f32.mrb[0].mxu0
    %1309 = vdwg.mxu0
    %1311 = vrot.lane.b32.xlu0 %v1107, 16
    %v1312 = vpop.permute.xlu0 %1311
    %1315 = vrot.lane.b32.xlu0 %v1207, 32
    %v1316 = vpop.permute.xlu0 %1315
    %1319 = vrot.lane.b32.xlu0 %v1307, 48
    %v1320 = vpop.permute.xlu0 %1319
    %v1322 = vsel %vm768, %v1007, %v1312
    %v1323 = vsel %vm78, %v1322, %v1316
    %v1324 = vsel %vm166, %v1323, %v1320
    %v1326 = vlaneseq
    %v1327 = vshrl.u32 %v1326, 7
    %v1328 = vsub.s32 0, %v1327
    %v1329 = vrot.slane %v791, %v1328
    %v1331 = vadd.f32 %v1324, %v1329
    %vm1332 = vcmp.gt.f32.partialorder %v1331, 0.0
    %v1333 = vmul.f32 %v1331, 0.01
    %v1334 = vsel %vm1332, %v1331, %v1333
    %v1335 = vld [vmem:[%s6] sm:$0xff]
    %v1336 = vld [vmem:[%s6 + $0x8] sm:$0xff]
    %v1337 = vld [vmem:[%s6 + $0x10] sm:$0xff]
    %v1338 = vld [vmem:[%s6 + $0x18] sm:$0xff]
    %v1339 = vld [vmem:[%s6 + $0x20] sm:$0xff]
    %v1340 = vld [vmem:[%s6 + $0x28] sm:$0xff]
    %v1341 = vld [vmem:[%s6 + $0x30] sm:$0xff]
    %v1342 = vld [vmem:[%s6 + $0x38] sm:$0xff]
    %v1343 = vld [vmem:[%s13] sm:$0xff]
    %v1344 = vld [vmem:[%s9] sm:$0x1]
    %v1346 = vrot.slane %v151, 4
    %1347 = vrot.lane.b32.xlu0 %v1346, 64
    %v1348 = vpop.permute.xlu0 %1347
    %vm1350 = vcmask 1043456
    %v1351 = vsel %vm1350, %v237, %v1348
    %1353 = vrot.lane.b32.xlu0 %v1351, 64
    %v1354 = vpop.permute.xlu0 %1353
    %1355 = vrot.lane.b32.xlu0 %v1348, 64
    %v1356 = vpop.permute.xlu0 %1355
    %v1357 = vsel %vm251, %v1354, 0
    %v1359 = vsel %vm251, %v1356, 0
    %1361 = vmatprep.subr.mxu0 0.0
    %1362 = vmatpush1.msra.mxu0 %v1335
    %1363 = vmatprep.subr.mxu0 0.0
    %1364 = vmatpush1.msra.mxu0 %v1336
    %1365 = vmatprep.subr.mxu0 0.0
    %1366 = vmatpush1.msra.mxu0 %v1337
    %1367 = vmatprep.subr.mxu0 0.0
    %1368 = vmatpush1.msra.mxu0 %v1338
    %1369 = vmatprep.subr.mxu0 0.0
    %1370 = vmatpush1.msra.mxu0 %v1339
    %1371 = vmatprep.subr.mxu0 0.0
    %1372 = vmatpush1.msra.mxu0 %v1340
    %1373 = vmatprep.subr.mxu0 0.0
    %1374 = vmatpush1.msra.mxu0 %v1341
    %1375 = vmatprep.subr.mxu0 0.0
    %1376 = vmatpush1.msra.mxu0 %v1342
    %1377 = vmatprep.subr.mxu0 0.0
    %1378 = vmatpush1.msra.mxu0 0.0
    %1379 = vmatprep.subr.mxu0 0.0
    %1380 = vmatpush1.msra.mxu0 0.0
    %1381 = vmatprep.subr.mxu0 0.0
    %1382 = vmatpush1.msra.mxu0 0.0
    %1383 = vmatprep.subr.mxu0 0.0
    %1384 = vmatpush1.msra.mxu0 0.0
    %1385 = vmatprep.subr.mxu0 0.0
    %1386 = vmatpush1.msra.mxu0 0.0
    %1387 = vmatprep.subr.mxu0 0.0
    %1388 = vmatpush1.msra.mxu0 0.0
    %1389 = vmatprep.subr.mxu0 0.0
    %1390 = vmatpush1.msra.mxu0 0.0
    %1391 = vmatprep.subr.mxu0 0.0
    %1392 = vmatpush1.msra.mxu0 0.0
    %1393 = vmatprep.subr.mxu0 0.0
    %1394 = vmatpush1.msra.mxu0 0.0
    %1395 = vmatprep.subr.mxu0 0.0
    %1396 = vmatpush1.msra.mxu0 0.0
    %1397 = vmatprep.subr.mxu0 0.0
    %1398 = vmatpush1.msra.mxu0 0.0
    %1399 = vmatprep.subr.mxu0 0.0
    %1400 = vmatpush1.msra.mxu0 0.0
    %1401 = vmatprep.subr.mxu0 0.0
    %1402 = vmatpush1.msra.mxu0 0.0
    %1403 = vmatprep.subr.mxu0 0.0
    %1404 = vmatpush1.msra.mxu0 0.0
    %1405 = vmatprep.subr.mxu0 0.0
    %1406 = vmatpush1.msra.mxu0 0.0
    %1407 = vmatprep.subr.mxu0 0.0
    %1408 = vmatpush1.msra.mxu0 0.0
    %1409 = vmatprep.subr.mxu0 0.0
    %1410 = vmatpush1.msra.mxu0 0.0
    %1411 = vmatprep.subr.mxu0 0.0
    %1412 = vmatpush1.msra.mxu0 0.0
    %1413 = vmatprep.subr.mxu0 0.0
    %1414 = vmatpush1.msra.mxu0 0.0
    %1415 = vmatprep.subr.mxu0 0.0
    %1416 = vmatpush1.msra.mxu0 0.0
    %1417 = vmatprep.subr.mxu0 0.0
    %1418 = vmatpush1.msra.mxu0 0.0
    %1419 = vmatprep.subr.mxu0 0.0
    %1420 = vmatpush1.msra.mxu0 0.0
    %1421 = vmatprep.subr.mxu0 0.0
    %1422 = vmatpush1.msra.mxu0 0.0
    %1423 = vmatprep.subr.mxu0 0.0
    %1424 = vmatpush1.msra.mxu0 0.0
    %1425 = vmatprep.mubr.f32.mxu0 0.0
    %1426 = vmatmul.mubr.f32.gmra.mrb[0].mxu0 %v1357
    %v1427 = vpop.f32.mrb[0].mxu0
    %v1428 = vadd.f32 0.0, %v1427
    %v1429 = vpop.f32.mrb[0].mxu0
    %1430 = vmatprep.mubr.f32.mxu0 0.0
    %1431 = vmatmul.mubr.f32.gmra.mrb[0].mxu0 %v1359
    %v1432 = vpop.f32.mrb[0].mxu0
    %v1433 = vadd.f32 0.0, %v1432
    %v1434 = vpop.f32.mrb[0].mxu0
    %1435 = vdwg.mxu0
    %1436 = vxpose.xlu0.b32.start [1/16] %v1428, 128
    %1437 = vxpose.xlu0.b32.cont [2/16] 0.0, 128
    %1438 = vxpose.xlu0.b32.cont [3/16] 0.0, 128
    %1439 = vxpose.xlu0.b32.cont [4/16] 0.0, 128
    %1440 = vxpose.xlu0.b32.cont [5/16] 0.0, 128
    %1441 = vxpose.xlu0.b32.cont [6/16] 0.0, 128
    %1442 = vxpose.xlu0.b32.cont [7/16] 0.0, 128
    %1443 = vxpose.xlu0.b32.cont [8/16] 0.0, 128
    %1444 = vxpose.xlu0.b32.cont [9/16] 0.0, 128
    %1445 = vxpose.xlu0.b32.cont [10/16] 0.0, 128
    %1446 = vxpose.xlu0.b32.cont [11/16] 0.0, 128
    %1447 = vxpose.xlu0.b32.cont [12/16] 0.0, 128
    %1448 = vxpose.xlu0.b32.cont [13/16] 0.0, 128
    %1449 = vxpose.xlu0.b32.cont [14/16] 0.0, 128
    %1450 = vxpose.xlu0.b32.cont [15/16] 0.0, 128
    %1451 = vxpose.xlu0.b32.end [16/16] 0.0, 128
    %v1452 = vpop.trf.xlu0
    %v1453 = vpop.trf.xlu0
    %v1454 = vpop.trf.xlu0
    %v1455 = vpop.trf.xlu0
    %v1456 = vpop.trf.xlu0
    %v1457 = vpop.trf.xlu0
    %v1458 = vpop.trf.xlu0
    %v1459 = vpop.trf.xlu0
    %v1460 = vpop.trf.xlu0
    %v1461 = vpop.trf.xlu0
    %v1462 = vpop.trf.xlu0
    %v1463 = vpop.trf.xlu0
    %v1464 = vpop.trf.xlu0
    %v1465 = vpop.trf.xlu0
    %v1466 = vpop.trf.xlu0
    %v1467 = vpop.trf.xlu0
    %1469 = vset.pattern.permute.xlu0 4
    %1470 = vperm.xlu0 %1469, %v1428
    %v1471 = vpop.permute.xlu0 %1470
    %1474 = vset.pattern.permute.xlu0 4
    %1475 = vperm.xlu0 %1474, %v1433
    %v1476 = vpop.permute.xlu0 %1475
    %v1478 = vlaneseq
    %v1479 = vshrl.u32 %v1478, 7
    %v1480 = vsub.s32 0, %v1479
    %v1481 = vrot.slane %v1452, %v1480
    %v1482 = vadd.f32 %v1471, %v1481
    %v1483 = vadd.f32 %v1476, %v1481
    %vm1484 = vcmp.gt.f32.partialorder %v1482, 0.0
    %vm1485 = vcmp.gt.f32.partialorder %v1483, 0.0
    %v1486 = vmul.f32 %v1482, 0.2
    %v1487 = vmul.f32 %v1483, 0.2
    %v1488 = vsel %vm1484, %v1482, %v1486
    %v1489 = vsel %vm1485, %v1483, %v1487
    %v1491 = vrot.slane %v1343, 4
    %v1493 = vadd.f32 %v1488, %v1491
    %v1494 = vadd.f32 %v1489, %v1491
    %vm1495 = vcmask 31748
    %v1496 = vsel %vm1495, %v1493, -inf
    %1497 = vmax.xlane.f32.xlu0 %v1496
    %v1498 = vpop.xlane.xlu0 %1497
    %vm1499 = vcmask 27648
    %v1500 = vsel %vm1499, %v1494, -inf
    %1501 = vmax.xlane.f32.xlu0 %v1500
    %v1502 = vpop.xlane.xlu0 %1501
    %v1503 = vsub.f32 %v1493, %v1498
    %v1504 = vsub.f32 %v1494, %v1502
    %v1505 = vmul.f32 %v1503, 1.442695
    %v1506 = vpow.pop %v1505
    %v1507 = vmul.f32 %v1504, 1.442695
    %v1508 = vpow.pop %v1507
    %v1509 = vsel %vm1495, %v1506, 0.0
    %1510 = vadd.xlane.f32.xlu0 %v1509
    %v1511 = vpop.xlane.xlu0 %1510
    %v1512 = vsel %vm1499, %v1508, 0.0
    %1513 = vadd.xlane.f32.xlu0 %v1512
    %v1514 = vpop.xlane.xlu0 %1513
    %v1515 = vrcp.pop %v1511
    %v1516 = vrcp.pop %v1514
    %v1517 = vmul.f32 %v1506, %v1515
    %v1518 = vmul.f32 %v1508, %v1516
    %v1521 = vrot.slane %v1517, 4
    %v1522 = vrot.slane %v1518, 4
    %v1523 = vsel %vm1350, %v1521, %v1522
    %vm1524 = vcmask 31744
    %v1525 = vsel %vm1524, %v1523, 0
    %v1527 = vsel %vm1350, %v794, 0
    %1529 = vmatprep.subr.mxu0 0.0
    %1530 = vmatpush1.msra.mxu0 %v1527
    %1531 = vmatprep.subr.mxu0 0.0
    %1532 = vmatpush1.msra.mxu0 0.0
    %1533 = vmatprep.subr.mxu0 0.0
    %1534 = vmatpush1.msra.mxu0 0.0
    %1535 = vmatprep.subr.mxu0 0.0
    %1536 = vmatpush1.msra.mxu0 0.0
    %1537 = vmatprep.subr.mxu0 0.0
    %1538 = vmatpush1.msra.mxu0 0.0
    %1539 = vmatprep.subr.mxu0 0.0
    %1540 = vmatpush1.msra.mxu0 0.0
    %1541 = vmatprep.subr.mxu0 0.0
    %1542 = vmatpush1.msra.mxu0 0.0
    %1543 = vmatprep.subr.mxu0 0.0
    %1544 = vmatpush1.msra.mxu0 0.0
    %1545 = vmatprep.subr.mxu0 0.0
    %1546 = vmatpush1.msra.mxu0 0.0
    %1547 = vmatprep.subr.mxu0 0.0
    %1548 = vmatpush1.msra.mxu0 0.0
    %1549 = vmatprep.subr.mxu0 0.0
    %1550 = vmatpush1.msra.mxu0 0.0
    %1551 = vmatprep.subr.mxu0 0.0
    %1552 = vmatpush1.msra.mxu0 0.0
    %1553 = vmatprep.subr.mxu0 0.0
    %1554 = vmatpush1.msra.mxu0 0.0
    %1555 = vmatprep.subr.mxu0 0.0
    %1556 = vmatpush1.msra.mxu0 0.0
    %1557 = vmatprep.subr.mxu0 0.0
    %1558 = vmatpush1.msra.mxu0 0.0
    %1559 = vmatprep.subr.mxu0 0.0
    %1560 = vmatpush1.msra.mxu0 0.0
    %1561 = vmatprep.subr.mxu0 0.0
    %1562 = vmatpush1.msra.mxu0 0.0
    %1563 = vmatprep.subr.mxu0 0.0
    %1564 = vmatpush1.msra.mxu0 0.0
    %1565 = vmatprep.subr.mxu0 0.0
    %1566 = vmatpush1.msra.mxu0 0.0
    %1567 = vmatprep.subr.mxu0 0.0
    %1568 = vmatpush1.msra.mxu0 0.0
    %1569 = vmatprep.subr.mxu0 0.0
    %1570 = vmatpush1.msra.mxu0 0.0
    %1571 = vmatprep.subr.mxu0 0.0
    %1572 = vmatpush1.msra.mxu0 0.0
    %1573 = vmatprep.subr.mxu0 0.0
    %1574 = vmatpush1.msra.mxu0 0.0
    %1575 = vmatprep.subr.mxu0 0.0
    %1576 = vmatpush1.msra.mxu0 0.0
    %1577 = vmatprep.subr.mxu0 0.0
    %1578 = vmatpush1.msra.mxu0 0.0
    %1579 = vmatprep.subr.mxu0 0.0
    %1580 = vmatpush1.msra.mxu0 0.0
    %1581 = vmatprep.subr.mxu0 0.0
    %1582 = vmatpush1.msra.mxu0 0.0
    %1583 = vmatprep.subr.mxu0 0.0
    %1584 = vmatpush1.msra.mxu0 0.0
    %1585 = vmatprep.subr.mxu0 0.0
    %1586 = vmatpush1.msra.mxu0 0.0
    %1587 = vmatprep.subr.mxu0 0.0
    %1588 = vmatpush1.msra.mxu0 0.0
    %1589 = vmatprep.subr.mxu0 0.0
    %1590 = vmatpush1.msra.mxu0 0.0
    %1591 = vmatprep.subr.mxu0 0.0
    %1592 = vmatpush1.msra.mxu0 0.0
    %1593 = vmatprep.mubr.f32.mxu0 0.0
    %1594 = vmatmul.mubr.f32.gmra.mrb[0].mxu0 %v1525
    %v1595 = vpop.f32.mrb[0].mxu0
    %v1596 = vadd.f32 0.0, %v1595
    %v1597 = vpop.f32.mrb[0].mxu0
    %1598 = vdwg.mxu0
    %1599 = vset.pattern.permute.xlu0 5
    %1600 = vperm.xlu0 %1599, %v1428
    %v1601 = vpop.permute.xlu0 %1600
    %1603 = vset.pattern.permute.xlu0 5
    %1604 = vperm.xlu0 %1603, %v1433
    %v1605 = vpop.permute.xlu0 %1604
    %v1607 = vlaneseq
    %v1608 = vshrl.u32 %v1607, 7
    %v1609 = vsub.s32 1, %v1608
    %v1610 = vrot.slane %v1452, %v1609
    %v1611 = vadd.f32 %v1601, %v1610
    %v1612 = vadd.f32 %v1605, %v1610
    %vm1613 = vcmp.gt.f32.partialorder %v1611, 0.0
    %vm1614 = vcmp.gt.f32.partialorder %v1612, 0.0
    %v1615 = vmul.f32 %v1611, 0.2
    %v1616 = vmul.f32 %v1612, 0.2
    %v1617 = vsel %vm1613, %v1611, %v1615
    %v1618 = vsel %vm1614, %v1612, %v1616
    %v1619 = vadd.f32 %v1617, %v1491
    %v1620 = vadd.f32 %v1618, %v1491
    %v1621 = vsel %vm1495, %v1619, -inf
    %1622 = vmax.xlane.f32.xlu0 %v1621
    %v1623 = vpop.xlane.xlu0 %1622
    %v1624 = vsel %vm1499, %v1620, -inf
    %1625 = vmax.xlane.f32.xlu0 %v1624
    %v1626 = vpop.xlane.xlu0 %1625
    %v1627 = vsub.f32 %v1619, %v1623
    %v1628 = vsub.f32 %v1620, %v1626
    %v1629 = vmul.f32 %v1627, 1.442695
    %v1630 = vpow.pop %v1629
    %v1631 = vmul.f32 %v1628, 1.442695
    %v1632 = vpow.pop %v1631
    %v1633 = vsel %vm1495, %v1630, 0.0
    %1634 = vadd.xlane.f32.xlu0 %v1633
    %v1635 = vpop.xlane.xlu0 %1634
    %v1636 = vsel %vm1499, %v1632, 0.0
    %1637 = vadd.xlane.f32.xlu0 %v1636
    %v1638 = vpop.xlane.xlu0 %1637
    %v1639 = vrcp.pop %v1635
    %v1640 = vrcp.pop %v1638
    %v1641 = vmul.f32 %v1630, %v1639
    %v1642 = vmul.f32 %v1632, %v1640
    %v1645 = vrot.slane %v1641, 4
    %v1646 = vrot.slane %v1642, 4
    %v1647 = vsel %vm1350, %v1645, %v1646
    %1648 = vrot.lane.b32.xlu0 %v237, 48
    %v1649 = vpop.permute.xlu0 %1648
    %v1650 = vsel %vm1524, %v1647, 0
    %v1652 = vsel %vm1350, %v1649, 0
    %1654 = vmatprep.subr.mxu0 0.0
    %1655 = vmatpush1.msra.mxu0 %v1652
    %1656 = vmatprep.subr.mxu0 0.0
    %1657 = vmatpush1.msra.mxu0 0.0
    %1658 = vmatprep.subr.mxu0 0.0
    %1659 = vmatpush1.msra.mxu0 0.0
    %1660 = vmatprep.subr.mxu0 0.0
    %1661 = vmatpush1.msra.mxu0 0.0
    %1662 = vmatprep.subr.mxu0 0.0
    %1663 = vmatpush1.msra.mxu0 0.0
    %1664 = vmatprep.subr.mxu0 0.0
    %1665 = vmatpush1.msra.mxu0 0.0
    %1666 = vmatprep.subr.mxu0 0.0
    %1667 = vmatpush1.msra.mxu0 0.0
    %1668 = vmatprep.subr.mxu0 0.0
    %1669 = vmatpush1.msra.mxu0 0.0
    %1670 = vmatprep.subr.mxu0 0.0
    %1671 = vmatpush1.msra.mxu0 0.0
    %1672 = vmatprep.subr.mxu0 0.0
    %1673 = vmatpush1.msra.mxu0 0.0
    %1674 = vmatprep.subr.mxu0 0.0
    %1675 = vmatpush1.msra.mxu0 0.0
    %1676 = vmatprep.subr.mxu0 0.0
    %1677 = vmatpush1.msra.mxu0 0.0
    %1678 = vmatprep.subr.mxu0 0.0
    %1679 = vmatpush1.msra.mxu0 0.0
    %1680 = vmatprep.subr.mxu0 0.0
    %1681 = vmatpush1.msra.mxu0 0.0
    %1682 = vmatprep.subr.mxu0 0.0
    %1683 = vmatpush1.msra.mxu0 0.0
    %1684 = vmatprep.subr.mxu0 0.0
    %1685 = vmatpush1.msra.mxu0 0.0
    %1686 = vmatprep.subr.mxu0 0.0
    %1687 = vmatpush1.msra.mxu0 0.0
    %1688 = vmatprep.subr.mxu0 0.0
    %1689 = vmatpush1.msra.mxu0 0.0
    %1690 = vmatprep.subr.mxu0 0.0
    %1691 = vmatpush1.msra.mxu0 0.0
    %1692 = vmatprep.subr.mxu0 0.0
    %1693 = vmatpush1.msra.mxu0 0.0
    %1694 = vmatprep.subr.mxu0 0.0
    %1695 = vmatpush1.msra.mxu0 0.0
    %1696 = vmatprep.subr.mxu0 0.0
    %1697 = vmatpush1.msra.mxu0 0.0
    %1698 = vmatprep.subr.mxu0 0.0
    %1699 = vmatpush1.msra.mxu0 0.0
    %1700 = vmatprep.subr.mxu0 0.0
    %1701 = vmatpush1.msra.mxu0 0.0
    %1702 = vmatprep.subr.mxu0 0.0
    %1703 = vmatpush1.msra.mxu0 0.0
    %1704 = vmatprep.subr.mxu0 0.0
    %1705 = vmatpush1.msra.mxu0 0.0
    %1706 = vmatprep.subr.mxu0 0.0
    %1707 = vmatpush1.msra.mxu0 0.0
    %1708 = vmatprep.subr.mxu0 0.0
    %1709 = vmatpush1.msra.mxu0 0.0
    %1710 = vmatprep.subr.mxu0 0.0
    %1711 = vmatpush1.msra.mxu0 0.0
    %1712 = vmatprep.subr.mxu0 0.0
    %1713 = vmatpush1.msra.mxu0 0.0
    %1714 = vmatprep.subr.mxu0 0.0
    %1715 = vmatpush1.msra.mxu0 0.0
    %1716 = vmatprep.subr.mxu0 0.0
    %1717 = vmatpush1.msra.mxu0 0.0
    %1718 = vmatprep.mubr.f32.mxu0 0.0
    %1719 = vmatmul.mubr.f32.gmra.mrb[0].mxu0 %v1650
    %v1720 = vpop.f32.mrb[0].mxu0
    %v1721 = vadd.f32 0.0, %v1720
    %v1722 = vpop.f32.mrb[0].mxu0
    %1723 = vdwg.mxu0
    %1724 = vset.pattern.permute.xlu0 6
    %1725 = vperm.xlu0 %1724, %v1428
    %v1726 = vpop.permute.xlu0 %1725
    %1728 = vset.pattern.permute.xlu0 6
    %1729 = vperm.xlu0 %1728, %v1433
    %v1730 = vpop.permute.xlu0 %1729
    %v1732 = vlaneseq
    %v1733 = vshrl.u32 %v1732, 7
    %v1734 = vsub.s32 2, %v1733
    %v1735 = vrot.slane %v1452, %v1734
    %v1736 = vadd.f32 %v1726, %v1735
    %v1737 = vadd.f32 %v1730, %v1735
    %vm1738 = vcmp.gt.f32.partialorder %v1736, 0.0
    %vm1739 = vcmp.gt.f32.partialorder %v1737, 0.0
    %v1740 = vmul.f32 %v1736, 0.2
    %v1741 = vmul.f32 %v1737, 0.2
    %v1742 = vsel %vm1738, %v1736, %v1740
    %v1743 = vsel %vm1739, %v1737, %v1741
    %v1744 = vadd.f32 %v1742, %v1491
    %v1745 = vadd.f32 %v1743, %v1491
    %v1746 = vsel %vm1495, %v1744, -inf
    %1747 = vmax.xlane.f32.xlu0 %v1746
    %v1748 = vpop.xlane.xlu0 %1747
    %v1749 = vsel %vm1499, %v1745, -inf
    %1750 = vmax.xlane.f32.xlu0 %v1749
    %v1751 = vpop.xlane.xlu0 %1750
    %v1752 = vsub.f32 %v1744, %v1748
    %v1753 = vsub.f32 %v1745, %v1751
    %v1754 = vmul.f32 %v1752, 1.442695
    %v1755 = vpow.pop %v1754
    %v1756 = vmul.f32 %v1753, 1.442695
    %v1757 = vpow.pop %v1756
    %v1758 = vsel %vm1495, %v1755, 0.0
    %1759 = vadd.xlane.f32.xlu0 %v1758
    %v1760 = vpop.xlane.xlu0 %1759
    %v1761 = vsel %vm1499, %v1757, 0.0
    %1762 = vadd.xlane.f32.xlu0 %v1761
    %v1763 = vpop.xlane.xlu0 %1762
    %v1764 = vrcp.pop %v1760
    %v1765 = vrcp.pop %v1763
    %v1766 = vmul.f32 %v1755, %v1764
    %v1767 = vmul.f32 %v1757, %v1765
    %v1770 = vrot.slane %v1766, 4
    %v1771 = vrot.slane %v1767, 4
    %v1772 = vsel %vm1350, %v1770, %v1771
    %1773 = vrot.lane.b32.xlu0 %v237, 32
    %v1774 = vpop.permute.xlu0 %1773
    %v1775 = vsel %vm1524, %v1772, 0
    %v1777 = vsel %vm1350, %v1774, 0
    %1779 = vmatprep.subr.mxu0 0.0
    %1780 = vmatpush1.msra.mxu0 %v1777
    %1781 = vmatprep.subr.mxu0 0.0
    %1782 = vmatpush1.msra.mxu0 0.0
    %1783 = vmatprep.subr.mxu0 0.0
    %1784 = vmatpush1.msra.mxu0 0.0
    %1785 = vmatprep.subr.mxu0 0.0
    %1786 = vmatpush1.msra.mxu0 0.0
    %1787 = vmatprep.subr.mxu0 0.0
    %1788 = vmatpush1.msra.mxu0 0.0
    %1789 = vmatprep.subr.mxu0 0.0
    %1790 = vmatpush1.msra.mxu0 0.0
    %1791 = vmatprep.subr.mxu0 0.0
    %1792 = vmatpush1.msra.mxu0 0.0
    %1793 = vmatprep.subr.mxu0 0.0
    %1794 = vmatpush1.msra.mxu0 0.0
    %1795 = vmatprep.subr.mxu0 0.0
    %1796 = vmatpush1.msra.mxu0 0.0
    %1797 = vmatprep.subr.mxu0 0.0
    %1798 = vmatpush1.msra.mxu0 0.0
    %1799 = vmatprep.subr.mxu0 0.0
    %1800 = vmatpush1.msra.mxu0 0.0
    %1801 = vmatprep.subr.mxu0 0.0
    %1802 = vmatpush1.msra.mxu0 0.0
    %1803 = vmatprep.subr.mxu0 0.0
    %1804 = vmatpush1.msra.mxu0 0.0
    %1805 = vmatprep.subr.mxu0 0.0
    %1806 = vmatpush1.msra.mxu0 0.0
    %1807 = vmatprep.subr.mxu0 0.0
    %1808 = vmatpush1.msra.mxu0 0.0
    %1809 = vmatprep.subr.mxu0 0.0
    %1810 = vmatpush1.msra.mxu0 0.0
    %1811 = vmatprep.subr.mxu0 0.0
    %1812 = vmatpush1.msra.mxu0 0.0
    %1813 = vmatprep.subr.mxu0 0.0
    %1814 = vmatpush1.msra.mxu0 0.0
    %1815 = vmatprep.subr.mxu0 0.0
    %1816 = vmatpush1.msra.mxu0 0.0
    %1817 = vmatprep.subr.mxu0 0.0
    %1818 = vmatpush1.msra.mxu0 0.0
    %1819 = vmatprep.subr.mxu0 0.0
    %1820 = vmatpush1.msra.mxu0 0.0
    %1821 = vmatprep.subr.mxu0 0.0
    %1822 = vmatpush1.msra.mxu0 0.0
    %1823 = vmatprep.subr.mxu0 0.0
    %1824 = vmatpush1.msra.mxu0 0.0
    %1825 = vmatprep.subr.mxu0 0.0
    %1826 = vmatpush1.msra.mxu0 0.0
    %1827 = vmatprep.subr.mxu0 0.0
    %1828 = vmatpush1.msra.mxu0 0.0
    %1829 = vmatprep.subr.mxu0 0.0
    %1830 = vmatpush1.msra.mxu0 0.0
    %1831 = vmatprep.subr.mxu0 0.0
    %1832 = vmatpush1.msra.mxu0 0.0
    %1833 = vmatprep.subr.mxu0 0.0
    %1834 = vmatpush1.msra.mxu0 0.0
    %1835 = vmatprep.subr.mxu0 0.0
    %1836 = vmatpush1.msra.mxu0 0.0
    %1837 = vmatprep.subr.mxu0 0.0
    %1838 = vmatpush1.msra.mxu0 0.0
    %1839 = vmatprep.subr.mxu0 0.0
    %1840 = vmatpush1.msra.mxu0 0.0
    %1841 = vmatprep.subr.mxu0 0.0
    %1842 = vmatpush1.msra.mxu0 0.0
    %1843 = vmatprep.mubr.f32.mxu0 0.0
    %1844 = vmatmul.mubr.f32.gmra.mrb[0].mxu0 %v1775
    %v1845 = vpop.f32.mrb[0].mxu0
    %v1846 = vadd.f32 0.0, %v1845
    %v1847 = vpop.f32.mrb[0].mxu0
    %1848 = vdwg.mxu0
    %1849 = vset.pattern.permute.xlu0 7
    %1850 = vperm.xlu0 %1849, %v1428
    %v1851 = vpop.permute.xlu0 %1850
    %1853 = vset.pattern.permute.xlu0 7
    %1854 = vperm.xlu0 %1853, %v1433
    %v1855 = vpop.permute.xlu0 %1854
    %v1857 = vlaneseq
    %v1858 = vshrl.u32 %v1857, 7
    %v1859 = vsub.s32 3, %v1858
    %v1860 = vrot.slane %v1452, %v1859
    %v1861 = vadd.f32 %v1851, %v1860
    %v1862 = vadd.f32 %v1855, %v1860
    %vm1863 = vcmp.gt.f32.partialorder %v1861, 0.0
    %vm1864 = vcmp.gt.f32.partialorder %v1862, 0.0
    %v1865 = vmul.f32 %v1861, 0.2
    %v1866 = vmul.f32 %v1862, 0.2
    %v1867 = vsel %vm1863, %v1861, %v1865
    %v1868 = vsel %vm1864, %v1862, %v1866
    %v1869 = vadd.f32 %v1867, %v1491
    %v1870 = vadd.f32 %v1868, %v1491
    %v1871 = vsel %vm1495, %v1869, -inf
    %1872 = vmax.xlane.f32.xlu0 %v1871
    %v1873 = vpop.xlane.xlu0 %1872
    %v1874 = vsel %vm1499, %v1870, -inf
    %1875 = vmax.xlane.f32.xlu0 %v1874
    %v1876 = vpop.xlane.xlu0 %1875
    %v1877 = vsub.f32 %v1869, %v1873
    %v1878 = vsub.f32 %v1870, %v1876
    %v1879 = vmul.f32 %v1877, 1.442695
    %v1880 = vpow.pop %v1879
    %v1881 = vmul.f32 %v1878, 1.442695
    %v1882 = vpow.pop %v1881
    %v1883 = vsel %vm1495, %v1880, 0.0
    %1884 = vadd.xlane.f32.xlu0 %v1883
    %v1885 = vpop.xlane.xlu0 %1884
    %v1886 = vsel %vm1499, %v1882, 0.0
    %1887 = vadd.xlane.f32.xlu0 %v1886
    %v1888 = vpop.xlane.xlu0 %1887
    %v1889 = vrcp.pop %v1885
    %v1890 = vrcp.pop %v1888
    %v1891 = vmul.f32 %v1880, %v1889
    %v1892 = vmul.f32 %v1882, %v1890
    %v1895 = vrot.slane %v1891, 4
    %v1896 = vrot.slane %v1892, 4
    %v1897 = vsel %vm1350, %v1895, %v1896
    %1898 = vrot.lane.b32.xlu0 %v237, 16
    %v1899 = vpop.permute.xlu0 %1898
    %v1900 = vsel %vm1524, %v1897, 0
    %v1902 = vsel %vm1350, %v1899, 0
    %1904 = vmatprep.subr.mxu0 0.0
    %1905 = vmatpush1.msra.mxu0 %v1902
    %1906 = vmatprep.subr.mxu0 0.0
    %1907 = vmatpush1.msra.mxu0 0.0
    %1908 = vmatprep.subr.mxu0 0.0
    %1909 = vmatpush1.msra.mxu0 0.0
    %1910 = vmatprep.subr.mxu0 0.0
    %1911 = vmatpush1.msra.mxu0 0.0
    %1912 = vmatprep.subr.mxu0 0.0
    %1913 = vmatpush1.msra.mxu0 0.0
    %1914 = vmatprep.subr.mxu0 0.0
    %1915 = vmatpush1.msra.mxu0 0.0
    %1916 = vmatprep.subr.mxu0 0.0
    %1917 = vmatpush1.msra.mxu0 0.0
    %1918 = vmatprep.subr.mxu0 0.0
    %1919 = vmatpush1.msra.mxu0 0.0
    %1920 = vmatprep.subr.mxu0 0.0
    %1921 = vmatpush1.msra.mxu0 0.0
    %1922 = vmatprep.subr.mxu0 0.0
    %1923 = vmatpush1.msra.mxu0 0.0
    %1924 = vmatprep.subr.mxu0 0.0
    %1925 = vmatpush1.msra.mxu0 0.0
    %1926 = vmatprep.subr.mxu0 0.0
    %1927 = vmatpush1.msra.mxu0 0.0
    %1928 = vmatprep.subr.mxu0 0.0
    %1929 = vmatpush1.msra.mxu0 0.0
    %1930 = vmatprep.subr.mxu0 0.0
    %1931 = vmatpush1.msra.mxu0 0.0
    %1932 = vmatprep.subr.mxu0 0.0
    %1933 = vmatpush1.msra.mxu0 0.0
    %1934 = vmatprep.subr.mxu0 0.0
    %1935 = vmatpush1.msra.mxu0 0.0
    %1936 = vmatprep.subr.mxu0 0.0
    %1937 = vmatpush1.msra.mxu0 0.0
    %1938 = vmatprep.subr.mxu0 0.0
    %1939 = vmatpush1.msra.mxu0 0.0
    %1940 = vmatprep.subr.mxu0 0.0
    %1941 = vmatpush1.msra.mxu0 0.0
    %1942 = vmatprep.subr.mxu0 0.0
    %1943 = vmatpush1.msra.mxu0 0.0
    %1944 = vmatprep.subr.mxu0 0.0
    %1945 = vmatpush1.msra.mxu0 0.0
    %1946 = vmatprep.subr.mxu0 0.0
    %1947 = vmatpush1.msra.mxu0 0.0
    %1948 = vmatprep.subr.mxu0 0.0
    %1949 = vmatpush1.msra.mxu0 0.0
    %1950 = vmatprep.subr.mxu0 0.0
    %1951 = vmatpush1.msra.mxu0 0.0
    %1952 = vmatprep.subr.mxu0 0.0
    %1953 = vmatpush1.msra.mxu0 0.0
    %1954 = vmatprep.subr.mxu0 0.0
    %1955 = vmatpush1.msra.mxu0 0.0
    %1956 = vmatprep.subr.mxu0 0.0
    %1957 = vmatpush1.msra.mxu0 0.0
    %1958 = vmatprep.subr.mxu0 0.0
    %1959 = vmatpush1.msra.mxu0 0.0
    %1960 = vmatprep.subr.mxu0 0.0
    %1961 = vmatpush1.msra.mxu0 0.0
    %1962 = vmatprep.subr.mxu0 0.0
    %1963 = vmatpush1.msra.mxu0 0.0
    %1964 = vmatprep.subr.mxu0 0.0
    %1965 = vmatpush1.msra.mxu0 0.0
    %1966 = vmatprep.subr.mxu0 0.0
    %1967 = vmatpush1.msra.mxu0 0.0
    %1968 = vmatprep.mubr.f32.mxu0 0.0
    %1969 = vmatmul.mubr.f32.gmra.mrb[0].mxu0 %v1900
    %v1970 = vpop.f32.mrb[0].mxu0
    %v1971 = vadd.f32 0.0, %v1970
    %v1972 = vpop.f32.mrb[0].mxu0
    %1973 = vdwg.mxu0
    %1975 = vrot.lane.b32.xlu0 %v1721, 16
    %v1976 = vpop.permute.xlu0 %1975
    %1979 = vrot.lane.b32.xlu0 %v1846, 32
    %v1980 = vpop.permute.xlu0 %1979
    %1983 = vrot.lane.b32.xlu0 %v1971, 48
    %v1984 = vpop.permute.xlu0 %1983
    %v1986 = vsel %vm768, %v1596, %v1976
    %v1987 = vsel %vm78, %v1986, %v1980
    %v1988 = vsel %vm166, %v1987, %v1984
    %v1990 = vlaneseq
    %v1991 = vshrl.u32 %v1990, 7
    %v1992 = vsub.s32 0, %v1991
    %v1993 = vrot.slane %v1344, %v1992
    %v1995 = vadd.f32 %v1988, %v1993
    %vm1996 = vcmp.gt.f32.partialorder %v1995, 0.0
    %v1997 = vmul.f32 %v1995, 0.01
    %v1998 = vsel %vm1996, %v1995, %v1997
    %v1999 = vld [vmem:[%s10] sm:$0x1]
    %v2001 = vlaneseq
    %v2002 = vshrl.u32 %v2001, 7
    %v2003 = vsub.s32 0, %v2002
    %v2004 = vrot.slane %v1999, %v2003
    %v2006 = vadd.f32 %v239, %v2004
    %vm2007 = vcmp.gt.f32.partialorder %v2006, 0.0
    %v2008 = vmul.f32 %v2006, 0.01
    %v2009 = vsel %vm2007, %v2006, %v2008
    %v2010 = vld [vmem:[%s14] sm:$0xff]
    %v2011 = vld [vmem:[%s14 + $0x8] sm:$0xff]
    %v2012 = vld [vmem:[%s14 + $0x10] sm:$0xff]
    %v2013 = vld [vmem:[%s14 + $0x18] sm:$0xff]
    %v2014 = vld [vmem:[%s14 + $0x20] sm:$0xff]
    %v2015 = vld [vmem:[%s14 + $0x28] sm:$0xff]
    %v2016 = vld [vmem:[%s14 + $0x30] sm:$0xff]
    %v2017 = vld [vmem:[%s14 + $0x38] sm:$0xff]
    %v2018 = vld [vmem:[%s14 + $0x40] sm:$0xff]
    %v2019 = vld [vmem:[%s14 + $0x48] sm:$0xff]
    %v2020 = vld [vmem:[%s14 + $0x50] sm:$0xff]
    %v2021 = vld [vmem:[%s14 + $0x58] sm:$0xff]
    %v2022 = vld [vmem:[%s14 + $0x60] sm:$0xff]
    %v2023 = vld [vmem:[%s14 + $0x68] sm:$0xff]
    %v2024 = vld [vmem:[%s14 + $0x70] sm:$0xff]
    %v2025 = vld [vmem:[%s14 + $0x78] sm:$0xff]
    %v2026 = vld [vmem:[%s15] sm:$0x3]
    %v2027 = vld [vmem:[%s16] sm:$0xff]
    %v2028 = vld [vmem:[%s16 + $0x8] sm:$0xff]
    %v2029 = vld [vmem:[%s16 + $0x10] sm:$0xff]
    %v2030 = vld [vmem:[%s16 + $0x18] sm:$0xff]
    %v2031 = vld [vmem:[%s16 + $0x20] sm:$0xff]
    %v2032 = vld [vmem:[%s16 + $0x28] sm:$0xff]
    %v2033 = vld [vmem:[%s16 + $0x30] sm:$0xff]
    %v2034 = vld [vmem:[%s16 + $0x38] sm:$0xff]
    %v2035 = vld [vmem:[%s16 + $0x40] sm:$0xff]
    %v2036 = vld [vmem:[%s16 + $0x48] sm:$0xff]
    %v2037 = vld [vmem:[%s16 + $0x50] sm:$0xff]
    %v2038 = vld [vmem:[%s16 + $0x58] sm:$0xff]
    %v2039 = vld [vmem:[%s16 + $0x60] sm:$0xff]
    %v2040 = vld [vmem:[%s16 + $0x68] sm:$0xff]
    %v2041 = vld [vmem:[%s16 + $0x70] sm:$0xff]
    %v2042 = vld [vmem:[%s16 + $0x78] sm:$0xff]
    %v2043 = vld [vmem:[%s16 + $0x80] sm:$0xff]
    %v2044 = vld [vmem:[%s16 + $0x88] sm:$0xff]
    %v2045 = vld [vmem:[%s16 + $0x90] sm:$0xff]
    %v2046 = vld [vmem:[%s16 + $0x98] sm:$0xff]
    %v2047 = vld [vmem:[%s16 + $0xa0] sm:$0xff]
    %v2048 = vld [vmem:[%s16 + $0xa8] sm:$0xff]
    %v2049 = vld [vmem:[%s16 + $0xb0] sm:$0xff]
    %v2050 = vld [vmem:[%s16 + $0xb8] sm:$0xff]
    %v2051 = vld [vmem:[%s16 + $0xc0] sm:$0xff]
    %v2052 = vld [vmem:[%s16 + $0xc8] sm:$0xff]
    %v2053 = vld [vmem:[%s16 + $0xd0] sm:$0xff]
    %v2054 = vld [vmem:[%s16 + $0xd8] sm:$0xff]
    %v2055 = vld [vmem:[%s16 + $0xe0] sm:$0xff]
    %v2056 = vld [vmem:[%s16 + $0xe8] sm:$0xff]
    %v2057 = vld [vmem:[%s16 + $0xf0] sm:$0xff]
    %v2058 = vld [vmem:[%s16 + $0xf8] sm:$0xff]
    %v2060 = vlaneseq
    %v2061 = vshrl.u32 %v2060, 7
    %v2062 = vsub.s32 0, %v2061
    %v2063 = vrot.slane %v2026, %v2062
    %v2064 = vlaneseq
    %v2065 = vshrl.u32 %v2064, 7
    %v2066 = vsub.s32 1, %v2065
    %v2067 = vrot.slane %v2026, %v2066
    %v2071 = vsel %vm251, %v781, 0
    %v2074 = vsel %vm251, %v1998, 0
    %2076 = vmatprep.subr.mxu0 %v2011
    %2077 = vmatpush1.msra.mxu0 %v2010
    %2078 = vmatprep.subr.mxu0 %v2013
    %2079 = vmatpush1.msra.mxu0 %v2012
    %2080 = vmatprep.subr.mxu0 %v2015
    %2081 = vmatpush1.msra.mxu0 %v2014
    %2082 = vmatprep.subr.mxu0 %v2017
    %2083 = vmatpush1.msra.mxu0 %v2016
    %2084 = vmatprep.subr.mxu0 %v2019
    %2085 = vmatpush1.msra.mxu0 %v2018
    %2086 = vmatprep.subr.mxu0 %v2021
    %2087 = vmatpush1.msra.mxu0 %v2020
    %2088 = vmatprep.subr.mxu0 %v2023
    %2089 = vmatpush1.msra.mxu0 %v2022
    %2090 = vmatprep.subr.mxu0 %v2025
    %2091 = vmatpush1.msra.mxu0 %v2024
    %2092 = vmatprep.subr.mxu0 0.0
    %2093 = vmatpush1.msra.mxu0 0.0
    %2094 = vmatprep.subr.mxu0 0.0
    %2095 = vmatpush1.msra.mxu0 0.0
    %2096 = vmatprep.subr.mxu0 0.0
    %2097 = vmatpush1.msra.mxu0 0.0
    %2098 = vmatprep.subr.mxu0 0.0
    %2099 = vmatpush1.msra.mxu0 0.0
    %2100 = vmatprep.subr.mxu0 0.0
    %2101 = vmatpush1.msra.mxu0 0.0
    %2102 = vmatprep.subr.mxu0 0.0
    %2103 = vmatpush1.msra.mxu0 0.0
    %2104 = vmatprep.subr.mxu0 0.0
    %2105 = vmatpush1.msra.mxu0 0.0
    %2106 = vmatprep.subr.mxu0 0.0
    %2107 = vmatpush1.msra.mxu0 0.0
    %2108 = vmatprep.subr.mxu0 0.0
    %2109 = vmatpush1.msra.mxu0 0.0
    %2110 = vmatprep.subr.mxu0 0.0
    %2111 = vmatpush1.msra.mxu0 0.0
    %2112 = vmatprep.subr.mxu0 0.0
    %2113 = vmatpush1.msra.mxu0 0.0
    %2114 = vmatprep.subr.mxu0 0.0
    %2115 = vmatpush1.msra.mxu0 0.0
    %2116 = vmatprep.subr.mxu0 0.0
    %2117 = vmatpush1.msra.mxu0 0.0
    %2118 = vmatprep.subr.mxu0 0.0
    %2119 = vmatpush1.msra.mxu0 0.0
    %2120 = vmatprep.subr.mxu0 0.0
    %2121 = vmatpush1.msra.mxu0 0.0
    %2122 = vmatprep.subr.mxu0 0.0
    %2123 = vmatpush1.msra.mxu0 0.0
    %2124 = vmatprep.subr.mxu0 0.0
    %2125 = vmatpush1.msra.mxu0 0.0
    %2126 = vmatprep.subr.mxu0 0.0
    %2127 = vmatpush1.msra.mxu0 0.0
    %2128 = vmatprep.subr.mxu0 0.0
    %2129 = vmatpush1.msra.mxu0 0.0
    %2130 = vmatprep.subr.mxu0 0.0
    %2131 = vmatpush1.msra.mxu0 0.0
    %2132 = vmatprep.subr.mxu0 0.0
    %2133 = vmatpush1.msra.mxu0 0.0
    %2134 = vmatprep.subr.mxu0 0.0
    %2135 = vmatpush1.msra.mxu0 0.0
    %2136 = vmatprep.subr.mxu0 0.0
    %2137 = vmatpush1.msra.mxu0 0.0
    %2138 = vmatprep.subr.mxu0 0.0
    %2139 = vmatpush1.msra.mxu0 0.0
    %2140 = vmatprep.mubr.f32.mxu0 0.0
    %2141 = vmatmul.mubr.f32.gmra.mrb[0].mxu0 %v2071
    %v2142 = vpop.f32.mrb[0].mxu0
    %v2143 = vadd.f32 %v2063, %v2142
    %v2144 = vpop.f32.mrb[0].mxu0
    %v2145 = vadd.f32 %v2067, %v2144
    %2146 = vmatprep.mubr.f32.mxu0 0.0
    %2147 = vmatmul.mubr.f32.gmra.mrb[0].mxu0 %v2074
    %v2148 = vpop.f32.mrb[0].mxu0
    %v2149 = vadd.f32 %v2063, %v2148
    %v2150 = vpop.f32.mrb[0].mxu0
    %v2151 = vadd.f32 %v2067, %v2150
    %2152 = vdwg.mxu0
    %v2153 = vtanh.pop %v2143
    %v2154 = vtanh.pop %v2145
    %v2155 = vtanh.pop %v2149
    %v2156 = vtanh.pop %v2151
    %2157 = vmatprep.subr.mxu0 0.0
    %2158 = vmatpush1.msra.mxu0 %v2027
    %2159 = vmatprep.subr.mxu0 0.0
    %2160 = vmatpush1.msra.mxu0 %v2028
    %2161 = vmatprep.subr.mxu0 0.0
    %2162 = vmatpush1.msra.mxu0 %v2029
    %2163 = vmatprep.subr.mxu0 0.0
    %2164 = vmatpush1.msra.mxu0 %v2030
    %2165 = vmatprep.subr.mxu0 0.0
    %2166 = vmatpush1.msra.mxu0 %v2031
    %2167 = vmatprep.subr.mxu0 0.0
    %2168 = vmatpush1.msra.mxu0 %v2032
    %2169 = vmatprep.subr.mxu0 0.0
    %2170 = vmatpush1.msra.mxu0 %v2033
    %2171 = vmatprep.subr.mxu0 0.0
    %2172 = vmatpush1.msra.mxu0 %v2034
    %2173 = vmatprep.subr.mxu0 0.0
    %2174 = vmatpush1.msra.mxu0 %v2035
    %2175 = vmatprep.subr.mxu0 0.0
    %2176 = vmatpush1.msra.mxu0 %v2036
    %2177 = vmatprep.subr.mxu0 0.0
    %2178 = vmatpush1.msra.mxu0 %v2037
    %2179 = vmatprep.subr.mxu0 0.0
    %2180 = vmatpush1.msra.mxu0 %v2038
    %2181 = vmatprep.subr.mxu0 0.0
    %2182 = vmatpush1.msra.mxu0 %v2039
    %2183 = vmatprep.subr.mxu0 0.0
    %2184 = vmatpush1.msra.mxu0 %v2040
    %2185 = vmatprep.subr.mxu0 0.0
    %2186 = vmatpush1.msra.mxu0 %v2041
    %2187 = vmatprep.subr.mxu0 0.0
    %2188 = vmatpush1.msra.mxu0 %v2042
    %2189 = vmatprep.subr.mxu0 0.0
    %2190 = vmatpush1.msra.mxu0 %v2043
    %2191 = vmatprep.subr.mxu0 0.0
    %2192 = vmatpush1.msra.mxu0 %v2044
    %2193 = vmatprep.subr.mxu0 0.0
    %2194 = vmatpush1.msra.mxu0 %v2045
    %2195 = vmatprep.subr.mxu0 0.0
    %2196 = vmatpush1.msra.mxu0 %v2046
    %2197 = vmatprep.subr.mxu0 0.0
    %2198 = vmatpush1.msra.mxu0 %v2047
    %2199 = vmatprep.subr.mxu0 0.0
    %2200 = vmatpush1.msra.mxu0 %v2048
    %2201 = vmatprep.subr.mxu0 0.0
    %2202 = vmatpush1.msra.mxu0 %v2049
    %2203 = vmatprep.subr.mxu0 0.0
    %2204 = vmatpush1.msra.mxu0 %v2050
    %2205 = vmatprep.subr.mxu0 0.0
    %2206 = vmatpush1.msra.mxu0 %v2051
    %2207 = vmatprep.subr.mxu0 0.0
    %2208 = vmatpush1.msra.mxu0 %v2052
    %2209 = vmatprep.subr.mxu0 0.0
    %2210 = vmatpush1.msra.mxu0 %v2053
    %2211 = vmatprep.subr.mxu0 0.0
    %2212 = vmatpush1.msra.mxu0 %v2054
    %2213 = vmatprep.subr.mxu0 0.0
    %2214 = vmatpush1.msra.mxu0 %v2055
    %2215 = vmatprep.subr.mxu0 0.0
    %2216 = vmatpush1.msra.mxu0 %v2056
    %2217 = vmatprep.subr.mxu0 0.0
    %2218 = vmatpush1.msra.mxu0 %v2057
    %2219 = vmatprep.subr.mxu0 0.0
    %2220 = vmatpush1.msra.mxu0 %v2058
    %2221 = vmatprep.mubr.f32.mxu0 %v2154
    %2222 = vmatmul.mubr.f32.gmra.mrb[0].mxu0 %v2153
    %v2223 = vpop.f32.mrb[0].mxu0
    %v2224 = vadd.f32 0.0, %v2223
    %v2225 = vpop.f32.mrb[0].mxu0
    %2226 = vmatprep.mubr.f32.mxu0 %v2156
    %2227 = vmatmul.mubr.f32.gmra.mrb[0].mxu0 %v2155
    %v2228 = vpop.f32.mrb[0].mxu0
    %v2229 = vadd.f32 0.0, %v2228
    %v2230 = vpop.f32.mrb[0].mxu0
    %2231 = vdwg.mxu0
    %v2232 = vmax.f32 %v2224, %v2229
    %v2233 = vsub.f32 %v2224, %v2232
    %v2234 = vmul.f32 %v2233, 1.442695
    %v2235 = vpow.pop %v2234
    %v2236 = vsub.f32 %v2229, %v2232
    %v2237 = vmul.f32 %v2236, 1.442695
    %v2238 = vpow.pop %v2237
    %v2239 = vadd.f32 %v2235, %v2238
    %v2240 = vrcp.pop %v2239
    %2242 = vset.pattern.permute.xlu0 0
    %2243 = vperm.xlu0 %2242, %v2235
    %v2244 = vpop.permute.xlu0 %2243
    %v2246 = vmul.f32 %v2244, %v781
    %2248 = vset.pattern.permute.xlu0 0
    %2249 = vperm.xlu0 %2248, %v2238
    %v2250 = vpop.permute.xlu0 %2249
    %v2252 = vmul.f32 %v2250, %v1998
    %v2253 = vadd.f32 %v2246, %v2252
    %2255 = vset.pattern.permute.xlu0 0
    %2256 = vperm.xlu0 %2255, %v2240
    %v2257 = vpop.permute.xlu0 %2256
    %v2259 = vmul.f32 %v2253, %v2257
    %2260 = vst.msk [vmem:[#allocation2] sm:$0xff] %vm251, %v2259
    %v2261 = vld [vmem:[%s17] sm:$0xff]
    %v2262 = vld [vmem:[%s17 + $0x8] sm:$0xff]
    %v2263 = vld [vmem:[%s17 + $0x10] sm:$0xff]
    %v2264 = vld [vmem:[%s17 + $0x18] sm:$0xff]
    %v2265 = vld [vmem:[%s17 + $0x20] sm:$0xff]
    %v2266 = vld [vmem:[%s17 + $0x28] sm:$0xff]
    %v2267 = vld [vmem:[%s17 + $0x30] sm:$0xff]
    %v2268 = vld [vmem:[%s17 + $0x38] sm:$0xff]
    %v2269 = vld [vmem:[%s17 + $0x40] sm:$0xff]
    %v2270 = vld [vmem:[%s17 + $0x48] sm:$0xff]
    %v2271 = vld [vmem:[%s17 + $0x50] sm:$0xff]
    %v2272 = vld [vmem:[%s17 + $0x58] sm:$0xff]
    %v2273 = vld [vmem:[%s17 + $0x60] sm:$0xff]
    %v2274 = vld [vmem:[%s17 + $0x68] sm:$0xff]
    %v2275 = vld [vmem:[%s17 + $0x70] sm:$0xff]
    %v2276 = vld [vmem:[%s17 + $0x78] sm:$0xff]
    %v2277 = vld [vmem:[%s18] sm:$0x3]
    %v2278 = vld [vmem:[%s19] sm:$0xff]
    %v2279 = vld [vmem:[%s19 + $0x8] sm:$0xff]
    %v2280 = vld [vmem:[%s19 + $0x10] sm:$0xff]
    %v2281 = vld [vmem:[%s19 + $0x18] sm:$0xff]
    %v2282 = vld [vmem:[%s19 + $0x20] sm:$0xff]
    %v2283 = vld [vmem:[%s19 + $0x28] sm:$0xff]
    %v2284 = vld [vmem:[%s19 + $0x30] sm:$0xff]
    %v2285 = vld [vmem:[%s19 + $0x38] sm:$0xff]
    %v2286 = vld [vmem:[%s19 + $0x40] sm:$0xff]
    %v2287 = vld [vmem:[%s19 + $0x48] sm:$0xff]
    %v2288 = vld [vmem:[%s19 + $0x50] sm:$0xff]
    %v2289 = vld [vmem:[%s19 + $0x58] sm:$0xff]
    %v2290 = vld [vmem:[%s19 + $0x60] sm:$0xff]
    %v2291 = vld [vmem:[%s19 + $0x68] sm:$0xff]
    %v2292 = vld [vmem:[%s19 + $0x70] sm:$0xff]
    %v2293 = vld [vmem:[%s19 + $0x78] sm:$0xff]
    %v2294 = vld [vmem:[%s19 + $0x80] sm:$0xff]
    %v2295 = vld [vmem:[%s19 + $0x88] sm:$0xff]
    %v2296 = vld [vmem:[%s19 + $0x90] sm:$0xff]
    %v2297 = vld [vmem:[%s19 + $0x98] sm:$0xff]
    %v2298 = vld [vmem:[%s19 + $0xa0] sm:$0xff]
    %v2299 = vld [vmem:[%s19 + $0xa8] sm:$0xff]
    %v2300 = vld [vmem:[%s19 + $0xb0] sm:$0xff]
    %v2301 = vld [vmem:[%s19 + $0xb8] sm:$0xff]
    %v2302 = vld [vmem:[%s19 + $0xc0] sm:$0xff]
    %v2303 = vld [vmem:[%s19 + $0xc8] sm:$0xff]
    %v2304 = vld [vmem:[%s19 + $0xd0] sm:$0xff]
    %v2305 = vld [vmem:[%s19 + $0xd8] sm:$0xff]
    %v2306 = vld [vmem:[%s19 + $0xe0] sm:$0xff]
    %v2307 = vld [vmem:[%s19 + $0xe8] sm:$0xff]
    %v2308 = vld [vmem:[%s19 + $0xf0] sm:$0xff]
    %v2309 = vld [vmem:[%s19 + $0xf8] sm:$0xff]
    %v2311 = vrot.slane %v2009, 4
    %v2313 = vsel %vm1350, %v1334, %v2311
    %v2315 = vlaneseq
    %v2316 = vshrl.u32 %v2315, 7
    %v2317 = vsub.s32 0, %v2316
    %v2318 = vrot.slane %v2277, %v2317
    %v2319 = vlaneseq
    %v2320 = vshrl.u32 %v2319, 7
    %v2321 = vsub.s32 1, %v2320
    %v2322 = vrot.slane %v2277, %v2321
    %v2326 = vsel %vm251, %v2313, 0
    %2328 = vmatprep.subr.mxu0 %v2262
    %2329 = vmatpush1.msra.mxu0 %v2261
    %2330 = vmatprep.subr.mxu0 %v2264
    %2331 = vmatpush1.msra.mxu0 %v2263
    %2332 = vmatprep.subr.mxu0 %v2266
    %2333 = vmatpush1.msra.mxu0 %v2265
    %2334 = vmatprep.subr.mxu0 %v2268
    %2335 = vmatpush1.msra.mxu0 %v2267
    %2336 = vmatprep.subr.mxu0 %v2270
    %2337 = vmatpush1.msra.mxu0 %v2269
    %2338 = vmatprep.subr.mxu0 %v2272
    %2339 = vmatpush1.msra.mxu0 %v2271
    %2340 = vmatprep.subr.mxu0 %v2274
    %2341 = vmatpush1.msra.mxu0 %v2273
    %2342 = vmatprep.subr.mxu0 %v2276
    %2343 = vmatpush1.msra.mxu0 %v2275
    %2344 = vmatprep.subr.mxu0 0.0
    %2345 = vmatpush1.msra.mxu0 0.0
    %2346 = vmatprep.subr.mxu0 0.0
    %2347 = vmatpush1.msra.mxu0 0.0
    %2348 = vmatprep.subr.mxu0 0.0
    %2349 = vmatpush1.msra.mxu0 0.0
    %2350 = vmatprep.subr.mxu0 0.0
    %2351 = vmatpush1.msra.mxu0 0.0
    %2352 = vmatprep.subr.mxu0 0.0
    %2353 = vmatpush1.msra.mxu0 0.0
    %2354 = vmatprep.subr.mxu0 0.0
    %2355 = vmatpush1.msra.mxu0 0.0
    %2356 = vmatprep.subr.mxu0 0.0
    %2357 = vmatpush1.msra.mxu0 0.0
    %2358 = vmatprep.subr.mxu0 0.0
    %2359 = vmatpush1.msra.mxu0 0.0
    %2360 = vmatprep.subr.mxu0 0.0
    %2361 = vmatpush1.msra.mxu0 0.0
    %2362 = vmatprep.subr.mxu0 0.0
    %2363 = vmatpush1.msra.mxu0 0.0
    %2364 = vmatprep.subr.mxu0 0.0
    %2365 = vmatpush1.msra.mxu0 0.0
    %2366 = vmatprep.subr.mxu0 0.0
    %2367 = vmatpush1.msra.mxu0 0.0
    %2368 = vmatprep.subr.mxu0 0.0
    %2369 = vmatpush1.msra.mxu0 0.0
    %2370 = vmatprep.subr.mxu0 0.0
    %2371 = vmatpush1.msra.mxu0 0.0
    %2372 = vmatprep.subr.mxu0 0.0
    %2373 = vmatpush1.msra.mxu0 0.0
    %2374 = vmatprep.subr.mxu0 0.0
    %2375 = vmatpush1.msra.mxu0 0.0
    %2376 = vmatprep.subr.mxu0 0.0
    %2377 = vmatpush1.msra.mxu0 0.0
    %2378 = vmatprep.subr.mxu0 0.0
    %2379 = vmatpush1.msra.mxu0 0.0
    %2380 = vmatprep.subr.mxu0 0.0
    %2381 = vmatpush1.msra.mxu0 0.0
    %2382 = vmatprep.subr.mxu0 0.0
    %2383 = vmatpush1.msra.mxu0 0.0
    %2384 = vmatprep.subr.mxu0 0.0
    %2385 = vmatpush1.msra.mxu0 0.0
    %2386 = vmatprep.subr.mxu0 0.0
    %2387 = vmatpush1.msra.mxu0 0.0
    %2388 = vmatprep.subr.mxu0 0.0
    %2389 = vmatpush1.msra.mxu0 0.0
    %2390 = vmatprep.subr.mxu0 0.0
    %2391 = vmatpush1.msra.mxu0 0.0
    %2392 = vmatprep.mubr.f32.mxu0 0.0
    %2393 = vmatmul.mubr.f32.gmra.mrb[0].mxu0 %v2326
    %v2394 = vpop.f32.mrb[0].mxu0
    %v2395 = vadd.f32 %v2318, %v2394
    %v2396 = vpop.f32.mrb[0].mxu0
    %v2397 = vadd.f32 %v2322, %v2396
    %2398 = vdwg.mxu0
    %v2399 = vtanh.pop %v2395
    %v2400 = vtanh.pop %v2397
    %2401 = vmatprep.subr.mxu0 0.0
    %2402 = vmatpush1.msra.mxu0 %v2278
    %2403 = vmatprep.subr.mxu0 0.0
    %2404 = vmatpush1.msra.mxu0 %v2279
    %2405 = vmatprep.subr.mxu0 0.0
    %2406 = vmatpush1.msra.mxu0 %v2280
    %2407 = vmatprep.subr.mxu0 0.0
    %2408 = vmatpush1.msra.mxu0 %v2281
    %2409 = vmatprep.subr.mxu0 0.0
    %2410 = vmatpush1.msra.mxu0 %v2282
    %2411 = vmatprep.subr.mxu0 0.0
    %2412 = vmatpush1.msra.mxu0 %v2283
    %2413 = vmatprep.subr.mxu0 0.0
    %2414 = vmatpush1.msra.mxu0 %v2284
    %2415 = vmatprep.subr.mxu0 0.0
    %2416 = vmatpush1.msra.mxu0 %v2285
    %2417 = vmatprep.subr.mxu0 0.0
    %2418 = vmatpush1.msra.mxu0 %v2286
    %2419 = vmatprep.subr.mxu0 0.0
    %2420 = vmatpush1.msra.mxu0 %v2287
    %2421 = vmatprep.subr.mxu0 0.0
    %2422 = vmatpush1.msra.mxu0 %v2288
    %2423 = vmatprep.subr.mxu0 0.0
    %2424 = vmatpush1.msra.mxu0 %v2289
    %2425 = vmatprep.subr.mxu0 0.0
    %2426 = vmatpush1.msra.mxu0 %v2290
    %2427 = vmatprep.subr.mxu0 0.0
    %2428 = vmatpush1.msra.mxu0 %v2291
    %2429 = vmatprep.subr.mxu0 0.0
    %2430 = vmatpush1.msra.mxu0 %v2292
    %2431 = vmatprep.subr.mxu0 0.0
    %2432 = vmatpush1.msra.mxu0 %v2293
    %2433 = vmatprep.subr.mxu0 0.0
    %2434 = vmatpush1.msra.mxu0 %v2294
    %2435 = vmatprep.subr.mxu0 0.0
    %2436 = vmatpush1.msra.mxu0 %v2295
    %2437 = vmatprep.subr.mxu0 0.0
    %2438 = vmatpush1.msra.mxu0 %v2296
    %2439 = vmatprep.subr.mxu0 0.0
    %2440 = vmatpush1.msra.mxu0 %v2297
    %2441 = vmatprep.subr.mxu0 0.0
    %2442 = vmatpush1.msra.mxu0 %v2298
    %2443 = vmatprep.subr.mxu0 0.0
    %2444 = vmatpush1.msra.mxu0 %v2299
    %2445 = vmatprep.subr.mxu0 0.0
    %2446 = vmatpush1.msra.mxu0 %v2300
    %2447 = vmatprep.subr.mxu0 0.0
    %2448 = vmatpush1.msra.mxu0 %v2301
    %2449 = vmatprep.subr.mxu0 0.0
    %2450 = vmatpush1.msra.mxu0 %v2302
    %2451 = vmatprep.subr.mxu0 0.0
    %2452 = vmatpush1.msra.mxu0 %v2303
    %2453 = vmatprep.subr.mxu0 0.0
    %2454 = vmatpush1.msra.mxu0 %v2304
    %2455 = vmatprep.subr.mxu0 0.0
    %2456 = vmatpush1.msra.mxu0 %v2305
    %2457 = vmatprep.subr.mxu0 0.0
    %2458 = vmatpush1.msra.mxu0 %v2306
    %2459 = vmatprep.subr.mxu0 0.0
    %2460 = vmatpush1.msra.mxu0 %v2307
    %2461 = vmatprep.subr.mxu0 0.0
    %2462 = vmatpush1.msra.mxu0 %v2308
    %2463 = vmatprep.subr.mxu0 0.0
    %2464 = vmatpush1.msra.mxu0 %v2309
    %2465 = vmatprep.mubr.f32.mxu0 %v2400
    %2466 = vmatmul.mubr.f32.gmra.mrb[0].mxu0 %v2399
    %v2467 = vpop.f32.mrb[0].mxu0
    %v2468 = vadd.f32 0.0, %v2467
    %v2469 = vpop.f32.mrb[0].mxu0
    %2470 = vdwg.mxu0
    %v2472 = vrot.slane %v2468, 4
    %v2474 = vmax.f32 %v2468, %v2472
    %v2475 = vsub.f32 %v2468, %v2474
    %v2476 = vmul.f32 %v2475, 1.442695
    %v2477 = vpow.pop %v2476
    %v2479 = vrot.slane %v2474, 4
    %v2481 = vsub.f32 %v2468, %v2479
    %v2482 = vmul.f32 %v2481, 1.442695
    %v2483 = vpow.pop %v2482
    %v2485 = vrot.slane %v2483, 4
    %v2487 = vadd.f32 %v2477, %v2485
    %v2488 = vrcp.pop %v2487
    %2490 = vset.pattern.permute.xlu0 0
    %2491 = vperm.xlu0 %2490, %v2477
    %v2492 = vpop.permute.xlu0 %2491
    %v2494 = vmul.f32 %v2492, %v1334
    %2495 = vset.pattern.permute.xlu0 0
    %2496 = vperm.xlu0 %2495, %v2483
    %v2497 = vpop.permute.xlu0 %2496
    %v2499 = vmul.f32 %v2497, %v2311
    %v2501 = vrot.slane %v2499, 4
    %v2503 = vadd.f32 %v2494, %v2501
    %2505 = vset.pattern.permute.xlu0 0
    %2506 = vperm.xlu0 %2505, %v2488
    %v2507 = vpop.permute.xlu0 %2506
    %v2509 = vmul.f32 %v2503, %v2507
    %vm2510 = vcmask 519168
    %2511 = vst.msk [vmem:[#allocation4] sm:$0xf] %vm2510, %v2509
    // Predicated region
    $region82: #{cgms_han_forward.1} parent=1 // pred_check
      _
    $region83: #{cgms_han_forward.1} parent=1 // pred_check_branch
      %2513 = sbr.rel (0) target = $region85
    $region84: #{cgms_han_forward.1} parent=1 // pred_region
      %s2515 = ssub.s32 128, 128
      %2516 = vsyncadd [#allocation3], %s2515
      %s2518 = sshll.u32 [#allocation2], 4
      %s2519 = int_to_ptr.vmem [resolvable:$true] %s2518
      %2521 = dma.vmem_to_hbm [thread:$0]  %s2519, 128, %s20, [#allocation3]
    $region85: #{cgms_han_forward.1} parent=1 // pred_fallthru
      _
    // Predicated region
    $region86: #{cgms_han_forward.1} parent=1 // pred_check
      _
    $region87: #{cgms_han_forward.1} parent=1 // pred_check_branch
      %2523 = sbr.rel (0) target = $region89
    $region88: #{cgms_han_forward.1} parent=1 // pred_region
      %s2525 = ssub.s32 64, 64
      %2526 = vsyncadd [#allocation5], %s2525
      %s2528 = sshll.u32 [#allocation4], 4
      %s2529 = int_to_ptr.vmem [resolvable:$true] %s2528
      %2531 = dma.vmem_to_hbm [thread:$0]  %s2529, 64, %s21, [#allocation5]
    $region89: #{cgms_han_forward.1} parent=1 // pred_fallthru
      _
    // Predicated region
    $region90: #{cgms_han_forward.1} parent=1 // pred_check
      _
    $region91: #{cgms_han_forward.1} parent=1 // pred_check_branch
      %2533 = sbr.rel (0) target = $region93
    $region92: #{cgms_han_forward.1} parent=1 // pred_region
      %2534 = dma.done [#allocation3], 128
    $region93: #{cgms_han_forward.1} parent=1 // pred_fallthru
      _
    // Predicated region
    $region94: #{cgms_han_forward.1} parent=1 // pred_check
      _
    $region95: #{cgms_han_forward.1} parent=1 // pred_check_branch
      %2536 = sbr.rel (0) target = $region97
    $region96: #{cgms_han_forward.1} parent=1 // pred_region
      %2537 = dma.done [#allocation5], 64
    $region97: #{cgms_han_forward.1} parent=1 // pred_fallthru
      _
    %2538 = vsyncpa [#allocation3], 1
    %2539 = vsyncpa [#allocation5], 1

</llo_original>
